<compile_context>
chip_gen: v5e
topology: v5e:2x2
jax: 0.10.0
libtpu: 0.0.40
codegen_flags: <defaults>
</compile_context>

<pallas_src>
import functools

import jax
import jax.numpy as jnp
from jax import lax
from jax.experimental import pallas as pl
from jax.experimental.pallas import tpu as pltpu


_SENTINEL = -1  # never equals a foreground class id (>= 1)


def _rsum(x):
    # full reduce over the last two (sublane, lane) dims, keepdims
    return jnp.sum(jnp.sum(x, axis=-1, keepdims=True), axis=-2, keepdims=True)


def _rmax(x):
    return jnp.max(jnp.max(x, axis=-1, keepdims=True), axis=-2, keepdims=True)


def _shift_labels(lab, dy, dx, rows, cols, H, W):
    """out[y, x] = lab[y+dy, x+dx] if in bounds else _SENTINEL (border_value=0)."""
    out = lab
    if dy != 0:
        out = pltpu.roll(out, (-dy) % H, axis=0)
        if dy > 0:
            out = jnp.where(rows >= H - dy, _SENTINEL, out)
        else:
            out = jnp.where(rows < -dy, _SENTINEL, out)
    if dx != 0:
        out = pltpu.roll(out, (-dx) % W, axis=1)
        if dx > 0:
            out = jnp.where(cols >= W - dx, _SENTINEL, out)
        else:
            out = jnp.where(cols < -dx, _SENTINEL, out)
    return out


def _bpkd_kernel(lab_ref, s_ref, t_ref, out_ref, *, num_classes, temperature):
    ncm1 = num_classes - 1
    _, H, W = lab_ref.shape

    lab = lab_ref[0]                                   # (H, W) int32
    # Keep native input dtype on the HBM->VMEM path; upcast for the math.
    s = s_ref[0][1:].astype(jnp.float32)               # (ncm1, H, W)
    t = t_ref[0][1:].astype(jnp.float32)

    # Hoisted iotas (JAX does not CSE broadcast_in_dim).
    rows = lax.broadcasted_iota(jnp.int32, (H, W), 0)
    cols = lax.broadcasted_iota(jnp.int32, (H, W), 1)

    # 3x3-cross dilation/erosion neighborhood: shift the label map ONCE; the
    # per-class masks are then pure VPU compares (no per-class rolls).
    labs = (lab,
            _shift_labels(lab, -1, 0, rows, cols, H, W),
            _shift_labels(lab, 1, 0, rows, cols, H, W),
            _shift_labels(lab, 0, -1, rows, cols, H, W),
            _shift_labels(lab, 0, 1, rows, cols, H, W))

    edges_l, bodies_l = [], []
    for c in range(1, num_classes):
        eq = [l == c for l in labs]                    # 5 x (H, W) bool
        dil = eq[0] | eq[1] | eq[2] | eq[3] | eq[4]
        ero = eq[0] & eq[1] & eq[2] & eq[3] & eq[4]
        edge = dil & (~ero)                            # dilation XOR erosion
        body = (~edge) & eq[0]                         # ~edges & mask
        edges_l.append(edge.astype(jnp.float32))
        bodies_l.append(body.astype(jnp.float32))

    edges = jnp.stack(edges_l, axis=0)                 # (ncm1, H, W)
    bodies = jnp.stack(bodies_l, axis=0)

    # Fused edge+body masked-softmax KL on one stacked slab.
    xs = jnp.concatenate([s * edges, s * bodies], axis=0)   # (2*ncm1, H, W)
    xt = jnp.concatenate([t * edges, t * bodies], axis=0)
    if temperature != 1.0:                             # static python branch
        inv_t = jnp.float32(1.0 / temperature)
        xs = xs * inv_t
        xt = xt * inv_t

    a_s = xs - _rmax(xs)
    a_t = xt - _rmax(xt)
    es = jnp.exp(a_s)
    et = jnp.exp(a_t)
    zs = _rsum(es)                                     # (2*ncm1, 1, 1)
    zt = _rsum(et)
    # KL(softmax(xt) || softmax(xs)), sum reduction, without per-pixel log/div:
    #   sum_p p*(log_p - log_q) = sum(et*(a_t - a_s))/zt + log(zs) - log(zt)
    kl = _rsum(et * (a_t - a_s)) / zt + (jnp.log(zs) - jnp.log(zt))
    if temperature != 1.0:
        kl = kl * jnp.float32(temperature * temperature)

    counts = _rsum(jnp.concatenate([edges, bodies], axis=0))  # (2*ncm1, 1, 1)

    # Single packed output block:
    # [kl_edge(ncm1) | kl_body(ncm1) | n_edge(ncm1) | n_body(ncm1)]
    res = jnp.concatenate([kl, counts], axis=0)        # (4*ncm1, 1, 1)
    out_ref[0] = jnp.broadcast_to(res, (4 * ncm1, 1, 128))


def bpkd_v2_loss(preds_S, preds_T, gt_labels, *,
                 num_classes=14, temperature=1.0,
                 edge_weight=500.0, body_weight=200.0, loss_weight=1.0):
    B, C, H, W = preds_S.shape
    assert C == num_classes
    ncm1 = num_classes - 1
    labels = gt_labels[:, 0].astype(jnp.int32)         # (B, H, W)

    kernel = functools.partial(_bpkd_kernel, num_classes=num_classes,
                               temperature=temperature)

    # TODO(synk): at production resolutions (e.g. >=512x512) add a lane-aligned
    # spatial tile axis with a streaming log-sum-exp reduction; the current
    # full-frame block assumes 2*C*H*W*4 (double-buffered) fits the VMEM budget.
    res = pl.pallas_call(
        kernel,
        out_shape=jax.ShapeDtypeStruct((B, 4 * ncm1, 1, 128), jnp.float32),
        grid=(B,),
        in_specs=[
            pl.BlockSpec((1, H, W), lambda b: (b, 0, 0)),          # labels
            pl.BlockSpec((1, C, H, W), lambda b: (b, 0, 0, 0)),    # student (native dtype)
            pl.BlockSpec((1, C, H, W), lambda b: (b, 0, 0, 0)),    # teacher (native dtype)
        ],
        out_specs=pl.BlockSpec((1, 4 * ncm1, 1, 128), lambda b: (b, 0, 0, 0)),
        compiler_params=pltpu.CompilerParams(
            dimension_semantics=("parallel",),
            vmem_limit_bytes=48 * 1024 * 1024),
    )(labels, preds_S, preds_T)

    res = res[:, :, 0, 0]                              # (B, 4*ncm1)
    kl_e = res[:, 0:ncm1]
    kl_b = res[:, ncm1:2 * ncm1]
    ne = res[:, 2 * ncm1:3 * ncm1]
    nb = res[:, 3 * ncm1:4 * ncm1]

    # Per-class "continue if mask_edges.sum() == 0" gating (matches reference).
    valid = ne > 0.0
    num_edge = jnp.sum(jnp.where(valid, ne, 0.0), axis=1)        # (B,)
    num_body = jnp.sum(jnp.where(valid, nb, 0.0), axis=1)
    loss_edges_i = jnp.sum(jnp.where(valid, kl_e, 0.0), axis=1)
    loss_bodies_i = jnp.sum(jnp.where(valid, kl_b, 0.0), axis=1)

    # Per-batch gating exactly as in the PyTorch reference:
    #   if loss_edges_i > 0:  loss_edges += loss_edges_i / number_edge_pixels
    #   if number_body_pixels > 0: loss_bodies += loss_bodies_i / number_body_pixels
    loss_edges = jnp.sum(jnp.where(loss_edges_i > 0.0,
                                   loss_edges_i / jnp.maximum(num_edge, 1.0),
                                   0.0))
    loss_bodies = jnp.sum(jnp.where(num_body > 0.0,
                                    loss_bodies_i / jnp.maximum(num_body, 1.0),
                                    0.0))

    loss_edges = loss_weight * edge_weight * loss_edges / B
    loss_bodies = loss_weight * body_weight * loss_bodies / B
    return dict(loss_edges=loss_edges, loss_bodies=loss_bodies)


if __name__ == "__main__":
    key = jax.random.PRNGKey(0)
    k1, k2, k3 = jax.random.split(key, 3)

    B, NUM_CLASSES, H, W = 2, 14, 16, 128
    preds_S = jax.random.normal(k1, (B, NUM_CLASSES, H, W), dtype=jnp.float32)
    preds_T = jax.random.normal(k2, (B, NUM_CLASSES, H, W), dtype=jnp.float32)
    gt_labels = jax.random.randint(k3, (B, 1, H, W), 0, NUM_CLASSES, dtype=jnp.int32)

    out = bpkd_v2_loss(preds_S, preds_T, gt_labels,
                       num_classes=NUM_CLASSES, temperature=1.0,
                       edge_weight=500.0, body_weight=200.0, loss_weight=1.0)
    out = jax.block_until_ready(out)
    assert jnp.isfinite(out["loss_edges"]) and jnp.isfinite(out["loss_bodies"])
    print("KERNEL_OK")
</pallas_src>

<mosaic_0001>
module attributes {stable_mosaic.version = 11 : i64} {
  func.func @_bpkd_kernel(%arg0: i32, %arg1: memref<1x16x128xi32, #tpu.memory_space<vmem>>, %arg2: memref<1x14x16x128xf32, #tpu.memory_space<vmem>>, %arg3: memref<1x14x16x128xf32, #tpu.memory_space<vmem>>, %arg4: memref<1x52x1x128xf32, #tpu.memory_space<vmem>>) attributes {dimension_semantics = [#tpu.dimension_semantics<parallel>], iteration_bounds = array<i64: 2>, scalar_prefetch = 0 : i64, scratch_operands = 0 : i64, tpu.core_type = #tpu.core_type<tc>, window_params = [{transform_indices = @transform_0, window_bounds = array<i64: 1, 16, 128>}, {transform_indices = @transform_1, window_bounds = array<i64: 1, 14, 16, 128>}, {transform_indices = @transform_2, window_bounds = array<i64: 1, 14, 16, 128>}, {transform_indices = @transform_3, window_bounds = array<i64: 1, 52, 1, 128>}]} {
    %c0 = arith.constant 0 : index
    %c0_0 = arith.constant 0 : index
    %c0_1 = arith.constant 0 : index
    %0 = vector.load %arg1[%c0, %c0_0, %c0_1] : memref<1x16x128xi32, #tpu.memory_space<vmem>>, vector<1x16x128xi32>
    %1 = vector.shape_cast %0 : vector<1x16x128xi32> to vector<16x128xi32>
    %c0_2 = arith.constant 0 : index
    %c0_3 = arith.constant 0 : index
    %c0_4 = arith.constant 0 : index
    %c0_5 = arith.constant 0 : index
    %2 = vector.load %arg2[%c0_2, %c0_3, %c0_4, %c0_5] : memref<1x14x16x128xf32, #tpu.memory_space<vmem>>, vector<1x14x16x128xf32>
    %3 = vector.shape_cast %2 : vector<1x14x16x128xf32> to vector<14x16x128xf32>
    %4 = vector.extract_strided_slice %3 {offsets = [1, 0, 0], sizes = [13, 16, 128], strides = [1, 1, 1]} : vector<14x16x128xf32> to vector<13x16x128xf32>
    %c0_6 = arith.constant 0 : index
    %c0_7 = arith.constant 0 : index
    %c0_8 = arith.constant 0 : index
    %c0_9 = arith.constant 0 : index
    %5 = vector.load %arg3[%c0_6, %c0_7, %c0_8, %c0_9] : memref<1x14x16x128xf32, #tpu.memory_space<vmem>>, vector<1x14x16x128xf32>
    %6 = vector.shape_cast %5 : vector<1x14x16x128xf32> to vector<14x16x128xf32>
    %7 = vector.extract_strided_slice %6 {offsets = [1, 0, 0], sizes = [13, 16, 128], strides = [1, 1, 1]} : vector<14x16x128xf32> to vector<13x16x128xf32>
    %8 = tpu.iota {dimensions = array<i32: 0>} : vector<16x128xi32>
    %9 = tpu.iota {dimensions = array<i32: 1>} : vector<16x128xi32>
    %c1_i32 = arith.constant 1 : i32
    %10 = tpu.dynamic_rotate %1 by %c1_i32 dim 0 : vector<16x128xi32>, i32 -> vector<16x128xi32>
    %c1_i32_10 = arith.constant 1 : i32
    %11 = vector.broadcast %c1_i32_10 : i32 to vector<16x128xi32>
    %12 = arith.cmpi slt, %8, %11 : vector<16x128xi32>
    %c-1_i32 = arith.constant -1 : i32
    %13 = vector.broadcast %c-1_i32 : i32 to vector<16x128xi32>
    %14 = arith.select %12, %13, %10 : vector<16x128xi1>, vector<16x128xi32>
    %c15_i32 = arith.constant 15 : i32
    %15 = tpu.dynamic_rotate %1 by %c15_i32 dim 0 : vector<16x128xi32>, i32 -> vector<16x128xi32>
    %c15_i32_11 = arith.constant 15 : i32
    %16 = vector.broadcast %c15_i32_11 : i32 to vector<16x128xi32>
    %17 = arith.cmpi sge, %8, %16 : vector<16x128xi32>
    %c-1_i32_12 = arith.constant -1 : i32
    %18 = vector.broadcast %c-1_i32_12 : i32 to vector<16x128xi32>
    %19 = arith.select %17, %18, %15 : vector<16x128xi1>, vector<16x128xi32>
    %c1_i32_13 = arith.constant 1 : i32
    %20 = tpu.dynamic_rotate %1 by %c1_i32_13 dim 1 : vector<16x128xi32>, i32 -> vector<16x128xi32>
    %c1_i32_14 = arith.constant 1 : i32
    %21 = vector.broadcast %c1_i32_14 : i32 to vector<16x128xi32>
    %22 = arith.cmpi slt, %9, %21 : vector<16x128xi32>
    %c-1_i32_15 = arith.constant -1 : i32
    %23 = vector.broadcast %c-1_i32_15 : i32 to vector<16x128xi32>
    %24 = arith.select %22, %23, %20 : vector<16x128xi1>, vector<16x128xi32>
    %c127_i32 = arith.constant 127 : i32
    %25 = tpu.dynamic_rotate %1 by %c127_i32 dim 1 : vector<16x128xi32>, i32 -> vector<16x128xi32>
    %c127_i32_16 = arith.constant 127 : i32
    %26 = vector.broadcast %c127_i32_16 : i32 to vector<16x128xi32>
    %27 = arith.cmpi sge, %9, %26 : vector<16x128xi32>
    %c-1_i32_17 = arith.constant -1 : i32
    %28 = vector.broadcast %c-1_i32_17 : i32 to vector<16x128xi32>
    %29 = arith.select %27, %28, %25 : vector<16x128xi1>, vector<16x128xi32>
    %c1_i32_18 = arith.constant 1 : i32
    %30 = vector.broadcast %c1_i32_18 : i32 to vector<16x128xi32>
    %31 = arith.cmpi eq, %1, %30 : vector<16x128xi32>
    %c1_i32_19 = arith.constant 1 : i32
    %32 = vector.broadcast %c1_i32_19 : i32 to vector<16x128xi32>
    %33 = arith.cmpi eq, %14, %32 : vector<16x128xi32>
    %c1_i32_20 = arith.constant 1 : i32
    %34 = vector.broadcast %c1_i32_20 : i32 to vector<16x128xi32>
    %35 = arith.cmpi eq, %19, %34 : vector<16x128xi32>
    %c1_i32_21 = arith.constant 1 : i32
    %36 = vector.broadcast %c1_i32_21 : i32 to vector<16x128xi32>
    %37 = arith.cmpi eq, %24, %36 : vector<16x128xi32>
    %c1_i32_22 = arith.constant 1 : i32
    %38 = vector.broadcast %c1_i32_22 : i32 to vector<16x128xi32>
    %39 = arith.cmpi eq, %29, %38 : vector<16x128xi32>
    %40 = arith.ori %31, %33 : vector<16x128xi1>
    %41 = arith.ori %40, %35 : vector<16x128xi1>
    %42 = arith.ori %41, %37 : vector<16x128xi1>
    %43 = arith.ori %42, %39 : vector<16x128xi1>
    %44 = arith.andi %31, %33 : vector<16x128xi1>
    %45 = arith.andi %44, %35 : vector<16x128xi1>
    %46 = arith.andi %45, %37 : vector<16x128xi1>
    %47 = arith.andi %46, %39 : vector<16x128xi1>
    %cst = arith.constant dense<true> : vector<16x128xi1>
    %48 = arith.xori %47, %cst : vector<16x128xi1>
    %49 = arith.andi %43, %48 : vector<16x128xi1>
    %cst_23 = arith.constant dense<true> : vector<16x128xi1>
    %50 = arith.xori %49, %cst_23 : vector<16x128xi1>
    %51 = arith.andi %50, %31 : vector<16x128xi1>
    %52 = arith.extui %49 : vector<16x128xi1> to vector<16x128xi32>
    %53 = arith.sitofp %52 : vector<16x128xi32> to vector<16x128xf32>
    %54 = arith.extui %51 : vector<16x128xi1> to vector<16x128xi32>
    %55 = arith.sitofp %54 : vector<16x128xi32> to vector<16x128xf32>
    %c2_i32 = arith.constant 2 : i32
    %56 = vector.broadcast %c2_i32 : i32 to vector<16x128xi32>
    %57 = arith.cmpi eq, %1, %56 : vector<16x128xi32>
    %c2_i32_24 = arith.constant 2 : i32
    %58 = vector.broadcast %c2_i32_24 : i32 to vector<16x128xi32>
    %59 = arith.cmpi eq, %14, %58 : vector<16x128xi32>
    %c2_i32_25 = arith.constant 2 : i32
    %60 = vector.broadcast %c2_i32_25 : i32 to vector<16x128xi32>
    %61 = arith.cmpi eq, %19, %60 : vector<16x128xi32>
    %c2_i32_26 = arith.constant 2 : i32
    %62 = vector.broadcast %c2_i32_26 : i32 to vector<16x128xi32>
    %63 = arith.cmpi eq, %24, %62 : vector<16x128xi32>
    %c2_i32_27 = arith.constant 2 : i32
    %64 = vector.broadcast %c2_i32_27 : i32 to vector<16x128xi32>
    %65 = arith.cmpi eq, %29, %64 : vector<16x128xi32>
    %66 = arith.ori %57, %59 : vector<16x128xi1>
    %67 = arith.ori %66, %61 : vector<16x128xi1>
    %68 = arith.ori %67, %63 : vector<16x128xi1>
    %69 = arith.ori %68, %65 : vector<16x128xi1>
    %70 = arith.andi %57, %59 : vector<16x128xi1>
    %71 = arith.andi %70, %61 : vector<16x128xi1>
    %72 = arith.andi %71, %63 : vector<16x128xi1>
    %73 = arith.andi %72, %65 : vector<16x128xi1>
    %cst_28 = arith.constant dense<true> : vector<16x128xi1>
    %74 = arith.xori %73, %cst_28 : vector<16x128xi1>
    %75 = arith.andi %69, %74 : vector<16x128xi1>
    %cst_29 = arith.constant dense<true> : vector<16x128xi1>
    %76 = arith.xori %75, %cst_29 : vector<16x128xi1>
    %77 = arith.andi %76, %57 : vector<16x128xi1>
    %78 = arith.extui %75 : vector<16x128xi1> to vector<16x128xi32>
    %79 = arith.sitofp %78 : vector<16x128xi32> to vector<16x128xf32>
    %80 = arith.extui %77 : vector<16x128xi1> to vector<16x128xi32>
    %81 = arith.sitofp %80 : vector<16x128xi32> to vector<16x128xf32>
    %c3_i32 = arith.constant 3 : i32
    %82 = vector.broadcast %c3_i32 : i32 to vector<16x128xi32>
    %83 = arith.cmpi eq, %1, %82 : vector<16x128xi32>
    %c3_i32_30 = arith.constant 3 : i32
    %84 = vector.broadcast %c3_i32_30 : i32 to vector<16x128xi32>
    %85 = arith.cmpi eq, %14, %84 : vector<16x128xi32>
    %c3_i32_31 = arith.constant 3 : i32
    %86 = vector.broadcast %c3_i32_31 : i32 to vector<16x128xi32>
    %87 = arith.cmpi eq, %19, %86 : vector<16x128xi32>
    %c3_i32_32 = arith.constant 3 : i32
    %88 = vector.broadcast %c3_i32_32 : i32 to vector<16x128xi32>
    %89 = arith.cmpi eq, %24, %88 : vector<16x128xi32>
    %c3_i32_33 = arith.constant 3 : i32
    %90 = vector.broadcast %c3_i32_33 : i32 to vector<16x128xi32>
    %91 = arith.cmpi eq, %29, %90 : vector<16x128xi32>
    %92 = arith.ori %83, %85 : vector<16x128xi1>
    %93 = arith.ori %92, %87 : vector<16x128xi1>
    %94 = arith.ori %93, %89 : vector<16x128xi1>
    %95 = arith.ori %94, %91 : vector<16x128xi1>
    %96 = arith.andi %83, %85 : vector<16x128xi1>
    %97 = arith.andi %96, %87 : vector<16x128xi1>
    %98 = arith.andi %97, %89 : vector<16x128xi1>
    %99 = arith.andi %98, %91 : vector<16x128xi1>
    %cst_34 = arith.constant dense<true> : vector<16x128xi1>
    %100 = arith.xori %99, %cst_34 : vector<16x128xi1>
    %101 = arith.andi %95, %100 : vector<16x128xi1>
    %cst_35 = arith.constant dense<true> : vector<16x128xi1>
    %102 = arith.xori %101, %cst_35 : vector<16x128xi1>
    %103 = arith.andi %102, %83 : vector<16x128xi1>
    %104 = arith.extui %101 : vector<16x128xi1> to vector<16x128xi32>
    %105 = arith.sitofp %104 : vector<16x128xi32> to vector<16x128xf32>
    %106 = arith.extui %103 : vector<16x128xi1> to vector<16x128xi32>
    %107 = arith.sitofp %106 : vector<16x128xi32> to vector<16x128xf32>
    %c4_i32 = arith.constant 4 : i32
    %108 = vector.broadcast %c4_i32 : i32 to vector<16x128xi32>
    %109 = arith.cmpi eq, %1, %108 : vector<16x128xi32>
    %c4_i32_36 = arith.constant 4 : i32
    %110 = vector.broadcast %c4_i32_36 : i32 to vector<16x128xi32>
    %111 = arith.cmpi eq, %14, %110 : vector<16x128xi32>
    %c4_i32_37 = arith.constant 4 : i32
    %112 = vector.broadcast %c4_i32_37 : i32 to vector<16x128xi32>
    %113 = arith.cmpi eq, %19, %112 : vector<16x128xi32>
    %c4_i32_38 = arith.constant 4 : i32
    %114 = vector.broadcast %c4_i32_38 : i32 to vector<16x128xi32>
    %115 = arith.cmpi eq, %24, %114 : vector<16x128xi32>
    %c4_i32_39 = arith.constant 4 : i32
    %116 = vector.broadcast %c4_i32_39 : i32 to vector<16x128xi32>
    %117 = arith.cmpi eq, %29, %116 : vector<16x128xi32>
    %118 = arith.ori %109, %111 : vector<16x128xi1>
    %119 = arith.ori %118, %113 : vector<16x128xi1>
    %120 = arith.ori %119, %115 : vector<16x128xi1>
    %121 = arith.ori %120, %117 : vector<16x128xi1>
    %122 = arith.andi %109, %111 : vector<16x128xi1>
    %123 = arith.andi %122, %113 : vector<16x128xi1>
    %124 = arith.andi %123, %115 : vector<16x128xi1>
    %125 = arith.andi %124, %117 : vector<16x128xi1>
    %cst_40 = arith.constant dense<true> : vector<16x128xi1>
    %126 = arith.xori %125, %cst_40 : vector<16x128xi1>
    %127 = arith.andi %121, %126 : vector<16x128xi1>
    %cst_41 = arith.constant dense<true> : vector<16x128xi1>
    %128 = arith.xori %127, %cst_41 : vector<16x128xi1>
    %129 = arith.andi %128, %109 : vector<16x128xi1>
    %130 = arith.extui %127 : vector<16x128xi1> to vector<16x128xi32>
    %131 = arith.sitofp %130 : vector<16x128xi32> to vector<16x128xf32>
    %132 = arith.extui %129 : vector<16x128xi1> to vector<16x128xi32>
    %133 = arith.sitofp %132 : vector<16x128xi32> to vector<16x128xf32>
    %c5_i32 = arith.constant 5 : i32
    %134 = vector.broadcast %c5_i32 : i32 to vector<16x128xi32>
    %135 = arith.cmpi eq, %1, %134 : vector<16x128xi32>
    %c5_i32_42 = arith.constant 5 : i32
    %136 = vector.broadcast %c5_i32_42 : i32 to vector<16x128xi32>
    %137 = arith.cmpi eq, %14, %136 : vector<16x128xi32>
    %c5_i32_43 = arith.constant 5 : i32
    %138 = vector.broadcast %c5_i32_43 : i32 to vector<16x128xi32>
    %139 = arith.cmpi eq, %19, %138 : vector<16x128xi32>
    %c5_i32_44 = arith.constant 5 : i32
    %140 = vector.broadcast %c5_i32_44 : i32 to vector<16x128xi32>
    %141 = arith.cmpi eq, %24, %140 : vector<16x128xi32>
    %c5_i32_45 = arith.constant 5 : i32
    %142 = vector.broadcast %c5_i32_45 : i32 to vector<16x128xi32>
    %143 = arith.cmpi eq, %29, %142 : vector<16x128xi32>
    %144 = arith.ori %135, %137 : vector<16x128xi1>
    %145 = arith.ori %144, %139 : vector<16x128xi1>
    %146 = arith.ori %145, %141 : vector<16x128xi1>
    %147 = arith.ori %146, %143 : vector<16x128xi1>
    %148 = arith.andi %135, %137 : vector<16x128xi1>
    %149 = arith.andi %148, %139 : vector<16x128xi1>
    %150 = arith.andi %149, %141 : vector<16x128xi1>
    %151 = arith.andi %150, %143 : vector<16x128xi1>
    %cst_46 = arith.constant dense<true> : vector<16x128xi1>
    %152 = arith.xori %151, %cst_46 : vector<16x128xi1>
    %153 = arith.andi %147, %152 : vector<16x128xi1>
    %cst_47 = arith.constant dense<true> : vector<16x128xi1>
    %154 = arith.xori %153, %cst_47 : vector<16x128xi1>
    %155 = arith.andi %154, %135 : vector<16x128xi1>
    %156 = arith.extui %153 : vector<16x128xi1> to vector<16x128xi32>
    %157 = arith.sitofp %156 : vector<16x128xi32> to vector<16x128xf32>
    %158 = arith.extui %155 : vector<16x128xi1> to vector<16x128xi32>
    %159 = arith.sitofp %158 : vector<16x128xi32> to vector<16x128xf32>
    %c6_i32 = arith.constant 6 : i32
    %160 = vector.broadcast %c6_i32 : i32 to vector<16x128xi32>
    %161 = arith.cmpi eq, %1, %160 : vector<16x128xi32>
    %c6_i32_48 = arith.constant 6 : i32
    %162 = vector.broadcast %c6_i32_48 : i32 to vector<16x128xi32>
    %163 = arith.cmpi eq, %14, %162 : vector<16x128xi32>
    %c6_i32_49 = arith.constant 6 : i32
    %164 = vector.broadcast %c6_i32_49 : i32 to vector<16x128xi32>
    %165 = arith.cmpi eq, %19, %164 : vector<16x128xi32>
    %c6_i32_50 = arith.constant 6 : i32
    %166 = vector.broadcast %c6_i32_50 : i32 to vector<16x128xi32>
    %167 = arith.cmpi eq, %24, %166 : vector<16x128xi32>
    %c6_i32_51 = arith.constant 6 : i32
    %168 = vector.broadcast %c6_i32_51 : i32 to vector<16x128xi32>
    %169 = arith.cmpi eq, %29, %168 : vector<16x128xi32>
    %170 = arith.ori %161, %163 : vector<16x128xi1>
    %171 = arith.ori %170, %165 : vector<16x128xi1>
    %172 = arith.ori %171, %167 : vector<16x128xi1>
    %173 = arith.ori %172, %169 : vector<16x128xi1>
    %174 = arith.andi %161, %163 : vector<16x128xi1>
    %175 = arith.andi %174, %165 : vector<16x128xi1>
    %176 = arith.andi %175, %167 : vector<16x128xi1>
    %177 = arith.andi %176, %169 : vector<16x128xi1>
    %cst_52 = arith.constant dense<true> : vector<16x128xi1>
    %178 = arith.xori %177, %cst_52 : vector<16x128xi1>
    %179 = arith.andi %173, %178 : vector<16x128xi1>
    %cst_53 = arith.constant dense<true> : vector<16x128xi1>
    %180 = arith.xori %179, %cst_53 : vector<16x128xi1>
    %181 = arith.andi %180, %161 : vector<16x128xi1>
    %182 = arith.extui %179 : vector<16x128xi1> to vector<16x128xi32>
    %183 = arith.sitofp %182 : vector<16x128xi32> to vector<16x128xf32>
    %184 = arith.extui %181 : vector<16x128xi1> to vector<16x128xi32>
    %185 = arith.sitofp %184 : vector<16x128xi32> to vector<16x128xf32>
    %c7_i32 = arith.constant 7 : i32
    %186 = vector.broadcast %c7_i32 : i32 to vector<16x128xi32>
    %187 = arith.cmpi eq, %1, %186 : vector<16x128xi32>
    %c7_i32_54 = arith.constant 7 : i32
    %188 = vector.broadcast %c7_i32_54 : i32 to vector<16x128xi32>
    %189 = arith.cmpi eq, %14, %188 : vector<16x128xi32>
    %c7_i32_55 = arith.constant 7 : i32
    %190 = vector.broadcast %c7_i32_55 : i32 to vector<16x128xi32>
    %191 = arith.cmpi eq, %19, %190 : vector<16x128xi32>
    %c7_i32_56 = arith.constant 7 : i32
    %192 = vector.broadcast %c7_i32_56 : i32 to vector<16x128xi32>
    %193 = arith.cmpi eq, %24, %192 : vector<16x128xi32>
    %c7_i32_57 = arith.constant 7 : i32
    %194 = vector.broadcast %c7_i32_57 : i32 to vector<16x128xi32>
    %195 = arith.cmpi eq, %29, %194 : vector<16x128xi32>
    %196 = arith.ori %187, %189 : vector<16x128xi1>
    %197 = arith.ori %196, %191 : vector<16x128xi1>
    %198 = arith.ori %197, %193 : vector<16x128xi1>
    %199 = arith.ori %198, %195 : vector<16x128xi1>
    %200 = arith.andi %187, %189 : vector<16x128xi1>
    %201 = arith.andi %200, %191 : vector<16x128xi1>
    %202 = arith.andi %201, %193 : vector<16x128xi1>
    %203 = arith.andi %202, %195 : vector<16x128xi1>
    %cst_58 = arith.constant dense<true> : vector<16x128xi1>
    %204 = arith.xori %203, %cst_58 : vector<16x128xi1>
    %205 = arith.andi %199, %204 : vector<16x128xi1>
    %cst_59 = arith.constant dense<true> : vector<16x128xi1>
    %206 = arith.xori %205, %cst_59 : vector<16x128xi1>
    %207 = arith.andi %206, %187 : vector<16x128xi1>
    %208 = arith.extui %205 : vector<16x128xi1> to vector<16x128xi32>
    %209 = arith.sitofp %208 : vector<16x128xi32> to vector<16x128xf32>
    %210 = arith.extui %207 : vector<16x128xi1> to vector<16x128xi32>
    %211 = arith.sitofp %210 : vector<16x128xi32> to vector<16x128xf32>
    %c8_i32 = arith.constant 8 : i32
    %212 = vector.broadcast %c8_i32 : i32 to vector<16x128xi32>
    %213 = arith.cmpi eq, %1, %212 : vector<16x128xi32>
    %c8_i32_60 = arith.constant 8 : i32
    %214 = vector.broadcast %c8_i32_60 : i32 to vector<16x128xi32>
    %215 = arith.cmpi eq, %14, %214 : vector<16x128xi32>
    %c8_i32_61 = arith.constant 8 : i32
    %216 = vector.broadcast %c8_i32_61 : i32 to vector<16x128xi32>
    %217 = arith.cmpi eq, %19, %216 : vector<16x128xi32>
    %c8_i32_62 = arith.constant 8 : i32
    %218 = vector.broadcast %c8_i32_62 : i32 to vector<16x128xi32>
    %219 = arith.cmpi eq, %24, %218 : vector<16x128xi32>
    %c8_i32_63 = arith.constant 8 : i32
    %220 = vector.broadcast %c8_i32_63 : i32 to vector<16x128xi32>
    %221 = arith.cmpi eq, %29, %220 : vector<16x128xi32>
    %222 = arith.ori %213, %215 : vector<16x128xi1>
    %223 = arith.ori %222, %217 : vector<16x128xi1>
    %224 = arith.ori %223, %219 : vector<16x128xi1>
    %225 = arith.ori %224, %221 : vector<16x128xi1>
    %226 = arith.andi %213, %215 : vector<16x128xi1>
    %227 = arith.andi %226, %217 : vector<16x128xi1>
    %228 = arith.andi %227, %219 : vector<16x128xi1>
    %229 = arith.andi %228, %221 : vector<16x128xi1>
    %cst_64 = arith.constant dense<true> : vector<16x128xi1>
    %230 = arith.xori %229, %cst_64 : vector<16x128xi1>
    %231 = arith.andi %225, %230 : vector<16x128xi1>
    %cst_65 = arith.constant dense<true> : vector<16x128xi1>
    %232 = arith.xori %231, %cst_65 : vector<16x128xi1>
    %233 = arith.andi %232, %213 : vector<16x128xi1>
    %234 = arith.extui %231 : vector<16x128xi1> to vector<16x128xi32>
    %235 = arith.sitofp %234 : vector<16x128xi32> to vector<16x128xf32>
    %236 = arith.extui %233 : vector<16x128xi1> to vector<16x128xi32>
    %237 = arith.sitofp %236 : vector<16x128xi32> to vector<16x128xf32>
    %c9_i32 = arith.constant 9 : i32
    %238 = vector.broadcast %c9_i32 : i32 to vector<16x128xi32>
    %239 = arith.cmpi eq, %1, %238 : vector<16x128xi32>
    %c9_i32_66 = arith.constant 9 : i32
    %240 = vector.broadcast %c9_i32_66 : i32 to vector<16x128xi32>
    %241 = arith.cmpi eq, %14, %240 : vector<16x128xi32>
    %c9_i32_67 = arith.constant 9 : i32
    %242 = vector.broadcast %c9_i32_67 : i32 to vector<16x128xi32>
    %243 = arith.cmpi eq, %19, %242 : vector<16x128xi32>
    %c9_i32_68 = arith.constant 9 : i32
    %244 = vector.broadcast %c9_i32_68 : i32 to vector<16x128xi32>
    %245 = arith.cmpi eq, %24, %244 : vector<16x128xi32>
    %c9_i32_69 = arith.constant 9 : i32
    %246 = vector.broadcast %c9_i32_69 : i32 to vector<16x128xi32>
    %247 = arith.cmpi eq, %29, %246 : vector<16x128xi32>
    %248 = arith.ori %239, %241 : vector<16x128xi1>
    %249 = arith.ori %248, %243 : vector<16x128xi1>
    %250 = arith.ori %249, %245 : vector<16x128xi1>
    %251 = arith.ori %250, %247 : vector<16x128xi1>
    %252 = arith.andi %239, %241 : vector<16x128xi1>
    %253 = arith.andi %252, %243 : vector<16x128xi1>
    %254 = arith.andi %253, %245 : vector<16x128xi1>
    %255 = arith.andi %254, %247 : vector<16x128xi1>
    %cst_70 = arith.constant dense<true> : vector<16x128xi1>
    %256 = arith.xori %255, %cst_70 : vector<16x128xi1>
    %257 = arith.andi %251, %256 : vector<16x128xi1>
    %cst_71 = arith.constant dense<true> : vector<16x128xi1>
    %258 = arith.xori %257, %cst_71 : vector<16x128xi1>
    %259 = arith.andi %258, %239 : vector<16x128xi1>
    %260 = arith.extui %257 : vector<16x128xi1> to vector<16x128xi32>
    %261 = arith.sitofp %260 : vector<16x128xi32> to vector<16x128xf32>
    %262 = arith.extui %259 : vector<16x128xi1> to vector<16x128xi32>
    %263 = arith.sitofp %262 : vector<16x128xi32> to vector<16x128xf32>
    %c10_i32 = arith.constant 10 : i32
    %264 = vector.broadcast %c10_i32 : i32 to vector<16x128xi32>
    %265 = arith.cmpi eq, %1, %264 : vector<16x128xi32>
    %c10_i32_72 = arith.constant 10 : i32
    %266 = vector.broadcast %c10_i32_72 : i32 to vector<16x128xi32>
    %267 = arith.cmpi eq, %14, %266 : vector<16x128xi32>
    %c10_i32_73 = arith.constant 10 : i32
    %268 = vector.broadcast %c10_i32_73 : i32 to vector<16x128xi32>
    %269 = arith.cmpi eq, %19, %268 : vector<16x128xi32>
    %c10_i32_74 = arith.constant 10 : i32
    %270 = vector.broadcast %c10_i32_74 : i32 to vector<16x128xi32>
    %271 = arith.cmpi eq, %24, %270 : vector<16x128xi32>
    %c10_i32_75 = arith.constant 10 : i32
    %272 = vector.broadcast %c10_i32_75 : i32 to vector<16x128xi32>
    %273 = arith.cmpi eq, %29, %272 : vector<16x128xi32>
    %274 = arith.ori %265, %267 : vector<16x128xi1>
    %275 = arith.ori %274, %269 : vector<16x128xi1>
    %276 = arith.ori %275, %271 : vector<16x128xi1>
    %277 = arith.ori %276, %273 : vector<16x128xi1>
    %278 = arith.andi %265, %267 : vector<16x128xi1>
    %279 = arith.andi %278, %269 : vector<16x128xi1>
    %280 = arith.andi %279, %271 : vector<16x128xi1>
    %281 = arith.andi %280, %273 : vector<16x128xi1>
    %cst_76 = arith.constant dense<true> : vector<16x128xi1>
    %282 = arith.xori %281, %cst_76 : vector<16x128xi1>
    %283 = arith.andi %277, %282 : vector<16x128xi1>
    %cst_77 = arith.constant dense<true> : vector<16x128xi1>
    %284 = arith.xori %283, %cst_77 : vector<16x128xi1>
    %285 = arith.andi %284, %265 : vector<16x128xi1>
    %286 = arith.extui %283 : vector<16x128xi1> to vector<16x128xi32>
    %287 = arith.sitofp %286 : vector<16x128xi32> to vector<16x128xf32>
    %288 = arith.extui %285 : vector<16x128xi1> to vector<16x128xi32>
    %289 = arith.sitofp %288 : vector<16x128xi32> to vector<16x128xf32>
    %c11_i32 = arith.constant 11 : i32
    %290 = vector.broadcast %c11_i32 : i32 to vector<16x128xi32>
    %291 = arith.cmpi eq, %1, %290 : vector<16x128xi32>
    %c11_i32_78 = arith.constant 11 : i32
    %292 = vector.broadcast %c11_i32_78 : i32 to vector<16x128xi32>
    %293 = arith.cmpi eq, %14, %292 : vector<16x128xi32>
    %c11_i32_79 = arith.constant 11 : i32
    %294 = vector.broadcast %c11_i32_79 : i32 to vector<16x128xi32>
    %295 = arith.cmpi eq, %19, %294 : vector<16x128xi32>
    %c11_i32_80 = arith.constant 11 : i32
    %296 = vector.broadcast %c11_i32_80 : i32 to vector<16x128xi32>
    %297 = arith.cmpi eq, %24, %296 : vector<16x128xi32>
    %c11_i32_81 = arith.constant 11 : i32
    %298 = vector.broadcast %c11_i32_81 : i32 to vector<16x128xi32>
    %299 = arith.cmpi eq, %29, %298 : vector<16x128xi32>
    %300 = arith.ori %291, %293 : vector<16x128xi1>
    %301 = arith.ori %300, %295 : vector<16x128xi1>
    %302 = arith.ori %301, %297 : vector<16x128xi1>
    %303 = arith.ori %302, %299 : vector<16x128xi1>
    %304 = arith.andi %291, %293 : vector<16x128xi1>
    %305 = arith.andi %304, %295 : vector<16x128xi1>
    %306 = arith.andi %305, %297 : vector<16x128xi1>
    %307 = arith.andi %306, %299 : vector<16x128xi1>
    %cst_82 = arith.constant dense<true> : vector<16x128xi1>
    %308 = arith.xori %307, %cst_82 : vector<16x128xi1>
    %309 = arith.andi %303, %308 : vector<16x128xi1>
    %cst_83 = arith.constant dense<true> : vector<16x128xi1>
    %310 = arith.xori %309, %cst_83 : vector<16x128xi1>
    %311 = arith.andi %310, %291 : vector<16x128xi1>
    %312 = arith.extui %309 : vector<16x128xi1> to vector<16x128xi32>
    %313 = arith.sitofp %312 : vector<16x128xi32> to vector<16x128xf32>
    %314 = arith.extui %311 : vector<16x128xi1> to vector<16x128xi32>
    %315 = arith.sitofp %314 : vector<16x128xi32> to vector<16x128xf32>
    %c12_i32 = arith.constant 12 : i32
    %316 = vector.broadcast %c12_i32 : i32 to vector<16x128xi32>
    %317 = arith.cmpi eq, %1, %316 : vector<16x128xi32>
    %c12_i32_84 = arith.constant 12 : i32
    %318 = vector.broadcast %c12_i32_84 : i32 to vector<16x128xi32>
    %319 = arith.cmpi eq, %14, %318 : vector<16x128xi32>
    %c12_i32_85 = arith.constant 12 : i32
    %320 = vector.broadcast %c12_i32_85 : i32 to vector<16x128xi32>
    %321 = arith.cmpi eq, %19, %320 : vector<16x128xi32>
    %c12_i32_86 = arith.constant 12 : i32
    %322 = vector.broadcast %c12_i32_86 : i32 to vector<16x128xi32>
    %323 = arith.cmpi eq, %24, %322 : vector<16x128xi32>
    %c12_i32_87 = arith.constant 12 : i32
    %324 = vector.broadcast %c12_i32_87 : i32 to vector<16x128xi32>
    %325 = arith.cmpi eq, %29, %324 : vector<16x128xi32>
    %326 = arith.ori %317, %319 : vector<16x128xi1>
    %327 = arith.ori %326, %321 : vector<16x128xi1>
    %328 = arith.ori %327, %323 : vector<16x128xi1>
    %329 = arith.ori %328, %325 : vector<16x128xi1>
    %330 = arith.andi %317, %319 : vector<16x128xi1>
    %331 = arith.andi %330, %321 : vector<16x128xi1>
    %332 = arith.andi %331, %323 : vector<16x128xi1>
    %333 = arith.andi %332, %325 : vector<16x128xi1>
    %cst_88 = arith.constant dense<true> : vector<16x128xi1>
    %334 = arith.xori %333, %cst_88 : vector<16x128xi1>
    %335 = arith.andi %329, %334 : vector<16x128xi1>
    %cst_89 = arith.constant dense<true> : vector<16x128xi1>
    %336 = arith.xori %335, %cst_89 : vector<16x128xi1>
    %337 = arith.andi %336, %317 : vector<16x128xi1>
    %338 = arith.extui %335 : vector<16x128xi1> to vector<16x128xi32>
    %339 = arith.sitofp %338 : vector<16x128xi32> to vector<16x128xf32>
    %340 = arith.extui %337 : vector<16x128xi1> to vector<16x128xi32>
    %341 = arith.sitofp %340 : vector<16x128xi32> to vector<16x128xf32>
    %c13_i32 = arith.constant 13 : i32
    %342 = vector.broadcast %c13_i32 : i32 to vector<16x128xi32>
    %343 = arith.cmpi eq, %1, %342 : vector<16x128xi32>
    %c13_i32_90 = arith.constant 13 : i32
    %344 = vector.broadcast %c13_i32_90 : i32 to vector<16x128xi32>
    %345 = arith.cmpi eq, %14, %344 : vector<16x128xi32>
    %c13_i32_91 = arith.constant 13 : i32
    %346 = vector.broadcast %c13_i32_91 : i32 to vector<16x128xi32>
    %347 = arith.cmpi eq, %19, %346 : vector<16x128xi32>
    %c13_i32_92 = arith.constant 13 : i32
    %348 = vector.broadcast %c13_i32_92 : i32 to vector<16x128xi32>
    %349 = arith.cmpi eq, %24, %348 : vector<16x128xi32>
    %c13_i32_93 = arith.constant 13 : i32
    %350 = vector.broadcast %c13_i32_93 : i32 to vector<16x128xi32>
    %351 = arith.cmpi eq, %29, %350 : vector<16x128xi32>
    %352 = arith.ori %343, %345 : vector<16x128xi1>
    %353 = arith.ori %352, %347 : vector<16x128xi1>
    %354 = arith.ori %353, %349 : vector<16x128xi1>
    %355 = arith.ori %354, %351 : vector<16x128xi1>
    %356 = arith.andi %343, %345 : vector<16x128xi1>
    %357 = arith.andi %356, %347 : vector<16x128xi1>
    %358 = arith.andi %357, %349 : vector<16x128xi1>
    %359 = arith.andi %358, %351 : vector<16x128xi1>
    %cst_94 = arith.constant dense<true> : vector<16x128xi1>
    %360 = arith.xori %359, %cst_94 : vector<16x128xi1>
    %361 = arith.andi %355, %360 : vector<16x128xi1>
    %cst_95 = arith.constant dense<true> : vector<16x128xi1>
    %362 = arith.xori %361, %cst_95 : vector<16x128xi1>
    %363 = arith.andi %362, %343 : vector<16x128xi1>
    %364 = arith.extui %361 : vector<16x128xi1> to vector<16x128xi32>
    %365 = arith.sitofp %364 : vector<16x128xi32> to vector<16x128xf32>
    %366 = arith.extui %363 : vector<16x128xi1> to vector<16x128xi32>
    %367 = arith.sitofp %366 : vector<16x128xi32> to vector<16x128xf32>
    %368 = vector.shape_cast %53 : vector<16x128xf32> to vector<1x16x128xf32>
    %369 = vector.shape_cast %79 : vector<16x128xf32> to vector<1x16x128xf32>
    %370 = vector.shape_cast %105 : vector<16x128xf32> to vector<1x16x128xf32>
    %371 = vector.shape_cast %131 : vector<16x128xf32> to vector<1x16x128xf32>
    %372 = vector.shape_cast %157 : vector<16x128xf32> to vector<1x16x128xf32>
    %373 = vector.shape_cast %183 : vector<16x128xf32> to vector<1x16x128xf32>
    %374 = vector.shape_cast %209 : vector<16x128xf32> to vector<1x16x128xf32>
    %375 = vector.shape_cast %235 : vector<16x128xf32> to vector<1x16x128xf32>
    %376 = vector.shape_cast %261 : vector<16x128xf32> to vector<1x16x128xf32>
    %377 = vector.shape_cast %287 : vector<16x128xf32> to vector<1x16x128xf32>
    %378 = vector.shape_cast %313 : vector<16x128xf32> to vector<1x16x128xf32>
    %379 = vector.shape_cast %339 : vector<16x128xf32> to vector<1x16x128xf32>
    %380 = vector.shape_cast %365 : vector<16x128xf32> to vector<1x16x128xf32>
    %381 = tpu.concatenate %368, %369, %370, %371, %372, %373, %374, %375, %376, %377, %378, %379, %380 in 0 : vector<1x16x128xf32>, vector<1x16x128xf32>, vector<1x16x128xf32>, vector<1x16x128xf32>, vector<1x16x128xf32>, vector<1x16x128xf32>, vector<1x16x128xf32>, vector<1x16x128xf32>, vector<1x16x128xf32>, vector<1x16x128xf32>, vector<1x16x128xf32>, vector<1x16x128xf32>, vector<1x16x128xf32> -> vector<13x16x128xf32>
    %382 = vector.shape_cast %55 : vector<16x128xf32> to vector<1x16x128xf32>
    %383 = vector.shape_cast %81 : vector<16x128xf32> to vector<1x16x128xf32>
    %384 = vector.shape_cast %107 : vector<16x128xf32> to vector<1x16x128xf32>
    %385 = vector.shape_cast %133 : vector<16x128xf32> to vector<1x16x128xf32>
    %386 = vector.shape_cast %159 : vector<16x128xf32> to vector<1x16x128xf32>
    %387 = vector.shape_cast %185 : vector<16x128xf32> to vector<1x16x128xf32>
    %388 = vector.shape_cast %211 : vector<16x128xf32> to vector<1x16x128xf32>
    %389 = vector.shape_cast %237 : vector<16x128xf32> to vector<1x16x128xf32>
    %390 = vector.shape_cast %263 : vector<16x128xf32> to vector<1x16x128xf32>
    %391 = vector.shape_cast %289 : vector<16x128xf32> to vector<1x16x128xf32>
    %392 = vector.shape_cast %315 : vector<16x128xf32> to vector<1x16x128xf32>
    %393 = vector.shape_cast %341 : vector<16x128xf32> to vector<1x16x128xf32>
    %394 = vector.shape_cast %367 : vector<16x128xf32> to vector<1x16x128xf32>
    %395 = tpu.concatenate %382, %383, %384, %385, %386, %387, %388, %389, %390, %391, %392, %393, %394 in 0 : vector<1x16x128xf32>, vector<1x16x128xf32>, vector<1x16x128xf32>, vector<1x16x128xf32>, vector<1x16x128xf32>, vector<1x16x128xf32>, vector<1x16x128xf32>, vector<1x16x128xf32>, vector<1x16x128xf32>, vector<1x16x128xf32>, vector<1x16x128xf32>, vector<1x16x128xf32>, vector<1x16x128xf32> -> vector<13x16x128xf32>
    %396 = arith.mulf %4, %381 : vector<13x16x128xf32>
    %397 = arith.mulf %4, %395 : vector<13x16x128xf32>
    %398 = tpu.concatenate %396, %397 in 0 : vector<13x16x128xf32>, vector<13x16x128xf32> -> vector<26x16x128xf32>
    %399 = arith.mulf %7, %381 : vector<13x16x128xf32>
    %400 = arith.mulf %7, %395 : vector<13x16x128xf32>
    %401 = tpu.concatenate %399, %400 in 0 : vector<13x16x128xf32>, vector<13x16x128xf32> -> vector<26x16x128xf32>
    %cst_96 = arith.constant dense<0xFF800000> : vector<26x16xf32>
    %402 = vector.multi_reduction <maximumf>, %398, %cst_96 [2] : vector<26x16x128xf32> to vector<26x16xf32>
    %403 = vector.shape_cast %402 : vector<26x16xf32> to vector<26x16x1xf32>
    %cst_97 = arith.constant dense<0xFF800000> : vector<26x1xf32>
    %404 = vector.multi_reduction <maximumf>, %403, %cst_97 [1] : vector<26x16x1xf32> to vector<26x1xf32>
    %405 = vector.shape_cast %404 : vector<26x1xf32> to vector<26x1x1xf32>
    %406 = vector.broadcast %405 : vector<26x1x1xf32> to vector<26x16x128xf32>
    %407 = arith.subf %398, %406 : vector<26x16x128xf32>
    %cst_98 = arith.constant dense<0xFF800000> : vector<26x16xf32>
    %408 = vector.multi_reduction <maximumf>, %401, %cst_98 [2] : vector<26x16x128xf32> to vector<26x16xf32>
    %409 = vector.shape_cast %408 : vector<26x16xf32> to vector<26x16x1xf32>
    %cst_99 = arith.constant dense<0xFF800000> : vector<26x1xf32>
    %410 = vector.multi_reduction <maximumf>, %409, %cst_99 [1] : vector<26x16x1xf32> to vector<26x1xf32>
    %411 = vector.shape_cast %410 : vector<26x1xf32> to vector<26x1x1xf32>
    %412 = vector.broadcast %411 : vector<26x1x1xf32> to vector<26x16x128xf32>
    %413 = arith.subf %401, %412 : vector<26x16x128xf32>
    %414 = math.exp %407 : vector<26x16x128xf32>
    %415 = math.exp %413 : vector<26x16x128xf32>
    %cst_100 = arith.constant dense<0.000000e+00> : vector<26x16xf32>
    %416 = vector.multi_reduction <add>, %414, %cst_100 [2] : vector<26x16x128xf32> to vector<26x16xf32>
    %417 = vector.shape_cast %416 : vector<26x16xf32> to vector<26x16x1xf32>
    %cst_101 = arith.constant dense<0.000000e+00> : vector<26x1xf32>
    %418 = vector.multi_reduction <add>, %417, %cst_101 [1] : vector<26x16x1xf32> to vector<26x1xf32>
    %419 = vector.shape_cast %418 : vector<26x1xf32> to vector<26x1x1xf32>
    %cst_102 = arith.constant dense<0.000000e+00> : vector<26x16xf32>
    %420 = vector.multi_reduction <add>, %415, %cst_102 [2] : vector<26x16x128xf32> to vector<26x16xf32>
    %421 = vector.shape_cast %420 : vector<26x16xf32> to vector<26x16x1xf32>
    %cst_103 = arith.constant dense<0.000000e+00> : vector<26x1xf32>
    %422 = vector.multi_reduction <add>, %421, %cst_103 [1] : vector<26x16x1xf32> to vector<26x1xf32>
    %423 = vector.shape_cast %422 : vector<26x1xf32> to vector<26x1x1xf32>
    %424 = arith.subf %413, %407 : vector<26x16x128xf32>
    %425 = arith.mulf %415, %424 : vector<26x16x128xf32>
    %cst_104 = arith.constant dense<0.000000e+00> : vector<26x16xf32>
    %426 = vector.multi_reduction <add>, %425, %cst_104 [2] : vector<26x16x128xf32> to vector<26x16xf32>
    %427 = vector.shape_cast %426 : vector<26x16xf32> to vector<26x16x1xf32>
    %cst_105 = arith.constant dense<0.000000e+00> : vector<26x1xf32>
    %428 = vector.multi_reduction <add>, %427, %cst_105 [1] : vector<26x16x1xf32> to vector<26x1xf32>
    %429 = vector.shape_cast %428 : vector<26x1xf32> to vector<26x1x1xf32>
    %430 = arith.divf %429, %423 : vector<26x1x1xf32>
    %431 = math.log %419 : vector<26x1x1xf32>
    %432 = math.log %423 : vector<26x1x1xf32>
    %433 = arith.subf %431, %432 : vector<26x1x1xf32>
    %434 = arith.addf %430, %433 : vector<26x1x1xf32>
    %435 = tpu.concatenate %381, %395 in 0 : vector<13x16x128xf32>, vector<13x16x128xf32> -> vector<26x16x128xf32>
    %cst_106 = arith.constant dense<0.000000e+00> : vector<26x16xf32>
    %436 = vector.multi_reduction <add>, %435, %cst_106 [2] : vector<26x16x128xf32> to vector<26x16xf32>
    %437 = vector.shape_cast %436 : vector<26x16xf32> to vector<26x16x1xf32>
    %cst_107 = arith.constant dense<0.000000e+00> : vector<26x1xf32>
    %438 = vector.multi_reduction <add>, %437, %cst_107 [1] : vector<26x16x1xf32> to vector<26x1xf32>
    %439 = vector.shape_cast %438 : vector<26x1xf32> to vector<26x1x1xf32>
    %440 = tpu.concatenate %434, %439 in 0 : vector<26x1x1xf32>, vector<26x1x1xf32> -> vector<52x1x1xf32>
    %441 = vector.shape_cast %440 : vector<52x1x1xf32> to vector<52x1x1xf32>
    %442 = vector.broadcast %441 : vector<52x1x1xf32> to vector<52x1x128xf32>
    %c0_108 = arith.constant 0 : index
    %c0_109 = arith.constant 0 : index
    %c0_110 = arith.constant 0 : index
    %c0_111 = arith.constant 0 : index
    %443 = vector.load %arg4[%c0_108, %c0_109, %c0_110, %c0_111] : memref<1x52x1x128xf32, #tpu.memory_space<vmem>>, vector<1x52x1x128xf32>
    %444 = vector.shape_cast %443 : vector<1x52x1x128xf32> to vector<52x1x128xf32>
    %445 = vector.shape_cast %442 : vector<52x1x128xf32> to vector<1x52x1x128xf32>
    tpu.vector_store %arg4[%c0_108, %c0_109, %c0_110, %c0_111], %445 {strides = array<i32>} : memref<1x52x1x128xf32, #tpu.memory_space<vmem>>, vector<1x52x1x128xf32>,
    return
  }
  func.func @transform_0(%arg0: i32) -> (i32, i32, i32) {
    %c0_i32 = arith.constant 0 : i32
    %c0_i32_0 = arith.constant 0 : i32
    %c0_i32_1 = arith.constant 0 : i32
    return %arg0, %c0_i32, %c0_i32_0 : i32, i32, i32
  }
  func.func @transform_1(%arg0: i32) -> (i32, i32, i32, i32) {
    %c0_i32 = arith.constant 0 : i32
    %c0_i32_0 = arith.constant 0 : i32
    %c0_i32_1 = arith.constant 0 : i32
    %c0_i32_2 = arith.constant 0 : i32
    return %arg0, %c0_i32, %c0_i32_0, %c0_i32_1 : i32, i32, i32, i32
  }
  func.func @transform_2(%arg0: i32) -> (i32, i32, i32, i32) {
    %c0_i32 = arith.constant 0 : i32
    %c0_i32_0 = arith.constant 0 : i32
    %c0_i32_1 = arith.constant 0 : i32
    %c0_i32_2 = arith.constant 0 : i32
    return %arg0, %c0_i32, %c0_i32_0, %c0_i32_1 : i32, i32, i32, i32
  }
  func.func @transform_3(%arg0: i32) -> (i32, i32, i32, i32) {
    %c0_i32 = arith.constant 0 : i32
    %c0_i32_0 = arith.constant 0 : i32
    %c0_i32_1 = arith.constant 0 : i32
    %c0_i32_2 = arith.constant 0 : i32
    return %arg0, %c0_i32, %c0_i32_0, %c0_i32_1 : i32, i32, i32, i32
  }
}

</mosaic_0001>

<llo_original>
// kernel: tpu_custom_call.1
$region0: #{tpu_custom_call.1}
  #allocation0 [shape = 'u32[]', space=smem, size = 0x4, offset = 0x4, fixed_abs, tag = 'smem constant byte address 0x4 - core index']
  #allocation1 [shape = 'u32[72,128]{1,0:T(1,128)}', space=vmem, size = 0x9000, scoped, tag = 'internal scratch']
  %s0 = inlined_call_operand.hbm [shape: s32[2,16,128], index: 0, kind: input, shape index: {}]
  %s1 = inlined_call_operand.hbm [shape: f32[2,14,16,128], index: 1, kind: input, shape index: {}]
  %s2 = inlined_call_operand.hbm [shape: f32[2,14,16,128], index: 2, kind: input, shape index: {}]
  %s3 = inlined_call_operand.hbm [shape: f32[2,52,1,128], index: 3, kind: output, shape index: {}]
  %s4 = sld [smem:[#allocation0]]
  $region57: #{tpu_custom_call.1} parent=0
    _
  %s6 = ssub.s32 1, %s4
  %s7 = scalar_select 0, %s6, %s4
  $region1: #{tpu_custom_call.1} parent=0
    #allocation2 [shape = 'u8[16384]{0}', space=vmem, size = 0x4000, scoped, tag = 'input window, operand 0']
    #allocation3 [shape = 's32[2]{0}', space=sflag, size = 0x8, scoped, tag = 'scoped memory for tpu_custom_call.1']
    #allocation4 [shape = 's32[2]{0}', space=sflag, size = 0x8, scoped, tag = 'scoped memory for tpu_custom_call.1']
    #allocation5 [shape = 'u8[229376]{0}', space=vmem, size = 0x38000, scoped, tag = 'input window, operand 1']
    #allocation6 [shape = 's32[2]{0}', space=sflag, size = 0x8, scoped, tag = 'scoped memory for tpu_custom_call.1']
    #allocation7 [shape = 'u8[229376]{0}', space=vmem, size = 0x38000, scoped, tag = 'input window, operand 2']
    #allocation8 [shape = 'u8[53248]{0}', space=vmem, size = 0xd000, scoped, tag = 'output window, operand 0']
    %8 = vsyncpa [#allocation3], 0
    %s9 = scalar_lea.sflag [#allocation3], 1
    %10 = vsyncpa %s9, 0
    %11 = vsyncpa [#allocation6], 0
    %s12 = scalar_lea.sflag [#allocation6], 1
    %13 = vsyncpa %s12, 0
    %14 = vsyncpa [#allocation4], 0
    %s15 = scalar_lea.sflag [#allocation4], 1
    %16 = vsyncpa %s15, 0
    loop: start=0, step=1, limit=4
    $region2: #{tpu_custom_call.1} parent=1 // loop_pre_header
      _
    $region3: #{tpu_custom_call.1} parent=1 // loop_header
      %s18 = sphi 0, %s22
      %p19 = scmp.ge.s32.totalorder %s18, 4
      %s28 = sphi 0, %s30
      %s31 = sphi 0, %s28
      %s32 = sphi 0, %s31
      %s48 = sphi 0, %s32
      %s54 = sphi 0, %s56
      %s57 = sphi 0, %s54
      %s58 = sphi 0, %s57
      %s74 = sphi 0, %s58
      %s80 = sphi 0, %s82
      %s83 = sphi 0, %s80
      %s84 = sphi 0, %s83
      %s100 = sphi 0, %s84
      %s106 = sphi 0, %s108
      %s109 = sphi 0, %s106
      %s110 = sphi 0, %s109
      %s126 = sphi 0, %s110
    $region4: #{tpu_custom_call.1} parent=1 // loop_header_branch
      %21 = sbr.rel (%p19) target = $region8
    $region5: #{tpu_custom_call.1} parent=1 // loop_body
      %s23 = ssub.s32 %s18, 1
      %s24 = ssub.s32 %s18, 2
      %s25 = sadd.s32 %s18, 1
      %s26 = ssub.s32 %s18, %s25
      %p27 = scmp.eq.s32.totalorder %s26, 0
      %s29 = sadd.s32 %s28, 1
      %s30 = scalar_select %p27, %s28, %s29
      %p33 = pneg %p27
      %p34 = scmp.eq.s32.totalorder %s18, 1
      %p35 = por %p33, %p34
      %p36 = scmp.ne.s32.totalorder %s28, %s31
      %p37 = scmp.eq.s32.totalorder %s18, 0
      %p38 = por %p36, %p37
      %p39 = scmp.ne.s32.totalorder %s28, %s31
      %p40 = scmp.eq.s32.totalorder %s23, 1
      %p41 = por %p39, %p40
      %p42 = scmp.ne.s32.totalorder %s31, %s32
      %p43 = scmp.eq.s32.totalorder %s23, 0
      %p44 = por %p42, %p43
      %p45 = scmp.ne.s32.totalorder %s31, %s32
      %p46 = scmp.eq.s32.totalorder %s24, 1
      %p47 = por %p45, %p46
      %p49 = scmp.ne.s32.totalorder %s32, %s48
      %p50 = scmp.eq.s32.totalorder %s24, 0
      %p51 = por %p49, %p50
      %s52 = ssub.s32 %s18, %s25
      %p53 = scmp.eq.s32.totalorder %s52, 0
      %s55 = sadd.s32 %s54, 1
      %s56 = scalar_select %p53, %s54, %s55
      %p59 = pneg %p53
      %p60 = scmp.eq.s32.totalorder %s18, 1
      %p61 = por %p59, %p60
      %p62 = scmp.ne.s32.totalorder %s54, %s57
      %p63 = scmp.eq.s32.totalorder %s18, 0
      %p64 = por %p62, %p63
      %p65 = scmp.ne.s32.totalorder %s54, %s57
      %p66 = scmp.eq.s32.totalorder %s23, 1
      %p67 = por %p65, %p66
      %p68 = scmp.ne.s32.totalorder %s57, %s58
      %p69 = scmp.eq.s32.totalorder %s23, 0
      %p70 = por %p68, %p69
      %p71 = scmp.ne.s32.totalorder %s57, %s58
      %p72 = scmp.eq.s32.totalorder %s24, 1
      %p73 = por %p71, %p72
      %p75 = scmp.ne.s32.totalorder %s58, %s74
      %p76 = scmp.eq.s32.totalorder %s24, 0
      %p77 = por %p75, %p76
      %s78 = ssub.s32 %s18, %s25
      %p79 = scmp.eq.s32.totalorder %s78, 0
      %s81 = sadd.s32 %s80, 1
      %s82 = scalar_select %p79, %s80, %s81
      %p85 = pneg %p79
      %p86 = scmp.eq.s32.totalorder %s18, 1
      %p87 = por %p85, %p86
      %p88 = scmp.ne.s32.totalorder %s80, %s83
      %p89 = scmp.eq.s32.totalorder %s18, 0
      %p90 = por %p88, %p89
      %p91 = scmp.ne.s32.totalorder %s80, %s83
      %p92 = scmp.eq.s32.totalorder %s23, 1
      %p93 = por %p91, %p92
      %p94 = scmp.ne.s32.totalorder %s83, %s84
      %p95 = scmp.eq.s32.totalorder %s23, 0
      %p96 = por %p94, %p95
      %p97 = scmp.ne.s32.totalorder %s83, %s84
      %p98 = scmp.eq.s32.totalorder %s24, 1
      %p99 = por %p97, %p98
      %p101 = scmp.ne.s32.totalorder %s84, %s100
      %p102 = scmp.eq.s32.totalorder %s24, 0
      %p103 = por %p101, %p102
      %s104 = ssub.s32 %s18, %s25
      %p105 = scmp.eq.s32.totalorder %s104, 0
      %s107 = sadd.s32 %s106, 1
      %s108 = scalar_select %p105, %s106, %s107
      %p111 = pneg %p105
      %p112 = scmp.eq.s32.totalorder %s18, 1
      %p113 = por %p111, %p112
      %p114 = scmp.ne.s32.totalorder %s106, %s109
      %p115 = scmp.eq.s32.totalorder %s18, 0
      %p116 = por %p114, %p115
      %p117 = scmp.ne.s32.totalorder %s106, %s109
      %p118 = scmp.eq.s32.totalorder %s23, 1
      %p119 = por %p117, %p118
      %p120 = scmp.ne.s32.totalorder %s109, %s110
      %p121 = scmp.eq.s32.totalorder %s23, 0
      %p122 = por %p120, %p121
      %p123 = scmp.ne.s32.totalorder %s109, %s110
      %p124 = scmp.eq.s32.totalorder %s24, 1
      %p125 = por %p123, %p124
      %p127 = scmp.ne.s32.totalorder %s110, %s126
      %p128 = scmp.eq.s32.totalorder %s24, 0
      %p129 = por %p127, %p128
      %p130 = scmp.le.s32.totalorder 1, %s18
      %p131 = scmp.lt.s32.totalorder %s18, 3
      %p132 = pnand %p130, %p131
      %p133 = pneg %p132
      // Predicated region
      $region9: #{tpu_custom_call.1} parent=5 // pred_check
        _
      $region10: #{tpu_custom_call.1} parent=5 // pred_check_branch
        %135 = sbr.rel (%p132) target = $region12
      $region11: #{tpu_custom_call.1} parent=5 // pred_region
        %s136 = ssub.s32 %s18, 1
      $region12: #{tpu_custom_call.1} parent=5 // pred_fallthru
        _
      %p137 = scmp.lt.s32.totalorder %s18, 2
      // Predicated region
      $region13: #{tpu_custom_call.1} parent=5 // pred_check
        %p138 = pneg %p137
      $region14: #{tpu_custom_call.1} parent=5 // pred_check_branch
        %140 = sbr.rel (%p138) target = $region16
      $region15: #{tpu_custom_call.1} parent=5 // pred_region
        // Predicated region
        $region17: #{tpu_custom_call.1} parent=15 // pred_check
          %p141 = pneg %p38
        $region18: #{tpu_custom_call.1} parent=15 // pred_check_branch
          %143 = sbr.rel (%p141) target = $region20
        $region19: #{tpu_custom_call.1} parent=15 // pred_region
          %s144 = sand.u32 %s28, 1
          %s145 = scalar_lea.sflag [#allocation3], %s144
          %s146 = sand.u32 %s28, 1
          %s147 = smul.addr %s146, 16
          %s148 = scalar_lea.vmem [#allocation2], %s147
          %150 = vsyncadd %s145, 0
          %s151 = smul.addr %s18, 2
          %s152 = smul.addr %s151, 8
          %s153 = scalar_lea.hbm %s0, %s152
          %s154 = sshll.u32 %s153, 4
          %s155 = int_to_ptr.hbm [resolvable:$true] %s154
          %s156 = sshll.u32 %s148, 4
          %s157 = int_to_ptr.vmem [resolvable:$true] %s156
          %162 = dma.hbm_to_vmem [thread:$0]  %s155, 256, %s157, %s145, 128, 128, 8
        $region20: #{tpu_custom_call.1} parent=15 // pred_fallthru
          _
        // Predicated region
        $region21: #{tpu_custom_call.1} parent=15 // pred_check
          %p163 = pneg %p64
        $region22: #{tpu_custom_call.1} parent=15 // pred_check_branch
          %165 = sbr.rel (%p163) target = $region24
        $region23: #{tpu_custom_call.1} parent=15 // pred_region
          %s166 = sand.u32 %s18, 1
          %s167 = scalar_lea.sflag [#allocation6], %s166
          %s168 = sand.u32 %s54, 1
          %s169 = smul.addr %s168, 224
          %s170 = scalar_lea.vmem [#allocation5], %s169
          %172 = vsyncadd %s167, 0
          %s173 = smul.addr %s18, 28
          %s174 = smul.addr %s173, 8
          %s175 = scalar_lea.hbm %s1, %s174
          %s176 = sshll.u32 %s175, 4
          %s177 = int_to_ptr.hbm [resolvable:$true] %s176
          %s178 = sshll.u32 %s170, 4
          %s179 = int_to_ptr.vmem [resolvable:$true] %s178
          %184 = dma.hbm_to_vmem [thread:$0]  %s177, 3584, %s179, %s167, 128, 128, 8
        $region24: #{tpu_custom_call.1} parent=15 // pred_fallthru
          _
        // Predicated region
        $region25: #{tpu_custom_call.1} parent=15 // pred_check
          %p185 = pneg %p90
        $region26: #{tpu_custom_call.1} parent=15 // pred_check_branch
          %187 = sbr.rel (%p185) target = $region28
        $region27: #{tpu_custom_call.1} parent=15 // pred_region
          %s188 = sand.u32 %s18, 1
          %s189 = scalar_lea.sflag [#allocation6], %s188
          %s190 = sand.u32 %s80, 1
          %s191 = smul.addr %s190, 224
          %s192 = scalar_lea.vmem [#allocation7], %s191
          %194 = vsyncadd %s189, 0
          %s195 = smul.addr %s18, 28
          %s196 = smul.addr %s195, 8
          %s197 = scalar_lea.hbm %s2, %s196
          %s198 = sshll.u32 %s197, 4
          %s199 = int_to_ptr.hbm [resolvable:$true] %s198
          %s200 = sshll.u32 %s192, 4
          %s201 = int_to_ptr.vmem [resolvable:$true] %s200
          %206 = dma.hbm_to_vmem [thread:$0]  %s199, 3584, %s201, %s189, 128, 128, 8
        $region28: #{tpu_custom_call.1} parent=15 // pred_fallthru
          _
      $region16: #{tpu_custom_call.1} parent=5 // pred_fallthru
        _
      %p207 = scmp.le.s32.totalorder 1, %s18
      %p208 = scmp.lt.s32.totalorder %s18, 3
      %p209 = pnand %p207, %p208
      %p210 = pneg %p209
      // Predicated region
      $region29: #{tpu_custom_call.1} parent=5 // pred_check
        _
      $region30: #{tpu_custom_call.1} parent=5 // pred_check_branch
        %212 = sbr.rel (%p209) target = $region32
      $region31: #{tpu_custom_call.1} parent=5 // pred_region
        %s213 = ssub.s32 %s18, 1
        %s214 = sand.u32 %s31, 1
        %s215 = scalar_lea.sflag [#allocation3], %s214
        %s216 = sand.u32 %s31, 1
        %s217 = smul.addr %s216, 16
        %s218 = scalar_lea.vmem [#allocation2], %s217
        // Predicated region
        $region33: #{tpu_custom_call.1} parent=31 // pred_check
          %p219 = pneg %p44
        $region34: #{tpu_custom_call.1} parent=31 // pred_check_branch
          %221 = sbr.rel (%p219) target = $region36
        $region35: #{tpu_custom_call.1} parent=31 // pred_region
          %223 = dma.done %s215, 256
        $region36: #{tpu_custom_call.1} parent=31 // pred_fallthru
          _
        %s224 = sand.u32 %s23, 1
        %s225 = scalar_lea.sflag [#allocation6], %s224
        %s226 = sand.u32 %s57, 1
        %s227 = smul.addr %s226, 224
        %s228 = scalar_lea.vmem [#allocation5], %s227
        // Predicated region
        $region37: #{tpu_custom_call.1} parent=31 // pred_check
          %p229 = pneg %p70
        $region38: #{tpu_custom_call.1} parent=31 // pred_check_branch
          %231 = sbr.rel (%p229) target = $region40
        $region39: #{tpu_custom_call.1} parent=31 // pred_region
          %233 = dma.done %s225, 3584
        $region40: #{tpu_custom_call.1} parent=31 // pred_fallthru
          _
        %s234 = sand.u32 %s23, 1
        %s235 = scalar_lea.sflag [#allocation6], %s234
        %s236 = sand.u32 %s83, 1
        %s237 = smul.addr %s236, 224
        %s238 = scalar_lea.vmem [#allocation7], %s237
        // Predicated region
        $region41: #{tpu_custom_call.1} parent=31 // pred_check
          %p239 = pneg %p96
        $region42: #{tpu_custom_call.1} parent=31 // pred_check_branch
          %241 = sbr.rel (%p239) target = $region44
        $region43: #{tpu_custom_call.1} parent=31 // pred_region
          %243 = dma.done %s235, 3584
        $region44: #{tpu_custom_call.1} parent=31 // pred_fallthru
          _
        %s244 = sand.u32 %s31, 1
        %s245 = scalar_lea.sflag [#allocation3], %s244
        %s246 = sand.u32 %s31, 1
        %s247 = smul.addr %s246, 16
        %s248 = scalar_lea.vmem [#allocation2], %s247
        %p249 = pneg %p44
        %p250 = pneg %p41
        %s251 = sand.u32 %s23, 1
        %s252 = scalar_lea.sflag [#allocation6], %s251
        %s253 = sand.u32 %s57, 1
        %s254 = smul.addr %s253, 224
        %s255 = scalar_lea.vmem [#allocation5], %s254
        %p256 = pneg %p70
        %p257 = pneg %p67
        %s258 = sand.u32 %s23, 1
        %s259 = scalar_lea.sflag [#allocation6], %s258
        %s260 = sand.u32 %s83, 1
        %s261 = smul.addr %s260, 224
        %s262 = scalar_lea.vmem [#allocation7], %s261
        %p263 = pneg %p96
        %p264 = pneg %p93
        %p265 = pneg %p122
        %p266 = pneg %p119
        %s267 = sand.u32 %s109, 1
        %s268 = scalar_lea.sflag [#allocation4], %s267
        %s269 = sand.u32 %s109, 1
        %s270 = smul.addr %s269, 52
        %s271 = scalar_lea.vmem [#allocation8], %s270
        %v272 = vld [vmem:[%s218] sm:$0xff]
        %v273 = vld [vmem:[%s218 + $0x8] sm:$0xff]
        %v274 = vld [vmem:[%s228 + $0x10] sm:$0xff]
        %v275 = vld [vmem:[%s228 + $0x18] sm:$0xff]
        %v276 = vld [vmem:[%s228 + $0x20] sm:$0xff]
        %v277 = vld [vmem:[%s228 + $0x28] sm:$0xff]
        %v278 = vld [vmem:[%s228 + $0x30] sm:$0xff]
        %v279 = vld [vmem:[%s228 + $0x38] sm:$0xff]
        %v280 = vld [vmem:[%s228 + $0x40] sm:$0xff]
        %v281 = vld [vmem:[%s228 + $0x48] sm:$0xff]
        %v282 = vld [vmem:[%s228 + $0x50] sm:$0xff]
        %v283 = vld [vmem:[%s228 + $0x58] sm:$0xff]
        %v284 = vld [vmem:[%s228 + $0x60] sm:$0xff]
        %v285 = vld [vmem:[%s228 + $0x68] sm:$0xff]
        %v286 = vld [vmem:[%s228 + $0x70] sm:$0xff]
        %v287 = vld [vmem:[%s228 + $0x78] sm:$0xff]
        %v288 = vld [vmem:[%s228 + $0x80] sm:$0xff]
        %v289 = vld [vmem:[%s228 + $0x88] sm:$0xff]
        %v290 = vld [vmem:[%s228 + $0x90] sm:$0xff]
        %v291 = vld [vmem:[%s228 + $0x98] sm:$0xff]
        %v292 = vld [vmem:[%s228 + $0xa0] sm:$0xff]
        %v293 = vld [vmem:[%s228 + $0xa8] sm:$0xff]
        %v294 = vld [vmem:[%s228 + $0xb0] sm:$0xff]
        %v295 = vld [vmem:[%s228 + $0xb8] sm:$0xff]
        %v296 = vld [vmem:[%s228 + $0xc0] sm:$0xff]
        %v297 = vld [vmem:[%s228 + $0xc8] sm:$0xff]
        %v298 = vld [vmem:[%s228 + $0xd0] sm:$0xff]
        %v299 = vld [vmem:[%s228 + $0xd8] sm:$0xff]
        %v300 = vld [vmem:[%s238 + $0x10] sm:$0xff]
        %v301 = vld [vmem:[%s238 + $0x18] sm:$0xff]
        %v302 = vld [vmem:[%s238 + $0x20] sm:$0xff]
        %v303 = vld [vmem:[%s238 + $0x28] sm:$0xff]
        %v304 = vld [vmem:[%s238 + $0x30] sm:$0xff]
        %v305 = vld [vmem:[%s238 + $0x38] sm:$0xff]
        %v306 = vld [vmem:[%s238 + $0x40] sm:$0xff]
        %v307 = vld [vmem:[%s238 + $0x48] sm:$0xff]
        %v308 = vld [vmem:[%s238 + $0x50] sm:$0xff]
        %v309 = vld [vmem:[%s238 + $0x58] sm:$0xff]
        %v310 = vld [vmem:[%s238 + $0x60] sm:$0xff]
        %v311 = vld [vmem:[%s238 + $0x68] sm:$0xff]
        %v312 = vld [vmem:[%s238 + $0x70] sm:$0xff]
        %v313 = vld [vmem:[%s238 + $0x78] sm:$0xff]
        %v314 = vld [vmem:[%s238 + $0x80] sm:$0xff]
        %v315 = vld [vmem:[%s238 + $0x88] sm:$0xff]
        %v316 = vld [vmem:[%s238 + $0x90] sm:$0xff]
        %v317 = vld [vmem:[%s238 + $0x98] sm:$0xff]
        %v318 = vld [vmem:[%s238 + $0xa0] sm:$0xff]
        %v319 = vld [vmem:[%s238 + $0xa8] sm:$0xff]
        %v320 = vld [vmem:[%s238 + $0xb0] sm:$0xff]
        %v321 = vld [vmem:[%s238 + $0xb8] sm:$0xff]
        %v322 = vld [vmem:[%s238 + $0xc0] sm:$0xff]
        %v323 = vld [vmem:[%s238 + $0xc8] sm:$0xff]
        %v324 = vld [vmem:[%s238 + $0xd0] sm:$0xff]
        %v325 = vld [vmem:[%s238 + $0xd8] sm:$0xff]
        %v326 = vlaneseq
        %v327 = vshrl.u32 %v326, 7
        %v328 = vadd.s32 %v327, 8
        %v329 = vlaneseq
        %v330 = vand.u32 %v329, 127
        %v331 = vrot.slane %v272, 7
        %v332 = vrot.slane %v273, 7
        %vm333 = vcmp.lt.s32.totalorder %v327, 1
        %v334 = vsel %vm333, %v331, %v332
        %v335 = vsel %vm333, %v332, %v331
        %vm336 = vcmp.lt.s32.totalorder %v328, 1
        %v337 = vsel %vm333, 4294967295, %v335
        %v338 = vsel %vm336, 4294967295, %v334
        %v339 = vrot.slane %v272, 1
        %v340 = vrot.slane %v273, 1
        %vm341 = vcmp.lt.s32.totalorder %v327, 7
        %v342 = vsel %vm341, %v339, %v340
        %v343 = vsel %vm341, %v340, %v339
        %vm344 = vcmp.ge.s32.totalorder %v327, 15
        %vm345 = vcmp.ge.s32.totalorder %v328, 15
        %v346 = vsel %vm344, 4294967295, %v342
        %v347 = vsel %vm345, 4294967295, %v343
        %348 = vrot.lane.b32.xlu0 %v272, 1
        %v349 = vpop.permute.xlu0 %348
        %350 = vrot.lane.b32.xlu0 %v273, 1
        %v351 = vpop.permute.xlu0 %350
        %vm352 = vcmp.lt.s32.totalorder %v330, 1
        %v353 = vsel %vm352, 4294967295, %v349
        %v354 = vsel %vm352, 4294967295, %v351
        %355 = vrot.lane.b32.xlu0 %v272, 127
        %v356 = vpop.permute.xlu0 %355
        %357 = vrot.lane.b32.xlu0 %v273, 127
        %v358 = vpop.permute.xlu0 %357
        %vm359 = vcmp.ge.s32.totalorder %v330, 127
        %v360 = vsel %vm359, 4294967295, %v356
        %v361 = vsel %vm359, 4294967295, %v358
        %vm362 = vcmp.eq.s32.totalorder %v272, 1
        %vm363 = vcmp.eq.s32.totalorder %v273, 1
        %vm364 = vcmp.eq.s32.totalorder %v337, 1
        %vm365 = vcmp.eq.s32.totalorder %v338, 1
        %vm366 = vcmp.eq.s32.totalorder %v346, 1
        %vm367 = vcmp.eq.s32.totalorder %v347, 1
        %vm368 = vcmp.eq.s32.totalorder %v353, 1
        %vm369 = vcmp.eq.s32.totalorder %v354, 1
        %vm370 = vcmp.eq.s32.totalorder %v360, 1
        %vm371 = vcmp.eq.s32.totalorder %v361, 1
        %vm372 = vmor %vm362, %vm364
        %vm373 = vmor %vm363, %vm365
        %vm374 = vmor %vm372, %vm366
        %vm375 = vmor %vm373, %vm367
        %vm376 = vmor %vm374, %vm368
        %vm377 = vmor %vm375, %vm369
        %vm378 = vmor %vm376, %vm370
        %vm379 = vmor %vm377, %vm371
        %vm380 = vmand %vm362, %vm364
        %vm381 = vmand %vm363, %vm365
        %vm382 = vmand %vm380, %vm366
        %vm383 = vmand %vm381, %vm367
        %vm384 = vmand %vm382, %vm368
        %vm385 = vmand %vm383, %vm369
        %vm386 = vmand %vm384, %vm370
        %vm387 = vmand %vm385, %vm371
        %vm388 = vmxor %vm386, 1
        %vm389 = vmxor %vm387, 1
        %vm390 = vmand %vm378, %vm388
        %vm391 = vmand %vm379, %vm389
        %vm392 = vmxor %vm390, 1
        %vm393 = vmxor %vm391, 1
        %vm394 = vmand %vm392, %vm362
        %vm395 = vmand %vm393, %vm363
        %v396 = vsel %vm390, 1, 0
        %v397 = vsel %vm391, 1, 0
        %v398 = vcvt.s32.f32 %v396
        %v399 = vcvt.s32.f32 %v397
        %v400 = vsel %vm394, 1, 0
        %v401 = vsel %vm395, 1, 0
        %v402 = vcvt.s32.f32 %v400
        %v403 = vcvt.s32.f32 %v401
        %vm404 = vcmp.eq.s32.totalorder %v272, 2
        %vm405 = vcmp.eq.s32.totalorder %v273, 2
        %vm406 = vcmp.eq.s32.totalorder %v337, 2
        %vm407 = vcmp.eq.s32.totalorder %v338, 2
        %vm408 = vcmp.eq.s32.totalorder %v346, 2
        %vm409 = vcmp.eq.s32.totalorder %v347, 2
        %vm410 = vcmp.eq.s32.totalorder %v353, 2
        %vm411 = vcmp.eq.s32.totalorder %v354, 2
        %vm412 = vcmp.eq.s32.totalorder %v360, 2
        %vm413 = vcmp.eq.s32.totalorder %v361, 2
        %vm414 = vmor %vm404, %vm406
        %vm415 = vmor %vm405, %vm407
        %vm416 = vmor %vm414, %vm408
        %vm417 = vmor %vm415, %vm409
        %vm418 = vmor %vm416, %vm410
        %vm419 = vmor %vm417, %vm411
        %vm420 = vmor %vm418, %vm412
        %vm421 = vmor %vm419, %vm413
        %vm422 = vmand %vm404, %vm406
        %vm423 = vmand %vm405, %vm407
        %vm424 = vmand %vm422, %vm408
        %vm425 = vmand %vm423, %vm409
        %vm426 = vmand %vm424, %vm410
        %vm427 = vmand %vm425, %vm411
        %vm428 = vmand %vm426, %vm412
        %vm429 = vmand %vm427, %vm413
        %vm430 = vmxor %vm428, 1
        %vm431 = vmxor %vm429, 1
        %vm432 = vmand %vm420, %vm430
        %vm433 = vmand %vm421, %vm431
        %vm434 = vmxor %vm432, 1
        %vm435 = vmxor %vm433, 1
        %vm436 = vmand %vm434, %vm404
        %vm437 = vmand %vm435, %vm405
        %v438 = vsel %vm432, 1, 0
        %v439 = vsel %vm433, 1, 0
        %v440 = vcvt.s32.f32 %v438
        %v441 = vcvt.s32.f32 %v439
        %v442 = vsel %vm436, 1, 0
        %v443 = vsel %vm437, 1, 0
        %v444 = vcvt.s32.f32 %v442
        %v445 = vcvt.s32.f32 %v443
        %vm446 = vcmp.eq.s32.totalorder %v272, 3
        %vm447 = vcmp.eq.s32.totalorder %v273, 3
        %vm448 = vcmp.eq.s32.totalorder %v337, 3
        %vm449 = vcmp.eq.s32.totalorder %v338, 3
        %vm450 = vcmp.eq.s32.totalorder %v346, 3
        %vm451 = vcmp.eq.s32.totalorder %v347, 3
        %vm452 = vcmp.eq.s32.totalorder %v353, 3
        %vm453 = vcmp.eq.s32.totalorder %v354, 3
        %vm454 = vcmp.eq.s32.totalorder %v360, 3
        %vm455 = vcmp.eq.s32.totalorder %v361, 3
        %vm456 = vmor %vm446, %vm448
        %vm457 = vmor %vm447, %vm449
        %vm458 = vmor %vm456, %vm450
        %vm459 = vmor %vm457, %vm451
        %vm460 = vmor %vm458, %vm452
        %vm461 = vmor %vm459, %vm453
        %vm462 = vmor %vm460, %vm454
        %vm463 = vmor %vm461, %vm455
        %vm464 = vmand %vm446, %vm448
        %vm465 = vmand %vm447, %vm449
        %vm466 = vmand %vm464, %vm450
        %vm467 = vmand %vm465, %vm451
        %vm468 = vmand %vm466, %vm452
        %vm469 = vmand %vm467, %vm453
        %vm470 = vmand %vm468, %vm454
        %vm471 = vmand %vm469, %vm455
        %vm472 = vmxor %vm470, 1
        %vm473 = vmxor %vm471, 1
        %vm474 = vmand %vm462, %vm472
        %vm475 = vmand %vm463, %vm473
        %vm476 = vmxor %vm474, 1
        %vm477 = vmxor %vm475, 1
        %vm478 = vmand %vm476, %vm446
        %vm479 = vmand %vm477, %vm447
        %v480 = vsel %vm474, 1, 0
        %v481 = vsel %vm475, 1, 0
        %v482 = vcvt.s32.f32 %v480
        %v483 = vcvt.s32.f32 %v481
        %v484 = vsel %vm478, 1, 0
        %v485 = vsel %vm479, 1, 0
        %v486 = vcvt.s32.f32 %v484
        %v487 = vcvt.s32.f32 %v485
        %vm488 = vcmp.eq.s32.totalorder %v272, 4
        %vm489 = vcmp.eq.s32.totalorder %v273, 4
        %vm490 = vcmp.eq.s32.totalorder %v337, 4
        %vm491 = vcmp.eq.s32.totalorder %v338, 4
        %vm492 = vcmp.eq.s32.totalorder %v346, 4
        %vm493 = vcmp.eq.s32.totalorder %v347, 4
        %vm494 = vcmp.eq.s32.totalorder %v353, 4
        %vm495 = vcmp.eq.s32.totalorder %v354, 4
        %vm496 = vcmp.eq.s32.totalorder %v360, 4
        %vm497 = vcmp.eq.s32.totalorder %v361, 4
        %vm498 = vmor %vm488, %vm490
        %vm499 = vmor %vm489, %vm491
        %vm500 = vmor %vm498, %vm492
        %vm501 = vmor %vm499, %vm493
        %vm502 = vmor %vm500, %vm494
        %vm503 = vmor %vm501, %vm495
        %vm504 = vmor %vm502, %vm496
        %vm505 = vmor %vm503, %vm497
        %vm506 = vmand %vm488, %vm490
        %vm507 = vmand %vm489, %vm491
        %vm508 = vmand %vm506, %vm492
        %vm509 = vmand %vm507, %vm493
        %vm510 = vmand %vm508, %vm494
        %vm511 = vmand %vm509, %vm495
        %vm512 = vmand %vm510, %vm496
        %vm513 = vmand %vm511, %vm497
        %vm514 = vmxor %vm512, 1
        %vm515 = vmxor %vm513, 1
        %vm516 = vmand %vm504, %vm514
        %vm517 = vmand %vm505, %vm515
        %vm518 = vmxor %vm516, 1
        %vm519 = vmxor %vm517, 1
        %vm520 = vmand %vm518, %vm488
        %vm521 = vmand %vm519, %vm489
        %v522 = vsel %vm516, 1, 0
        %v523 = vsel %vm517, 1, 0
        %v524 = vcvt.s32.f32 %v522
        %v525 = vcvt.s32.f32 %v523
        %v526 = vsel %vm520, 1, 0
        %v527 = vsel %vm521, 1, 0
        %v528 = vcvt.s32.f32 %v526
        %v529 = vcvt.s32.f32 %v527
        %vm530 = vcmp.eq.s32.totalorder %v272, 5
        %vm531 = vcmp.eq.s32.totalorder %v273, 5
        %vm532 = vcmp.eq.s32.totalorder %v337, 5
        %vm533 = vcmp.eq.s32.totalorder %v338, 5
        %vm534 = vcmp.eq.s32.totalorder %v346, 5
        %vm535 = vcmp.eq.s32.totalorder %v347, 5
        %vm536 = vcmp.eq.s32.totalorder %v353, 5
        %vm537 = vcmp.eq.s32.totalorder %v354, 5
        %vm538 = vcmp.eq.s32.totalorder %v360, 5
        %vm539 = vcmp.eq.s32.totalorder %v361, 5
        %vm540 = vmor %vm530, %vm532
        %vm541 = vmor %vm531, %vm533
        %vm542 = vmor %vm540, %vm534
        %vm543 = vmor %vm541, %vm535
        %vm544 = vmor %vm542, %vm536
        %vm545 = vmor %vm543, %vm537
        %vm546 = vmor %vm544, %vm538
        %vm547 = vmor %vm545, %vm539
        %vm548 = vmand %vm530, %vm532
        %vm549 = vmand %vm531, %vm533
        %vm550 = vmand %vm548, %vm534
        %vm551 = vmand %vm549, %vm535
        %vm552 = vmand %vm550, %vm536
        %vm553 = vmand %vm551, %vm537
        %vm554 = vmand %vm552, %vm538
        %vm555 = vmand %vm553, %vm539
        %vm556 = vmxor %vm554, 1
        %vm557 = vmxor %vm555, 1
        %vm558 = vmand %vm546, %vm556
        %vm559 = vmand %vm547, %vm557
        %vm560 = vmxor %vm558, 1
        %vm561 = vmxor %vm559, 1
        %vm562 = vmand %vm560, %vm530
        %vm563 = vmand %vm561, %vm531
        %v564 = vsel %vm558, 1, 0
        %v565 = vsel %vm559, 1, 0
        %v566 = vcvt.s32.f32 %v564
        %v567 = vcvt.s32.f32 %v565
        %v568 = vsel %vm562, 1, 0
        %v569 = vsel %vm563, 1, 0
        %v570 = vcvt.s32.f32 %v568
        %v571 = vcvt.s32.f32 %v569
        %vm572 = vcmp.eq.s32.totalorder %v272, 6
        %vm573 = vcmp.eq.s32.totalorder %v273, 6
        %vm574 = vcmp.eq.s32.totalorder %v337, 6
        %vm575 = vcmp.eq.s32.totalorder %v338, 6
        %vm576 = vcmp.eq.s32.totalorder %v346, 6
        %vm577 = vcmp.eq.s32.totalorder %v347, 6
        %vm578 = vcmp.eq.s32.totalorder %v353, 6
        %vm579 = vcmp.eq.s32.totalorder %v354, 6
        %vm580 = vcmp.eq.s32.totalorder %v360, 6
        %vm581 = vcmp.eq.s32.totalorder %v361, 6
        %vm582 = vmor %vm572, %vm574
        %vm583 = vmor %vm573, %vm575
        %vm584 = vmor %vm582, %vm576
        %vm585 = vmor %vm583, %vm577
        %vm586 = vmor %vm584, %vm578
        %vm587 = vmor %vm585, %vm579
        %vm588 = vmor %vm586, %vm580
        %vm589 = vmor %vm587, %vm581
        %vm590 = vmand %vm572, %vm574
        %vm591 = vmand %vm573, %vm575
        %vm592 = vmand %vm590, %vm576
        %vm593 = vmand %vm591, %vm577
        %vm594 = vmand %vm592, %vm578
        %vm595 = vmand %vm593, %vm579
        %vm596 = vmand %vm594, %vm580
        %vm597 = vmand %vm595, %vm581
        %vm598 = vmxor %vm596, 1
        %vm599 = vmxor %vm597, 1
        %vm600 = vmand %vm588, %vm598
        %vm601 = vmand %vm589, %vm599
        %vm602 = vmxor %vm600, 1
        %vm603 = vmxor %vm601, 1
        %vm604 = vmand %vm602, %vm572
        %vm605 = vmand %vm603, %vm573
        %v606 = vsel %vm600, 1, 0
        %v607 = vsel %vm601, 1, 0
        %v608 = vcvt.s32.f32 %v606
        %v609 = vcvt.s32.f32 %v607
        %v610 = vsel %vm604, 1, 0
        %v611 = vsel %vm605, 1, 0
        %v612 = vcvt.s32.f32 %v610
        %v613 = vcvt.s32.f32 %v611
        %vm614 = vcmp.eq.s32.totalorder %v272, 7
        %vm615 = vcmp.eq.s32.totalorder %v273, 7
        %vm616 = vcmp.eq.s32.totalorder %v337, 7
        %vm617 = vcmp.eq.s32.totalorder %v338, 7
        %vm618 = vcmp.eq.s32.totalorder %v346, 7
        %vm619 = vcmp.eq.s32.totalorder %v347, 7
        %vm620 = vcmp.eq.s32.totalorder %v353, 7
        %vm621 = vcmp.eq.s32.totalorder %v354, 7
        %vm622 = vcmp.eq.s32.totalorder %v360, 7
        %vm623 = vcmp.eq.s32.totalorder %v361, 7
        %vm624 = vmor %vm614, %vm616
        %vm625 = vmor %vm615, %vm617
        %vm626 = vmor %vm624, %vm618
        %vm627 = vmor %vm625, %vm619
        %vm628 = vmor %vm626, %vm620
        %vm629 = vmor %vm627, %vm621
        %vm630 = vmor %vm628, %vm622
        %vm631 = vmor %vm629, %vm623
        %vm632 = vmand %vm614, %vm616
        %vm633 = vmand %vm615, %vm617
        %vm634 = vmand %vm632, %vm618
        %vm635 = vmand %vm633, %vm619
        %vm636 = vmand %vm634, %vm620
        %vm637 = vmand %vm635, %vm621
        %vm638 = vmand %vm636, %vm622
        %vm639 = vmand %vm637, %vm623
        %vm640 = vmxor %vm638, 1
        %vm641 = vmxor %vm639, 1
        %vm642 = vmand %vm630, %vm640
        %vm643 = vmand %vm631, %vm641
        %vm644 = vmxor %vm642, 1
        %vm645 = vmxor %vm643, 1
        %vm646 = vmand %vm644, %vm614
        %vm647 = vmand %vm645, %vm615
        %v648 = vsel %vm642, 1, 0
        %v649 = vsel %vm643, 1, 0
        %v650 = vcvt.s32.f32 %v648
        %v651 = vcvt.s32.f32 %v649
        %v652 = vsel %vm646, 1, 0
        %v653 = vsel %vm647, 1, 0
        %v654 = vcvt.s32.f32 %v652
        %v655 = vcvt.s32.f32 %v653
        %vm656 = vcmp.eq.s32.totalorder %v272, 8
        %vm657 = vcmp.eq.s32.totalorder %v273, 8
        %vm658 = vcmp.eq.s32.totalorder %v337, 8
        %vm659 = vcmp.eq.s32.totalorder %v338, 8
        %vm660 = vcmp.eq.s32.totalorder %v346, 8
        %vm661 = vcmp.eq.s32.totalorder %v347, 8
        %vm662 = vcmp.eq.s32.totalorder %v353, 8
        %vm663 = vcmp.eq.s32.totalorder %v354, 8
        %vm664 = vcmp.eq.s32.totalorder %v360, 8
        %vm665 = vcmp.eq.s32.totalorder %v361, 8
        %vm666 = vmor %vm656, %vm658
        %vm667 = vmor %vm657, %vm659
        %vm668 = vmor %vm666, %vm660
        %vm669 = vmor %vm667, %vm661
        %vm670 = vmor %vm668, %vm662
        %vm671 = vmor %vm669, %vm663
        %vm672 = vmor %vm670, %vm664
        %vm673 = vmor %vm671, %vm665
        %vm674 = vmand %vm656, %vm658
        %vm675 = vmand %vm657, %vm659
        %vm676 = vmand %vm674, %vm660
        %vm677 = vmand %vm675, %vm661
        %vm678 = vmand %vm676, %vm662
        %vm679 = vmand %vm677, %vm663
        %vm680 = vmand %vm678, %vm664
        %vm681 = vmand %vm679, %vm665
        %vm682 = vmxor %vm680, 1
        %vm683 = vmxor %vm681, 1
        %vm684 = vmand %vm672, %vm682
        %vm685 = vmand %vm673, %vm683
        %vm686 = vmxor %vm684, 1
        %vm687 = vmxor %vm685, 1
        %vm688 = vmand %vm686, %vm656
        %vm689 = vmand %vm687, %vm657
        %v690 = vsel %vm684, 1, 0
        %v691 = vsel %vm685, 1, 0
        %v692 = vcvt.s32.f32 %v690
        %v693 = vcvt.s32.f32 %v691
        %v694 = vsel %vm688, 1, 0
        %v695 = vsel %vm689, 1, 0
        %v696 = vcvt.s32.f32 %v694
        %v697 = vcvt.s32.f32 %v695
        %vm698 = vcmp.eq.s32.totalorder %v272, 9
        %vm699 = vcmp.eq.s32.totalorder %v273, 9
        %vm700 = vcmp.eq.s32.totalorder %v337, 9
        %vm701 = vcmp.eq.s32.totalorder %v338, 9
        %vm702 = vcmp.eq.s32.totalorder %v346, 9
        %vm703 = vcmp.eq.s32.totalorder %v347, 9
        %vm704 = vcmp.eq.s32.totalorder %v353, 9
        %vm705 = vcmp.eq.s32.totalorder %v354, 9
        %vm706 = vcmp.eq.s32.totalorder %v360, 9
        %vm707 = vcmp.eq.s32.totalorder %v361, 9
        %vm708 = vmor %vm698, %vm700
        %vm709 = vmor %vm699, %vm701
        %vm710 = vmor %vm708, %vm702
        %vm711 = vmor %vm709, %vm703
        %vm712 = vmor %vm710, %vm704
        %vm713 = vmor %vm711, %vm705
        %vm714 = vmor %vm712, %vm706
        %vm715 = vmor %vm713, %vm707
        %vm716 = vmand %vm698, %vm700
        %vm717 = vmand %vm699, %vm701
        %vm718 = vmand %vm716, %vm702
        %vm719 = vmand %vm717, %vm703
        %vm720 = vmand %vm718, %vm704
        %vm721 = vmand %vm719, %vm705
        %vm722 = vmand %vm720, %vm706
        %vm723 = vmand %vm721, %vm707
        %vm724 = vmxor %vm722, 1
        %vm725 = vmxor %vm723, 1
        %vm726 = vmand %vm714, %vm724
        %vm727 = vmand %vm715, %vm725
        %vm728 = vmxor %vm726, 1
        %vm729 = vmxor %vm727, 1
        %vm730 = vmand %vm728, %vm698
        %vm731 = vmand %vm729, %vm699
        %v732 = vsel %vm726, 1, 0
        %v733 = vsel %vm727, 1, 0
        %v734 = vcvt.s32.f32 %v732
        %v735 = vcvt.s32.f32 %v733
        %v736 = vsel %vm730, 1, 0
        %v737 = vsel %vm731, 1, 0
        %v738 = vcvt.s32.f32 %v736
        %v739 = vcvt.s32.f32 %v737
        %vm740 = vcmp.eq.s32.totalorder %v272, 10
        %vm741 = vcmp.eq.s32.totalorder %v273, 10
        %vm742 = vcmp.eq.s32.totalorder %v337, 10
        %vm743 = vcmp.eq.s32.totalorder %v338, 10
        %vm744 = vcmp.eq.s32.totalorder %v346, 10
        %vm745 = vcmp.eq.s32.totalorder %v347, 10
        %vm746 = vcmp.eq.s32.totalorder %v353, 10
        %vm747 = vcmp.eq.s32.totalorder %v354, 10
        %vm748 = vcmp.eq.s32.totalorder %v360, 10
        %vm749 = vcmp.eq.s32.totalorder %v361, 10
        %vm750 = vmor %vm740, %vm742
        %vm751 = vmor %vm741, %vm743
        %vm752 = vmor %vm750, %vm744
        %vm753 = vmor %vm751, %vm745
        %vm754 = vmor %vm752, %vm746
        %vm755 = vmor %vm753, %vm747
        %vm756 = vmor %vm754, %vm748
        %vm757 = vmor %vm755, %vm749
        %vm758 = vmand %vm740, %vm742
        %vm759 = vmand %vm741, %vm743
        %vm760 = vmand %vm758, %vm744
        %vm761 = vmand %vm759, %vm745
        %vm762 = vmand %vm760, %vm746
        %vm763 = vmand %vm761, %vm747
        %vm764 = vmand %vm762, %vm748
        %vm765 = vmand %vm763, %vm749
        %vm766 = vmxor %vm764, 1
        %vm767 = vmxor %vm765, 1
        %vm768 = vmand %vm756, %vm766
        %vm769 = vmand %vm757, %vm767
        %vm770 = vmxor %vm768, 1
        %vm771 = vmxor %vm769, 1
        %vm772 = vmand %vm770, %vm740
        %vm773 = vmand %vm771, %vm741
        %v774 = vsel %vm768, 1, 0
        %v775 = vsel %vm769, 1, 0
        %v776 = vcvt.s32.f32 %v774
        %v777 = vcvt.s32.f32 %v775
        %v778 = vsel %vm772, 1, 0
        %v779 = vsel %vm773, 1, 0
        %v780 = vcvt.s32.f32 %v778
        %v781 = vcvt.s32.f32 %v779
        %vm782 = vcmp.eq.s32.totalorder %v272, 11
        %vm783 = vcmp.eq.s32.totalorder %v273, 11
        %vm784 = vcmp.eq.s32.totalorder %v337, 11
        %vm785 = vcmp.eq.s32.totalorder %v338, 11
        %vm786 = vcmp.eq.s32.totalorder %v346, 11
        %vm787 = vcmp.eq.s32.totalorder %v347, 11
        %vm788 = vcmp.eq.s32.totalorder %v353, 11
        %vm789 = vcmp.eq.s32.totalorder %v354, 11
        %vm790 = vcmp.eq.s32.totalorder %v360, 11
        %vm791 = vcmp.eq.s32.totalorder %v361, 11
        %vm792 = vmor %vm782, %vm784
        %vm793 = vmor %vm783, %vm785
        %vm794 = vmor %vm792, %vm786
        %vm795 = vmor %vm793, %vm787
        %vm796 = vmor %vm794, %vm788
        %vm797 = vmor %vm795, %vm789
        %vm798 = vmor %vm796, %vm790
        %vm799 = vmor %vm797, %vm791
        %vm800 = vmand %vm782, %vm784
        %vm801 = vmand %vm783, %vm785
        %vm802 = vmand %vm800, %vm786
        %vm803 = vmand %vm801, %vm787
        %vm804 = vmand %vm802, %vm788
        %vm805 = vmand %vm803, %vm789
        %vm806 = vmand %vm804, %vm790
        %vm807 = vmand %vm805, %vm791
        %vm808 = vmxor %vm806, 1
        %vm809 = vmxor %vm807, 1
        %vm810 = vmand %vm798, %vm808
        %vm811 = vmand %vm799, %vm809
        %vm812 = vmxor %vm810, 1
        %vm813 = vmxor %vm811, 1
        %vm814 = vmand %vm812, %vm782
        %vm815 = vmand %vm813, %vm783
        %v816 = vsel %vm810, 1, 0
        %v817 = vsel %vm811, 1, 0
        %v818 = vcvt.s32.f32 %v816
        %v819 = vcvt.s32.f32 %v817
        %v820 = vsel %vm814, 1, 0
        %v821 = vsel %vm815, 1, 0
        %v822 = vcvt.s32.f32 %v820
        %v823 = vcvt.s32.f32 %v821
        %vm824 = vcmp.eq.s32.totalorder %v272, 12
        %vm825 = vcmp.eq.s32.totalorder %v273, 12
        %vm826 = vcmp.eq.s32.totalorder %v337, 12
        %vm827 = vcmp.eq.s32.totalorder %v338, 12
        %vm828 = vcmp.eq.s32.totalorder %v346, 12
        %vm829 = vcmp.eq.s32.totalorder %v347, 12
        %vm830 = vcmp.eq.s32.totalorder %v353, 12
        %vm831 = vcmp.eq.s32.totalorder %v354, 12
        %vm832 = vcmp.eq.s32.totalorder %v360, 12
        %vm833 = vcmp.eq.s32.totalorder %v361, 12
        %vm834 = vmor %vm824, %vm826
        %vm835 = vmor %vm825, %vm827
        %vm836 = vmor %vm834, %vm828
        %vm837 = vmor %vm835, %vm829
        %vm838 = vmor %vm836, %vm830
        %vm839 = vmor %vm837, %vm831
        %vm840 = vmor %vm838, %vm832
        %vm841 = vmor %vm839, %vm833
        %vm842 = vmand %vm824, %vm826
        %vm843 = vmand %vm825, %vm827
        %vm844 = vmand %vm842, %vm828
        %vm845 = vmand %vm843, %vm829
        %vm846 = vmand %vm844, %vm830
        %vm847 = vmand %vm845, %vm831
        %vm848 = vmand %vm846, %vm832
        %vm849 = vmand %vm847, %vm833
        %vm850 = vmxor %vm848, 1
        %vm851 = vmxor %vm849, 1
        %vm852 = vmand %vm840, %vm850
        %vm853 = vmand %vm841, %vm851
        %vm854 = vmxor %vm852, 1
        %vm855 = vmxor %vm853, 1
        %vm856 = vmand %vm854, %vm824
        %vm857 = vmand %vm855, %vm825
        %v858 = vsel %vm852, 1, 0
        %v859 = vsel %vm853, 1, 0
        %v860 = vcvt.s32.f32 %v858
        %v861 = vcvt.s32.f32 %v859
        %v862 = vsel %vm856, 1, 0
        %v863 = vsel %vm857, 1, 0
        %v864 = vcvt.s32.f32 %v862
        %v865 = vcvt.s32.f32 %v863
        %vm866 = vcmp.eq.s32.totalorder %v272, 13
        %vm867 = vcmp.eq.s32.totalorder %v273, 13
        %vm868 = vcmp.eq.s32.totalorder %v337, 13
        %vm869 = vcmp.eq.s32.totalorder %v338, 13
        %vm870 = vcmp.eq.s32.totalorder %v346, 13
        %vm871 = vcmp.eq.s32.totalorder %v347, 13
        %vm872 = vcmp.eq.s32.totalorder %v353, 13
        %vm873 = vcmp.eq.s32.totalorder %v354, 13
        %vm874 = vcmp.eq.s32.totalorder %v360, 13
        %vm875 = vcmp.eq.s32.totalorder %v361, 13
        %vm876 = vmor %vm866, %vm868
        %vm877 = vmor %vm867, %vm869
        %vm878 = vmor %vm876, %vm870
        %vm879 = vmor %vm877, %vm871
        %vm880 = vmor %vm878, %vm872
        %vm881 = vmor %vm879, %vm873
        %vm882 = vmor %vm880, %vm874
        %vm883 = vmor %vm881, %vm875
        %vm884 = vmand %vm866, %vm868
        %vm885 = vmand %vm867, %vm869
        %vm886 = vmand %vm884, %vm870
        %vm887 = vmand %vm885, %vm871
        %vm888 = vmand %vm886, %vm872
        %vm889 = vmand %vm887, %vm873
        %vm890 = vmand %vm888, %vm874
        %vm891 = vmand %vm889, %vm875
        %vm892 = vmxor %vm890, 1
        %vm893 = vmxor %vm891, 1
        %vm894 = vmand %vm882, %vm892
        %vm895 = vmand %vm883, %vm893
        %vm896 = vmxor %vm894, 1
        %vm897 = vmxor %vm895, 1
        %vm898 = vmand %vm896, %vm866
        %vm899 = vmand %vm897, %vm867
        %v900 = vsel %vm894, 1, 0
        %v901 = vsel %vm895, 1, 0
        %v902 = vcvt.s32.f32 %v900
        %v903 = vcvt.s32.f32 %v901
        %v904 = vsel %vm898, 1, 0
        %v905 = vsel %vm899, 1, 0
        %v906 = vcvt.s32.f32 %v904
        %v907 = vcvt.s32.f32 %v905
        %v908 = vmul.f32 %v274, %v398
        %v909 = vmul.f32 %v275, %v399
        %v910 = vmul.f32 %v276, %v440
        %v911 = vmul.f32 %v277, %v441
        %v912 = vmul.f32 %v278, %v482
        %v913 = vmul.f32 %v279, %v483
        %v914 = vmul.f32 %v280, %v524
        %v915 = vmul.f32 %v281, %v525
        %v916 = vmul.f32 %v282, %v566
        %v917 = vmul.f32 %v283, %v567
        %v918 = vmul.f32 %v284, %v608
        %v919 = vmul.f32 %v285, %v609
        %v920 = vmul.f32 %v286, %v650
        %v921 = vmul.f32 %v287, %v651
        %v922 = vmul.f32 %v288, %v692
        %v923 = vmul.f32 %v289, %v693
        %v924 = vmul.f32 %v290, %v734
        %v925 = vmul.f32 %v291, %v735
        %v926 = vmul.f32 %v292, %v776
        %v927 = vmul.f32 %v293, %v777
        %v928 = vmul.f32 %v294, %v818
        %v929 = vmul.f32 %v295, %v819
        %v930 = vmul.f32 %v296, %v860
        %v931 = vmul.f32 %v297, %v861
        %v932 = vmul.f32 %v298, %v902
        %v933 = vmul.f32 %v299, %v903
        %v934 = vmul.f32 %v274, %v402
        %v935 = vmul.f32 %v275, %v403
        %v936 = vmul.f32 %v276, %v444
        %v937 = vmul.f32 %v277, %v445
        %v938 = vmul.f32 %v278, %v486
        %v939 = vmul.f32 %v279, %v487
        %v940 = vmul.f32 %v280, %v528
        %v941 = vmul.f32 %v281, %v529
        %v942 = vmul.f32 %v282, %v570
        %v943 = vmul.f32 %v283, %v571
        %v944 = vmul.f32 %v284, %v612
        %v945 = vmul.f32 %v285, %v613
        %v946 = vmul.f32 %v286, %v654
        %v947 = vmul.f32 %v287, %v655
        %v948 = vmul.f32 %v288, %v696
        %v949 = vmul.f32 %v289, %v697
        %v950 = vmul.f32 %v290, %v738
        %v951 = vmul.f32 %v291, %v739
        %v952 = vmul.f32 %v292, %v780
        %v953 = vmul.f32 %v293, %v781
        %v954 = vmul.f32 %v294, %v822
        %v955 = vmul.f32 %v295, %v823
        %v956 = vmul.f32 %v296, %v864
        %v957 = vmul.f32 %v297, %v865
        %v958 = vmul.f32 %v298, %v906
        %v959 = vmul.f32 %v299, %v907
        %v960 = vmul.f32 %v300, %v398
        %v961 = vmul.f32 %v301, %v399
        %v962 = vmul.f32 %v302, %v440
        %v963 = vmul.f32 %v303, %v441
        %v964 = vmul.f32 %v304, %v482
        %v965 = vmul.f32 %v305, %v483
        %v966 = vmul.f32 %v306, %v524
        %v967 = vmul.f32 %v307, %v525
        %v968 = vmul.f32 %v308, %v566
        %v969 = vmul.f32 %v309, %v567
        %v970 = vmul.f32 %v310, %v608
        %v971 = vmul.f32 %v311, %v609
        %v972 = vmul.f32 %v312, %v650
        %v973 = vmul.f32 %v313, %v651
        %v974 = vmul.f32 %v314, %v692
        %v975 = vmul.f32 %v315, %v693
        %v976 = vmul.f32 %v316, %v734
        %v977 = vmul.f32 %v317, %v735
        %v978 = vmul.f32 %v318, %v776
        %v979 = vmul.f32 %v319, %v777
        %v980 = vmul.f32 %v320, %v818
        %v981 = vmul.f32 %v321, %v819
        %v982 = vmul.f32 %v322, %v860
        %v983 = vmul.f32 %v323, %v861
        %v984 = vmul.f32 %v324, %v902
        %v985 = vmul.f32 %v325, %v903
        %v986 = vmul.f32 %v300, %v402
        %v987 = vmul.f32 %v301, %v403
        %v988 = vmul.f32 %v302, %v444
        %v989 = vmul.f32 %v303, %v445
        %v990 = vmul.f32 %v304, %v486
        %v991 = vmul.f32 %v305, %v487
        %v992 = vmul.f32 %v306, %v528
        %v993 = vmul.f32 %v307, %v529
        %v994 = vmul.f32 %v308, %v570
        %v995 = vmul.f32 %v309, %v571
        %v996 = vmul.f32 %v310, %v612
        %v997 = vmul.f32 %v311, %v613
        %v998 = vmul.f32 %v312, %v654
        %v999 = vmul.f32 %v313, %v655
        %v1000 = vmul.f32 %v314, %v696
        %v1001 = vmul.f32 %v315, %v697
        %v1002 = vmul.f32 %v316, %v738
        %v1003 = vmul.f32 %v317, %v739
        %v1004 = vmul.f32 %v318, %v780
        %v1005 = vmul.f32 %v319, %v781
        %v1006 = vmul.f32 %v320, %v822
        %v1007 = vmul.f32 %v321, %v823
        %v1008 = vmul.f32 %v322, %v864
        %v1009 = vmul.f32 %v323, %v865
        %v1010 = vmul.f32 %v324, %v906
        %v1011 = vmul.f32 %v325, %v907
        %1012 = vmax.xlane.f32.xlu0 %v908
        %v1013 = vpop.xlane.xlu0 %1012
        %1014 = vmax.xlane.f32.xlu0 %v909
        %v1015 = vpop.xlane.xlu0 %1014
        %1016 = vmax.xlane.f32.xlu0 %v910
        %v1017 = vpop.xlane.xlu0 %1016
        %1018 = vmax.xlane.f32.xlu0 %v911
        %v1019 = vpop.xlane.xlu0 %1018
        %1020 = vmax.xlane.f32.xlu0 %v912
        %v1021 = vpop.xlane.xlu0 %1020
        %1022 = vmax.xlane.f32.xlu0 %v913
        %v1023 = vpop.xlane.xlu0 %1022
        %1024 = vmax.xlane.f32.xlu0 %v914
        %v1025 = vpop.xlane.xlu0 %1024
        %1026 = vmax.xlane.f32.xlu0 %v915
        %v1027 = vpop.xlane.xlu0 %1026
        %1028 = vmax.xlane.f32.xlu0 %v916
        %v1029 = vpop.xlane.xlu0 %1028
        %1030 = vmax.xlane.f32.xlu0 %v917
        %v1031 = vpop.xlane.xlu0 %1030
        %1032 = vmax.xlane.f32.xlu0 %v918
        %v1033 = vpop.xlane.xlu0 %1032
        %1034 = vmax.xlane.f32.xlu0 %v919
        %v1035 = vpop.xlane.xlu0 %1034
        %1036 = vmax.xlane.f32.xlu0 %v920
        %v1037 = vpop.xlane.xlu0 %1036
        %1038 = vmax.xlane.f32.xlu0 %v921
        %v1039 = vpop.xlane.xlu0 %1038
        %1040 = vmax.xlane.f32.xlu0 %v922
        %v1041 = vpop.xlane.xlu0 %1040
        %1042 = vmax.xlane.f32.xlu0 %v923
        %v1043 = vpop.xlane.xlu0 %1042
        %1044 = vmax.xlane.f32.xlu0 %v924
        %v1045 = vpop.xlane.xlu0 %1044
        %1046 = vmax.xlane.f32.xlu0 %v925
        %v1047 = vpop.xlane.xlu0 %1046
        %1048 = vmax.xlane.f32.xlu0 %v926
        %v1049 = vpop.xlane.xlu0 %1048
        %1050 = vmax.xlane.f32.xlu0 %v927
        %v1051 = vpop.xlane.xlu0 %1050
        %1052 = vmax.xlane.f32.xlu0 %v928
        %v1053 = vpop.xlane.xlu0 %1052
        %1054 = vmax.xlane.f32.xlu0 %v929
        %v1055 = vpop.xlane.xlu0 %1054
        %1056 = vmax.xlane.f32.xlu0 %v930
        %v1057 = vpop.xlane.xlu0 %1056
        %1058 = vmax.xlane.f32.xlu0 %v931
        %v1059 = vpop.xlane.xlu0 %1058
        %1060 = vmax.xlane.f32.xlu0 %v932
        %v1061 = vpop.xlane.xlu0 %1060
        %1062 = vmax.xlane.f32.xlu0 %v933
        %v1063 = vpop.xlane.xlu0 %1062
        %1064 = vmax.xlane.f32.xlu0 %v934
        %v1065 = vpop.xlane.xlu0 %1064
        %1066 = vmax.xlane.f32.xlu0 %v935
        %v1067 = vpop.xlane.xlu0 %1066
        %1068 = vmax.xlane.f32.xlu0 %v936
        %v1069 = vpop.xlane.xlu0 %1068
        %1070 = vmax.xlane.f32.xlu0 %v937
        %v1071 = vpop.xlane.xlu0 %1070
        %1072 = vmax.xlane.f32.xlu0 %v938
        %v1073 = vpop.xlane.xlu0 %1072
        %1074 = vmax.xlane.f32.xlu0 %v939
        %v1075 = vpop.xlane.xlu0 %1074
        %1076 = vmax.xlane.f32.xlu0 %v940
        %v1077 = vpop.xlane.xlu0 %1076
        %1078 = vmax.xlane.f32.xlu0 %v941
        %v1079 = vpop.xlane.xlu0 %1078
        %1080 = vmax.xlane.f32.xlu0 %v942
        %v1081 = vpop.xlane.xlu0 %1080
        %1082 = vmax.xlane.f32.xlu0 %v943
        %v1083 = vpop.xlane.xlu0 %1082
        %1084 = vmax.xlane.f32.xlu0 %v944
        %v1085 = vpop.xlane.xlu0 %1084
        %1086 = vmax.xlane.f32.xlu0 %v945
        %v1087 = vpop.xlane.xlu0 %1086
        %1088 = vmax.xlane.f32.xlu0 %v946
        %v1089 = vpop.xlane.xlu0 %1088
        %1090 = vmax.xlane.f32.xlu0 %v947
        %v1091 = vpop.xlane.xlu0 %1090
        %1092 = vmax.xlane.f32.xlu0 %v948
        %v1093 = vpop.xlane.xlu0 %1092
        %1094 = vmax.xlane.f32.xlu0 %v949
        %v1095 = vpop.xlane.xlu0 %1094
        %1096 = vmax.xlane.f32.xlu0 %v950
        %v1097 = vpop.xlane.xlu0 %1096
        %1098 = vmax.xlane.f32.xlu0 %v951
        %v1099 = vpop.xlane.xlu0 %1098
        %1100 = vmax.xlane.f32.xlu0 %v952
        %v1101 = vpop.xlane.xlu0 %1100
        %1102 = vmax.xlane.f32.xlu0 %v953
        %v1103 = vpop.xlane.xlu0 %1102
        %1104 = vmax.xlane.f32.xlu0 %v954
        %v1105 = vpop.xlane.xlu0 %1104
        %1106 = vmax.xlane.f32.xlu0 %v955
        %v1107 = vpop.xlane.xlu0 %1106
        %1108 = vmax.xlane.f32.xlu0 %v956
        %v1109 = vpop.xlane.xlu0 %1108
        %1110 = vmax.xlane.f32.xlu0 %v957
        %v1111 = vpop.xlane.xlu0 %1110
        %1112 = vmax.xlane.f32.xlu0 %v958
        %v1113 = vpop.xlane.xlu0 %1112
        %1114 = vmax.xlane.f32.xlu0 %v959
        %v1115 = vpop.xlane.xlu0 %1114
        %v1116 = vmax.f32 %v1013, %v1015
        %v1117 = vrot.slane %v1116, 4
        %v1118 = vmax.f32 %v1116, %v1117
        %v1119 = vrot.slane %v1118, 2
        %v1120 = vmax.f32 %v1118, %v1119
        %v1121 = vrot.slane %v1120, 1
        %v1122 = vmax.f32 %v1120, %v1121
        %v1123 = vmax.f32 %v1017, %v1019
        %v1124 = vrot.slane %v1123, 4
        %v1125 = vmax.f32 %v1123, %v1124
        %v1126 = vrot.slane %v1125, 2
        %v1127 = vmax.f32 %v1125, %v1126
        %v1128 = vrot.slane %v1127, 1
        %v1129 = vmax.f32 %v1127, %v1128
        %v1130 = vmax.f32 %v1021, %v1023
        %v1131 = vrot.slane %v1130, 4
        %v1132 = vmax.f32 %v1130, %v1131
        %v1133 = vrot.slane %v1132, 2
        %v1134 = vmax.f32 %v1132, %v1133
        %v1135 = vrot.slane %v1134, 1
        %v1136 = vmax.f32 %v1134, %v1135
        %v1137 = vmax.f32 %v1025, %v1027
        %v1138 = vrot.slane %v1137, 4
        %v1139 = vmax.f32 %v1137, %v1138
        %v1140 = vrot.slane %v1139, 2
        %v1141 = vmax.f32 %v1139, %v1140
        %v1142 = vrot.slane %v1141, 1
        %v1143 = vmax.f32 %v1141, %v1142
        %v1144 = vmax.f32 %v1029, %v1031
        %v1145 = vrot.slane %v1144, 4
        %v1146 = vmax.f32 %v1144, %v1145
        %v1147 = vrot.slane %v1146, 2
        %v1148 = vmax.f32 %v1146, %v1147
        %v1149 = vrot.slane %v1148, 1
        %v1150 = vmax.f32 %v1148, %v1149
        %v1151 = vmax.f32 %v1033, %v1035
        %v1152 = vrot.slane %v1151, 4
        %v1153 = vmax.f32 %v1151, %v1152
        %v1154 = vrot.slane %v1153, 2
        %v1155 = vmax.f32 %v1153, %v1154
        %v1156 = vrot.slane %v1155, 1
        %v1157 = vmax.f32 %v1155, %v1156
        %v1158 = vmax.f32 %v1037, %v1039
        %v1159 = vrot.slane %v1158, 4
        %v1160 = vmax.f32 %v1158, %v1159
        %v1161 = vrot.slane %v1160, 2
        %v1162 = vmax.f32 %v1160, %v1161
        %v1163 = vrot.slane %v1162, 1
        %v1164 = vmax.f32 %v1162, %v1163
        %v1165 = vmax.f32 %v1041, %v1043
        %v1166 = vrot.slane %v1165, 4
        %v1167 = vmax.f32 %v1165, %v1166
        %v1168 = vrot.slane %v1167, 2
        %v1169 = vmax.f32 %v1167, %v1168
        %v1170 = vrot.slane %v1169, 1
        %v1171 = vmax.f32 %v1169, %v1170
        %v1172 = vmax.f32 %v1045, %v1047
        %v1173 = vrot.slane %v1172, 4
        %v1174 = vmax.f32 %v1172, %v1173
        %v1175 = vrot.slane %v1174, 2
        %v1176 = vmax.f32 %v1174, %v1175
        %v1177 = vrot.slane %v1176, 1
        %v1178 = vmax.f32 %v1176, %v1177
        %v1179 = vmax.f32 %v1049, %v1051
        %v1180 = vrot.slane %v1179, 4
        %v1181 = vmax.f32 %v1179, %v1180
        %v1182 = vrot.slane %v1181, 2
        %v1183 = vmax.f32 %v1181, %v1182
        %v1184 = vrot.slane %v1183, 1
        %v1185 = vmax.f32 %v1183, %v1184
        %v1186 = vmax.f32 %v1053, %v1055
        %v1187 = vrot.slane %v1186, 4
        %v1188 = vmax.f32 %v1186, %v1187
        %v1189 = vrot.slane %v1188, 2
        %v1190 = vmax.f32 %v1188, %v1189
        %v1191 = vrot.slane %v1190, 1
        %v1192 = vmax.f32 %v1190, %v1191
        %v1193 = vmax.f32 %v1057, %v1059
        %v1194 = vrot.slane %v1193, 4
        %v1195 = vmax.f32 %v1193, %v1194
        %v1196 = vrot.slane %v1195, 2
        %v1197 = vmax.f32 %v1195, %v1196
        %v1198 = vrot.slane %v1197, 1
        %v1199 = vmax.f32 %v1197, %v1198
        %v1200 = vmax.f32 %v1061, %v1063
        %v1201 = vrot.slane %v1200, 4
        %v1202 = vmax.f32 %v1200, %v1201
        %v1203 = vrot.slane %v1202, 2
        %v1204 = vmax.f32 %v1202, %v1203
        %v1205 = vrot.slane %v1204, 1
        %v1206 = vmax.f32 %v1204, %v1205
        %v1207 = vmax.f32 %v1065, %v1067
        %v1208 = vrot.slane %v1207, 4
        %v1209 = vmax.f32 %v1207, %v1208
        %v1210 = vrot.slane %v1209, 2
        %v1211 = vmax.f32 %v1209, %v1210
        %v1212 = vrot.slane %v1211, 1
        %v1213 = vmax.f32 %v1211, %v1212
        %v1214 = vmax.f32 %v1069, %v1071
        %v1215 = vrot.slane %v1214, 4
        %v1216 = vmax.f32 %v1214, %v1215
        %v1217 = vrot.slane %v1216, 2
        %v1218 = vmax.f32 %v1216, %v1217
        %v1219 = vrot.slane %v1218, 1
        %v1220 = vmax.f32 %v1218, %v1219
        %v1221 = vmax.f32 %v1073, %v1075
        %v1222 = vrot.slane %v1221, 4
        %v1223 = vmax.f32 %v1221, %v1222
        %v1224 = vrot.slane %v1223, 2
        %v1225 = vmax.f32 %v1223, %v1224
        %v1226 = vrot.slane %v1225, 1
        %v1227 = vmax.f32 %v1225, %v1226
        %v1228 = vmax.f32 %v1077, %v1079
        %v1229 = vrot.slane %v1228, 4
        %v1230 = vmax.f32 %v1228, %v1229
        %v1231 = vrot.slane %v1230, 2
        %v1232 = vmax.f32 %v1230, %v1231
        %v1233 = vrot.slane %v1232, 1
        %v1234 = vmax.f32 %v1232, %v1233
        %v1235 = vmax.f32 %v1081, %v1083
        %v1236 = vrot.slane %v1235, 4
        %v1237 = vmax.f32 %v1235, %v1236
        %v1238 = vrot.slane %v1237, 2
        %v1239 = vmax.f32 %v1237, %v1238
        %v1240 = vrot.slane %v1239, 1
        %v1241 = vmax.f32 %v1239, %v1240
        %v1242 = vmax.f32 %v1085, %v1087
        %v1243 = vrot.slane %v1242, 4
        %v1244 = vmax.f32 %v1242, %v1243
        %v1245 = vrot.slane %v1244, 2
        %v1246 = vmax.f32 %v1244, %v1245
        %v1247 = vrot.slane %v1246, 1
        %v1248 = vmax.f32 %v1246, %v1247
        %v1249 = vmax.f32 %v1089, %v1091
        %v1250 = vrot.slane %v1249, 4
        %v1251 = vmax.f32 %v1249, %v1250
        %v1252 = vrot.slane %v1251, 2
        %v1253 = vmax.f32 %v1251, %v1252
        %v1254 = vrot.slane %v1253, 1
        %v1255 = vmax.f32 %v1253, %v1254
        %v1256 = vmax.f32 %v1093, %v1095
        %v1257 = vrot.slane %v1256, 4
        %v1258 = vmax.f32 %v1256, %v1257
        %v1259 = vrot.slane %v1258, 2
        %v1260 = vmax.f32 %v1258, %v1259
        %v1261 = vrot.slane %v1260, 1
        %v1262 = vmax.f32 %v1260, %v1261
        %v1263 = vmax.f32 %v1097, %v1099
        %v1264 = vrot.slane %v1263, 4
        %v1265 = vmax.f32 %v1263, %v1264
        %v1266 = vrot.slane %v1265, 2
        %v1267 = vmax.f32 %v1265, %v1266
        %v1268 = vrot.slane %v1267, 1
        %v1269 = vmax.f32 %v1267, %v1268
        %v1270 = vmax.f32 %v1101, %v1103
        %v1271 = vrot.slane %v1270, 4
        %v1272 = vmax.f32 %v1270, %v1271
        %v1273 = vrot.slane %v1272, 2
        %v1274 = vmax.f32 %v1272, %v1273
        %v1275 = vrot.slane %v1274, 1
        %v1276 = vmax.f32 %v1274, %v1275
        %v1277 = vmax.f32 %v1105, %v1107
        %v1278 = vrot.slane %v1277, 4
        %v1279 = vmax.f32 %v1277, %v1278
        %v1280 = vrot.slane %v1279, 2
        %v1281 = vmax.f32 %v1279, %v1280
        %v1282 = vrot.slane %v1281, 1
        %v1283 = vmax.f32 %v1281, %v1282
        %v1284 = vmax.f32 %v1109, %v1111
        %v1285 = vrot.slane %v1284, 4
        %v1286 = vmax.f32 %v1284, %v1285
        %v1287 = vrot.slane %v1286, 2
        %v1288 = vmax.f32 %v1286, %v1287
        %v1289 = vrot.slane %v1288, 1
        %v1290 = vmax.f32 %v1288, %v1289
        %v1291 = vmax.f32 %v1113, %v1115
        %v1292 = vrot.slane %v1291, 4
        %v1293 = vmax.f32 %v1291, %v1292
        %v1294 = vrot.slane %v1293, 2
        %v1295 = vmax.f32 %v1293, %v1294
        %v1296 = vrot.slane %v1295, 1
        %v1297 = vmax.f32 %v1295, %v1296
        %v1298 = vsub.f32 %v908, %v1122
        %v1299 = vsub.f32 %v909, %v1122
        %v1300 = vsub.f32 %v910, %v1129
        %v1301 = vsub.f32 %v911, %v1129
        %v1302 = vsub.f32 %v912, %v1136
        %v1303 = vsub.f32 %v913, %v1136
        %v1304 = vsub.f32 %v914, %v1143
        %v1305 = vsub.f32 %v915, %v1143
        %v1306 = vsub.f32 %v916, %v1150
        %v1307 = vsub.f32 %v917, %v1150
        %v1308 = vsub.f32 %v918, %v1157
        %v1309 = vsub.f32 %v919, %v1157
        %v1310 = vsub.f32 %v920, %v1164
        %v1311 = vsub.f32 %v921, %v1164
        %v1312 = vsub.f32 %v922, %v1171
        %v1313 = vsub.f32 %v923, %v1171
        %v1314 = vsub.f32 %v924, %v1178
        %v1315 = vsub.f32 %v925, %v1178
        %v1316 = vsub.f32 %v926, %v1185
        %v1317 = vsub.f32 %v927, %v1185
        %v1318 = vsub.f32 %v928, %v1192
        %v1319 = vsub.f32 %v929, %v1192
        %v1320 = vsub.f32 %v930, %v1199
        %v1321 = vsub.f32 %v931, %v1199
        %v1322 = vsub.f32 %v932, %v1206
        %v1323 = vsub.f32 %v933, %v1206
        %v1324 = vsub.f32 %v934, %v1213
        %v1325 = vsub.f32 %v935, %v1213
        %v1326 = vsub.f32 %v936, %v1220
        %v1327 = vsub.f32 %v937, %v1220
        %v1328 = vsub.f32 %v938, %v1227
        %v1329 = vsub.f32 %v939, %v1227
        %v1330 = vsub.f32 %v940, %v1234
        %v1331 = vsub.f32 %v941, %v1234
        %v1332 = vsub.f32 %v942, %v1241
        %v1333 = vsub.f32 %v943, %v1241
        %v1334 = vsub.f32 %v944, %v1248
        %v1335 = vsub.f32 %v945, %v1248
        %v1336 = vsub.f32 %v946, %v1255
        %v1337 = vsub.f32 %v947, %v1255
        %v1338 = vsub.f32 %v948, %v1262
        %v1339 = vsub.f32 %v949, %v1262
        %v1340 = vsub.f32 %v950, %v1269
        %v1341 = vsub.f32 %v951, %v1269
        %v1342 = vsub.f32 %v952, %v1276
        %v1343 = vsub.f32 %v953, %v1276
        %v1344 = vsub.f32 %v954, %v1283
        %v1345 = vsub.f32 %v955, %v1283
        %v1346 = vsub.f32 %v956, %v1290
        %v1347 = vsub.f32 %v957, %v1290
        %v1348 = vsub.f32 %v958, %v1297
        %v1349 = vsub.f32 %v959, %v1297
        %1350 = vmax.xlane.f32.xlu0 %v960
        %v1351 = vpop.xlane.xlu0 %1350
        %1352 = vmax.xlane.f32.xlu0 %v961
        %v1353 = vpop.xlane.xlu0 %1352
        %1354 = vmax.xlane.f32.xlu0 %v962
        %v1355 = vpop.xlane.xlu0 %1354
        %1356 = vmax.xlane.f32.xlu0 %v963
        %v1357 = vpop.xlane.xlu0 %1356
        %1358 = vmax.xlane.f32.xlu0 %v964
        %v1359 = vpop.xlane.xlu0 %1358
        %1360 = vmax.xlane.f32.xlu0 %v965
        %v1361 = vpop.xlane.xlu0 %1360
        %1362 = vmax.xlane.f32.xlu0 %v966
        %v1363 = vpop.xlane.xlu0 %1362
        %1364 = vmax.xlane.f32.xlu0 %v967
        %v1365 = vpop.xlane.xlu0 %1364
        %1366 = vmax.xlane.f32.xlu0 %v968
        %v1367 = vpop.xlane.xlu0 %1366
        %1368 = vmax.xlane.f32.xlu0 %v969
        %v1369 = vpop.xlane.xlu0 %1368
        %1370 = vmax.xlane.f32.xlu0 %v970
        %v1371 = vpop.xlane.xlu0 %1370
        %1372 = vmax.xlane.f32.xlu0 %v971
        %v1373 = vpop.xlane.xlu0 %1372
        %1374 = vmax.xlane.f32.xlu0 %v972
        %v1375 = vpop.xlane.xlu0 %1374
        %1376 = vmax.xlane.f32.xlu0 %v973
        %v1377 = vpop.xlane.xlu0 %1376
        %1378 = vmax.xlane.f32.xlu0 %v974
        %v1379 = vpop.xlane.xlu0 %1378
        %1380 = vmax.xlane.f32.xlu0 %v975
        %v1381 = vpop.xlane.xlu0 %1380
        %1382 = vmax.xlane.f32.xlu0 %v976
        %v1383 = vpop.xlane.xlu0 %1382
        %1384 = vmax.xlane.f32.xlu0 %v977
        %v1385 = vpop.xlane.xlu0 %1384
        %1386 = vmax.xlane.f32.xlu0 %v978
        %v1387 = vpop.xlane.xlu0 %1386
        %1388 = vmax.xlane.f32.xlu0 %v979
        %v1389 = vpop.xlane.xlu0 %1388
        %1390 = vmax.xlane.f32.xlu0 %v980
        %v1391 = vpop.xlane.xlu0 %1390
        %1392 = vmax.xlane.f32.xlu0 %v981
        %v1393 = vpop.xlane.xlu0 %1392
        %1394 = vmax.xlane.f32.xlu0 %v982
        %v1395 = vpop.xlane.xlu0 %1394
        %1396 = vmax.xlane.f32.xlu0 %v983
        %v1397 = vpop.xlane.xlu0 %1396
        %1398 = vmax.xlane.f32.xlu0 %v984
        %v1399 = vpop.xlane.xlu0 %1398
        %1400 = vmax.xlane.f32.xlu0 %v985
        %v1401 = vpop.xlane.xlu0 %1400
        %1402 = vmax.xlane.f32.xlu0 %v986
        %v1403 = vpop.xlane.xlu0 %1402
        %1404 = vmax.xlane.f32.xlu0 %v987
        %v1405 = vpop.xlane.xlu0 %1404
        %1406 = vmax.xlane.f32.xlu0 %v988
        %v1407 = vpop.xlane.xlu0 %1406
        %1408 = vmax.xlane.f32.xlu0 %v989
        %v1409 = vpop.xlane.xlu0 %1408
        %1410 = vmax.xlane.f32.xlu0 %v990
        %v1411 = vpop.xlane.xlu0 %1410
        %1412 = vmax.xlane.f32.xlu0 %v991
        %v1413 = vpop.xlane.xlu0 %1412
        %1414 = vmax.xlane.f32.xlu0 %v992
        %v1415 = vpop.xlane.xlu0 %1414
        %1416 = vmax.xlane.f32.xlu0 %v993
        %v1417 = vpop.xlane.xlu0 %1416
        %1418 = vmax.xlane.f32.xlu0 %v994
        %v1419 = vpop.xlane.xlu0 %1418
        %1420 = vmax.xlane.f32.xlu0 %v995
        %v1421 = vpop.xlane.xlu0 %1420
        %1422 = vmax.xlane.f32.xlu0 %v996
        %v1423 = vpop.xlane.xlu0 %1422
        %1424 = vmax.xlane.f32.xlu0 %v997
        %v1425 = vpop.xlane.xlu0 %1424
        %1426 = vmax.xlane.f32.xlu0 %v998
        %v1427 = vpop.xlane.xlu0 %1426
        %1428 = vmax.xlane.f32.xlu0 %v999
        %v1429 = vpop.xlane.xlu0 %1428
        %1430 = vmax.xlane.f32.xlu0 %v1000
        %v1431 = vpop.xlane.xlu0 %1430
        %1432 = vmax.xlane.f32.xlu0 %v1001
        %v1433 = vpop.xlane.xlu0 %1432
        %1434 = vmax.xlane.f32.xlu0 %v1002
        %v1435 = vpop.xlane.xlu0 %1434
        %1436 = vmax.xlane.f32.xlu0 %v1003
        %v1437 = vpop.xlane.xlu0 %1436
        %1438 = vmax.xlane.f32.xlu0 %v1004
        %v1439 = vpop.xlane.xlu0 %1438
        %1440 = vmax.xlane.f32.xlu0 %v1005
        %v1441 = vpop.xlane.xlu0 %1440
        %1442 = vmax.xlane.f32.xlu0 %v1006
        %v1443 = vpop.xlane.xlu0 %1442
        %1444 = vmax.xlane.f32.xlu0 %v1007
        %v1445 = vpop.xlane.xlu0 %1444
        %1446 = vmax.xlane.f32.xlu0 %v1008
        %v1447 = vpop.xlane.xlu0 %1446
        %1448 = vmax.xlane.f32.xlu0 %v1009
        %v1449 = vpop.xlane.xlu0 %1448
        %1450 = vmax.xlane.f32.xlu0 %v1010
        %v1451 = vpop.xlane.xlu0 %1450
        %1452 = vmax.xlane.f32.xlu0 %v1011
        %v1453 = vpop.xlane.xlu0 %1452
        %v1454 = vmax.f32 %v1351, %v1353
        %v1455 = vrot.slane %v1454, 4
        %v1456 = vmax.f32 %v1454, %v1455
        %v1457 = vrot.slane %v1456, 2
        %v1458 = vmax.f32 %v1456, %v1457
        %v1459 = vrot.slane %v1458, 1
        %v1460 = vmax.f32 %v1458, %v1459
        %v1461 = vmax.f32 %v1355, %v1357
        %v1462 = vrot.slane %v1461, 4
        %v1463 = vmax.f32 %v1461, %v1462
        %v1464 = vrot.slane %v1463, 2
        %v1465 = vmax.f32 %v1463, %v1464
        %v1466 = vrot.slane %v1465, 1
        %v1467 = vmax.f32 %v1465, %v1466
        %v1468 = vmax.f32 %v1359, %v1361
        %v1469 = vrot.slane %v1468, 4
        %v1470 = vmax.f32 %v1468, %v1469
        %v1471 = vrot.slane %v1470, 2
        %v1472 = vmax.f32 %v1470, %v1471
        %v1473 = vrot.slane %v1472, 1
        %v1474 = vmax.f32 %v1472, %v1473
        %v1475 = vmax.f32 %v1363, %v1365
        %v1476 = vrot.slane %v1475, 4
        %v1477 = vmax.f32 %v1475, %v1476
        %v1478 = vrot.slane %v1477, 2
        %v1479 = vmax.f32 %v1477, %v1478
        %v1480 = vrot.slane %v1479, 1
        %v1481 = vmax.f32 %v1479, %v1480
        %v1482 = vmax.f32 %v1367, %v1369
        %v1483 = vrot.slane %v1482, 4
        %v1484 = vmax.f32 %v1482, %v1483
        %v1485 = vrot.slane %v1484, 2
        %v1486 = vmax.f32 %v1484, %v1485
        %v1487 = vrot.slane %v1486, 1
        %v1488 = vmax.f32 %v1486, %v1487
        %v1489 = vmax.f32 %v1371, %v1373
        %v1490 = vrot.slane %v1489, 4
        %v1491 = vmax.f32 %v1489, %v1490
        %v1492 = vrot.slane %v1491, 2
        %v1493 = vmax.f32 %v1491, %v1492
        %v1494 = vrot.slane %v1493, 1
        %v1495 = vmax.f32 %v1493, %v1494
        %v1496 = vmax.f32 %v1375, %v1377
        %v1497 = vrot.slane %v1496, 4
        %v1498 = vmax.f32 %v1496, %v1497
        %v1499 = vrot.slane %v1498, 2
        %v1500 = vmax.f32 %v1498, %v1499
        %v1501 = vrot.slane %v1500, 1
        %v1502 = vmax.f32 %v1500, %v1501
        %v1503 = vmax.f32 %v1379, %v1381
        %v1504 = vrot.slane %v1503, 4
        %v1505 = vmax.f32 %v1503, %v1504
        %v1506 = vrot.slane %v1505, 2
        %v1507 = vmax.f32 %v1505, %v1506
        %v1508 = vrot.slane %v1507, 1
        %v1509 = vmax.f32 %v1507, %v1508
        %v1510 = vmax.f32 %v1383, %v1385
        %v1511 = vrot.slane %v1510, 4
        %v1512 = vmax.f32 %v1510, %v1511
        %v1513 = vrot.slane %v1512, 2
        %v1514 = vmax.f32 %v1512, %v1513
        %v1515 = vrot.slane %v1514, 1
        %v1516 = vmax.f32 %v1514, %v1515
        %v1517 = vmax.f32 %v1387, %v1389
        %v1518 = vrot.slane %v1517, 4
        %v1519 = vmax.f32 %v1517, %v1518
        %v1520 = vrot.slane %v1519, 2
        %v1521 = vmax.f32 %v1519, %v1520
        %v1522 = vrot.slane %v1521, 1
        %v1523 = vmax.f32 %v1521, %v1522
        %v1524 = vmax.f32 %v1391, %v1393
        %v1525 = vrot.slane %v1524, 4
        %v1526 = vmax.f32 %v1524, %v1525
        %v1527 = vrot.slane %v1526, 2
        %v1528 = vmax.f32 %v1526, %v1527
        %v1529 = vrot.slane %v1528, 1
        %v1530 = vmax.f32 %v1528, %v1529
        %v1531 = vmax.f32 %v1395, %v1397
        %v1532 = vrot.slane %v1531, 4
        %v1533 = vmax.f32 %v1531, %v1532
        %v1534 = vrot.slane %v1533, 2
        %v1535 = vmax.f32 %v1533, %v1534
        %v1536 = vrot.slane %v1535, 1
        %v1537 = vmax.f32 %v1535, %v1536
        %v1538 = vmax.f32 %v1399, %v1401
        %v1539 = vrot.slane %v1538, 4
        %v1540 = vmax.f32 %v1538, %v1539
        %v1541 = vrot.slane %v1540, 2
        %v1542 = vmax.f32 %v1540, %v1541
        %v1543 = vrot.slane %v1542, 1
        %v1544 = vmax.f32 %v1542, %v1543
        %v1545 = vmax.f32 %v1403, %v1405
        %v1546 = vrot.slane %v1545, 4
        %v1547 = vmax.f32 %v1545, %v1546
        %v1548 = vrot.slane %v1547, 2
        %v1549 = vmax.f32 %v1547, %v1548
        %v1550 = vrot.slane %v1549, 1
        %v1551 = vmax.f32 %v1549, %v1550
        %v1552 = vmax.f32 %v1407, %v1409
        %v1553 = vrot.slane %v1552, 4
        %v1554 = vmax.f32 %v1552, %v1553
        %v1555 = vrot.slane %v1554, 2
        %v1556 = vmax.f32 %v1554, %v1555
        %v1557 = vrot.slane %v1556, 1
        %v1558 = vmax.f32 %v1556, %v1557
        %v1559 = vmax.f32 %v1411, %v1413
        %v1560 = vrot.slane %v1559, 4
        %v1561 = vmax.f32 %v1559, %v1560
        %v1562 = vrot.slane %v1561, 2
        %v1563 = vmax.f32 %v1561, %v1562
        %v1564 = vrot.slane %v1563, 1
        %v1565 = vmax.f32 %v1563, %v1564
        %v1566 = vmax.f32 %v1415, %v1417
        %v1567 = vrot.slane %v1566, 4
        %v1568 = vmax.f32 %v1566, %v1567
        %v1569 = vrot.slane %v1568, 2
        %v1570 = vmax.f32 %v1568, %v1569
        %v1571 = vrot.slane %v1570, 1
        %v1572 = vmax.f32 %v1570, %v1571
        %v1573 = vmax.f32 %v1419, %v1421
        %v1574 = vrot.slane %v1573, 4
        %v1575 = vmax.f32 %v1573, %v1574
        %v1576 = vrot.slane %v1575, 2
        %v1577 = vmax.f32 %v1575, %v1576
        %v1578 = vrot.slane %v1577, 1
        %v1579 = vmax.f32 %v1577, %v1578
        %v1580 = vmax.f32 %v1423, %v1425
        %v1581 = vrot.slane %v1580, 4
        %v1582 = vmax.f32 %v1580, %v1581
        %v1583 = vrot.slane %v1582, 2
        %v1584 = vmax.f32 %v1582, %v1583
        %v1585 = vrot.slane %v1584, 1
        %v1586 = vmax.f32 %v1584, %v1585
        %v1587 = vmax.f32 %v1427, %v1429
        %v1588 = vrot.slane %v1587, 4
        %v1589 = vmax.f32 %v1587, %v1588
        %v1590 = vrot.slane %v1589, 2
        %v1591 = vmax.f32 %v1589, %v1590
        %v1592 = vrot.slane %v1591, 1
        %v1593 = vmax.f32 %v1591, %v1592
        %v1594 = vmax.f32 %v1431, %v1433
        %v1595 = vrot.slane %v1594, 4
        %v1596 = vmax.f32 %v1594, %v1595
        %v1597 = vrot.slane %v1596, 2
        %v1598 = vmax.f32 %v1596, %v1597
        %v1599 = vrot.slane %v1598, 1
        %v1600 = vmax.f32 %v1598, %v1599
        %v1601 = vmax.f32 %v1435, %v1437
        %v1602 = vrot.slane %v1601, 4
        %v1603 = vmax.f32 %v1601, %v1602
        %v1604 = vrot.slane %v1603, 2
        %v1605 = vmax.f32 %v1603, %v1604
        %v1606 = vrot.slane %v1605, 1
        %v1607 = vmax.f32 %v1605, %v1606
        %v1608 = vmax.f32 %v1439, %v1441
        %v1609 = vrot.slane %v1608, 4
        %v1610 = vmax.f32 %v1608, %v1609
        %v1611 = vrot.slane %v1610, 2
        %v1612 = vmax.f32 %v1610, %v1611
        %v1613 = vrot.slane %v1612, 1
        %v1614 = vmax.f32 %v1612, %v1613
        %v1615 = vmax.f32 %v1443, %v1445
        %v1616 = vrot.slane %v1615, 4
        %v1617 = vmax.f32 %v1615, %v1616
        %v1618 = vrot.slane %v1617, 2
        %v1619 = vmax.f32 %v1617, %v1618
        %v1620 = vrot.slane %v1619, 1
        %v1621 = vmax.f32 %v1619, %v1620
        %v1622 = vmax.f32 %v1447, %v1449
        %v1623 = vrot.slane %v1622, 4
        %v1624 = vmax.f32 %v1622, %v1623
        %v1625 = vrot.slane %v1624, 2
        %v1626 = vmax.f32 %v1624, %v1625
        %v1627 = vrot.slane %v1626, 1
        %v1628 = vmax.f32 %v1626, %v1627
        %v1629 = vmax.f32 %v1451, %v1453
        %v1630 = vrot.slane %v1629, 4
        %v1631 = vmax.f32 %v1629, %v1630
        %v1632 = vrot.slane %v1631, 2
        %v1633 = vmax.f32 %v1631, %v1632
        %v1634 = vrot.slane %v1633, 1
        %v1635 = vmax.f32 %v1633, %v1634
        %v1636 = vsub.f32 %v960, %v1460
        %v1637 = vsub.f32 %v961, %v1460
        %v1638 = vsub.f32 %v962, %v1467
        %v1639 = vsub.f32 %v963, %v1467
        %v1640 = vsub.f32 %v964, %v1474
        %v1641 = vsub.f32 %v965, %v1474
        %v1642 = vsub.f32 %v966, %v1481
        %v1643 = vsub.f32 %v967, %v1481
        %v1644 = vsub.f32 %v968, %v1488
        %v1645 = vsub.f32 %v969, %v1488
        %v1646 = vsub.f32 %v970, %v1495
        %v1647 = vsub.f32 %v971, %v1495
        %v1648 = vsub.f32 %v972, %v1502
        %v1649 = vsub.f32 %v973, %v1502
        %v1650 = vsub.f32 %v974, %v1509
        %v1651 = vsub.f32 %v975, %v1509
        %v1652 = vsub.f32 %v976, %v1516
        %v1653 = vsub.f32 %v977, %v1516
        %v1654 = vsub.f32 %v978, %v1523
        %v1655 = vsub.f32 %v979, %v1523
        %v1656 = vsub.f32 %v980, %v1530
        %v1657 = vsub.f32 %v981, %v1530
        %v1658 = vsub.f32 %v982, %v1537
        %v1659 = vsub.f32 %v983, %v1537
        %v1660 = vsub.f32 %v984, %v1544
        %v1661 = vsub.f32 %v985, %v1544
        %v1662 = vsub.f32 %v986, %v1551
        %v1663 = vsub.f32 %v987, %v1551
        %v1664 = vsub.f32 %v988, %v1558
        %v1665 = vsub.f32 %v989, %v1558
        %v1666 = vsub.f32 %v990, %v1565
        %v1667 = vsub.f32 %v991, %v1565
        %v1668 = vsub.f32 %v992, %v1572
        %v1669 = vsub.f32 %v993, %v1572
        %v1670 = vsub.f32 %v994, %v1579
        %v1671 = vsub.f32 %v995, %v1579
        %v1672 = vsub.f32 %v996, %v1586
        %v1673 = vsub.f32 %v997, %v1586
        %v1674 = vsub.f32 %v998, %v1593
        %v1675 = vsub.f32 %v999, %v1593
        %v1676 = vsub.f32 %v1000, %v1600
        %v1677 = vsub.f32 %v1001, %v1600
        %v1678 = vsub.f32 %v1002, %v1607
        %v1679 = vsub.f32 %v1003, %v1607
        %v1680 = vsub.f32 %v1004, %v1614
        %v1681 = vsub.f32 %v1005, %v1614
        %v1682 = vsub.f32 %v1006, %v1621
        %v1683 = vsub.f32 %v1007, %v1621
        %v1684 = vsub.f32 %v1008, %v1628
        %v1685 = vsub.f32 %v1009, %v1628
        %v1686 = vsub.f32 %v1010, %v1635
        %v1687 = vsub.f32 %v1011, %v1635
        %v1688 = vmul.f32 %v1298, 1.442695
        %v1689 = vpow.pop %v1688
        %v1690 = vmul.f32 %v1299, 1.442695
        %v1691 = vpow.pop %v1690
        %v1692 = vmul.f32 %v1300, 1.442695
        %v1693 = vpow.pop %v1692
        %v1694 = vmul.f32 %v1301, 1.442695
        %v1695 = vpow.pop %v1694
        %v1696 = vmul.f32 %v1302, 1.442695
        %v1697 = vpow.pop %v1696
        %v1698 = vmul.f32 %v1303, 1.442695
        %v1699 = vpow.pop %v1698
        %v1700 = vmul.f32 %v1304, 1.442695
        %v1701 = vpow.pop %v1700
        %v1702 = vmul.f32 %v1305, 1.442695
        %v1703 = vpow.pop %v1702
        %v1704 = vmul.f32 %v1306, 1.442695
        %v1705 = vpow.pop %v1704
        %v1706 = vmul.f32 %v1307, 1.442695
        %v1707 = vpow.pop %v1706
        %v1708 = vmul.f32 %v1308, 1.442695
        %v1709 = vpow.pop %v1708
        %v1710 = vmul.f32 %v1309, 1.442695
        %v1711 = vpow.pop %v1710
        %v1712 = vmul.f32 %v1310, 1.442695
        %v1713 = vpow.pop %v1712
        %v1714 = vmul.f32 %v1311, 1.442695
        %v1715 = vpow.pop %v1714
        %v1716 = vmul.f32 %v1312, 1.442695
        %v1717 = vpow.pop %v1716
        %v1718 = vmul.f32 %v1313, 1.442695
        %v1719 = vpow.pop %v1718
        %v1720 = vmul.f32 %v1314, 1.442695
        %v1721 = vpow.pop %v1720
        %v1722 = vmul.f32 %v1315, 1.442695
        %v1723 = vpow.pop %v1722
        %v1724 = vmul.f32 %v1316, 1.442695
        %v1725 = vpow.pop %v1724
        %v1726 = vmul.f32 %v1317, 1.442695
        %v1727 = vpow.pop %v1726
        %v1728 = vmul.f32 %v1318, 1.442695
        %v1729 = vpow.pop %v1728
        %v1730 = vmul.f32 %v1319, 1.442695
        %v1731 = vpow.pop %v1730
        %v1732 = vmul.f32 %v1320, 1.442695
        %v1733 = vpow.pop %v1732
        %v1734 = vmul.f32 %v1321, 1.442695
        %v1735 = vpow.pop %v1734
        %v1736 = vmul.f32 %v1322, 1.442695
        %v1737 = vpow.pop %v1736
        %v1738 = vmul.f32 %v1323, 1.442695
        %v1739 = vpow.pop %v1738
        %v1740 = vmul.f32 %v1324, 1.442695
        %v1741 = vpow.pop %v1740
        %v1742 = vmul.f32 %v1325, 1.442695
        %v1743 = vpow.pop %v1742
        %v1744 = vmul.f32 %v1326, 1.442695
        %v1745 = vpow.pop %v1744
        %v1746 = vmul.f32 %v1327, 1.442695
        %v1747 = vpow.pop %v1746
        %v1748 = vmul.f32 %v1328, 1.442695
        %v1749 = vpow.pop %v1748
        %v1750 = vmul.f32 %v1329, 1.442695
        %v1751 = vpow.pop %v1750
        %v1752 = vmul.f32 %v1330, 1.442695
        %v1753 = vpow.pop %v1752
        %v1754 = vmul.f32 %v1331, 1.442695
        %v1755 = vpow.pop %v1754
        %v1756 = vmul.f32 %v1332, 1.442695
        %v1757 = vpow.pop %v1756
        %v1758 = vmul.f32 %v1333, 1.442695
        %v1759 = vpow.pop %v1758
        %v1760 = vmul.f32 %v1334, 1.442695
        %v1761 = vpow.pop %v1760
        %v1762 = vmul.f32 %v1335, 1.442695
        %v1763 = vpow.pop %v1762
        %v1764 = vmul.f32 %v1336, 1.442695
        %v1765 = vpow.pop %v1764
        %v1766 = vmul.f32 %v1337, 1.442695
        %v1767 = vpow.pop %v1766
        %v1768 = vmul.f32 %v1338, 1.442695
        %v1769 = vpow.pop %v1768
        %v1770 = vmul.f32 %v1339, 1.442695
        %v1771 = vpow.pop %v1770
        %v1772 = vmul.f32 %v1340, 1.442695
        %v1773 = vpow.pop %v1772
        %v1774 = vmul.f32 %v1341, 1.442695
        %v1775 = vpow.pop %v1774
        %v1776 = vmul.f32 %v1342, 1.442695
        %v1777 = vpow.pop %v1776
        %v1778 = vmul.f32 %v1343, 1.442695
        %v1779 = vpow.pop %v1778
        %v1780 = vmul.f32 %v1344, 1.442695
        %v1781 = vpow.pop %v1780
        %v1782 = vmul.f32 %v1345, 1.442695
        %v1783 = vpow.pop %v1782
        %v1784 = vmul.f32 %v1346, 1.442695
        %v1785 = vpow.pop %v1784
        %v1786 = vmul.f32 %v1347, 1.442695
        %v1787 = vpow.pop %v1786
        %v1788 = vmul.f32 %v1348, 1.442695
        %v1789 = vpow.pop %v1788
        %v1790 = vmul.f32 %v1349, 1.442695
        %v1791 = vpow.pop %v1790
        %v1792 = vmul.f32 %v1636, 1.442695
        %v1793 = vpow.pop %v1792
        %v1794 = vmul.f32 %v1637, 1.442695
        %v1795 = vpow.pop %v1794
        %v1796 = vmul.f32 %v1638, 1.442695
        %v1797 = vpow.pop %v1796
        %v1798 = vmul.f32 %v1639, 1.442695
        %v1799 = vpow.pop %v1798
        %v1800 = vmul.f32 %v1640, 1.442695
        %v1801 = vpow.pop %v1800
        %v1802 = vmul.f32 %v1641, 1.442695
        %v1803 = vpow.pop %v1802
        %v1804 = vmul.f32 %v1642, 1.442695
        %v1805 = vpow.pop %v1804
        %v1806 = vmul.f32 %v1643, 1.442695
        %v1807 = vpow.pop %v1806
        %v1808 = vmul.f32 %v1644, 1.442695
        %v1809 = vpow.pop %v1808
        %v1810 = vmul.f32 %v1645, 1.442695
        %v1811 = vpow.pop %v1810
        %v1812 = vmul.f32 %v1646, 1.442695
        %v1813 = vpow.pop %v1812
        %v1814 = vmul.f32 %v1647, 1.442695
        %v1815 = vpow.pop %v1814
        %v1816 = vmul.f32 %v1648, 1.442695
        %v1817 = vpow.pop %v1816
        %v1818 = vmul.f32 %v1649, 1.442695
        %v1819 = vpow.pop %v1818
        %v1820 = vmul.f32 %v1650, 1.442695
        %v1821 = vpow.pop %v1820
        %v1822 = vmul.f32 %v1651, 1.442695
        %v1823 = vpow.pop %v1822
        %v1824 = vmul.f32 %v1652, 1.442695
        %v1825 = vpow.pop %v1824
        %v1826 = vmul.f32 %v1653, 1.442695
        %v1827 = vpow.pop %v1826
        %v1828 = vmul.f32 %v1654, 1.442695
        %v1829 = vpow.pop %v1828
        %v1830 = vmul.f32 %v1655, 1.442695
        %v1831 = vpow.pop %v1830
        %v1832 = vmul.f32 %v1656, 1.442695
        %v1833 = vpow.pop %v1832
        %v1834 = vmul.f32 %v1657, 1.442695
        %v1835 = vpow.pop %v1834
        %v1836 = vmul.f32 %v1658, 1.442695
        %v1837 = vpow.pop %v1836
        %v1838 = vmul.f32 %v1659, 1.442695
        %v1839 = vpow.pop %v1838
        %v1840 = vmul.f32 %v1660, 1.442695
        %v1841 = vpow.pop %v1840
        %v1842 = vmul.f32 %v1661, 1.442695
        %v1843 = vpow.pop %v1842
        %v1844 = vmul.f32 %v1662, 1.442695
        %v1845 = vpow.pop %v1844
        %v1846 = vmul.f32 %v1663, 1.442695
        %v1847 = vpow.pop %v1846
        %v1848 = vmul.f32 %v1664, 1.442695
        %v1849 = vpow.pop %v1848
        %v1850 = vmul.f32 %v1665, 1.442695
        %v1851 = vpow.pop %v1850
        %v1852 = vmul.f32 %v1666, 1.442695
        %v1853 = vpow.pop %v1852
        %v1854 = vmul.f32 %v1667, 1.442695
        %v1855 = vpow.pop %v1854
        %v1856 = vmul.f32 %v1668, 1.442695
        %v1857 = vpow.pop %v1856
        %v1858 = vmul.f32 %v1669, 1.442695
        %v1859 = vpow.pop %v1858
        %v1860 = vmul.f32 %v1670, 1.442695
        %v1861 = vpow.pop %v1860
        %v1862 = vmul.f32 %v1671, 1.442695
        %v1863 = vpow.pop %v1862
        %v1864 = vmul.f32 %v1672, 1.442695
        %v1865 = vpow.pop %v1864
        %v1866 = vmul.f32 %v1673, 1.442695
        %v1867 = vpow.pop %v1866
        %v1868 = vmul.f32 %v1674, 1.442695
        %v1869 = vpow.pop %v1868
        %v1870 = vmul.f32 %v1675, 1.442695
        %v1871 = vpow.pop %v1870
        %v1872 = vmul.f32 %v1676, 1.442695
        %v1873 = vpow.pop %v1872
        %v1874 = vmul.f32 %v1677, 1.442695
        %v1875 = vpow.pop %v1874
        %v1876 = vmul.f32 %v1678, 1.442695
        %v1877 = vpow.pop %v1876
        %v1878 = vmul.f32 %v1679, 1.442695
        %v1879 = vpow.pop %v1878
        %v1880 = vmul.f32 %v1680, 1.442695
        %v1881 = vpow.pop %v1880
        %v1882 = vmul.f32 %v1681, 1.442695
        %v1883 = vpow.pop %v1882
        %v1884 = vmul.f32 %v1682, 1.442695
        %v1885 = vpow.pop %v1884
        %v1886 = vmul.f32 %v1683, 1.442695
        %v1887 = vpow.pop %v1886
        %v1888 = vmul.f32 %v1684, 1.442695
        %v1889 = vpow.pop %v1888
        %v1890 = vmul.f32 %v1685, 1.442695
        %v1891 = vpow.pop %v1890
        %v1892 = vmul.f32 %v1686, 1.442695
        %v1893 = vpow.pop %v1892
        %v1894 = vmul.f32 %v1687, 1.442695
        %v1895 = vpow.pop %v1894
        %1896 = vadd.xlane.f32.xlu0 %v1689
        %v1897 = vpop.xlane.xlu0 %1896
        %1898 = vadd.xlane.f32.xlu0 %v1691
        %v1899 = vpop.xlane.xlu0 %1898
        %1900 = vadd.xlane.f32.xlu0 %v1693
        %v1901 = vpop.xlane.xlu0 %1900
        %1902 = vadd.xlane.f32.xlu0 %v1695
        %v1903 = vpop.xlane.xlu0 %1902
        %1904 = vadd.xlane.f32.xlu0 %v1697
        %v1905 = vpop.xlane.xlu0 %1904
        %1906 = vadd.xlane.f32.xlu0 %v1699
        %v1907 = vpop.xlane.xlu0 %1906
        %1908 = vadd.xlane.f32.xlu0 %v1701
        %v1909 = vpop.xlane.xlu0 %1908
        %1910 = vadd.xlane.f32.xlu0 %v1703
        %v1911 = vpop.xlane.xlu0 %1910
        %1912 = vadd.xlane.f32.xlu0 %v1705
        %v1913 = vpop.xlane.xlu0 %1912
        %1914 = vadd.xlane.f32.xlu0 %v1707
        %v1915 = vpop.xlane.xlu0 %1914
        %1916 = vadd.xlane.f32.xlu0 %v1709
        %v1917 = vpop.xlane.xlu0 %1916
        %1918 = vadd.xlane.f32.xlu0 %v1711
        %v1919 = vpop.xlane.xlu0 %1918
        %1920 = vadd.xlane.f32.xlu0 %v1713
        %v1921 = vpop.xlane.xlu0 %1920
        %1922 = vadd.xlane.f32.xlu0 %v1715
        %v1923 = vpop.xlane.xlu0 %1922
        %1924 = vadd.xlane.f32.xlu0 %v1717
        %v1925 = vpop.xlane.xlu0 %1924
        %1926 = vadd.xlane.f32.xlu0 %v1719
        %v1927 = vpop.xlane.xlu0 %1926
        %1928 = vadd.xlane.f32.xlu0 %v1721
        %v1929 = vpop.xlane.xlu0 %1928
        %1930 = vadd.xlane.f32.xlu0 %v1723
        %v1931 = vpop.xlane.xlu0 %1930
        %1932 = vadd.xlane.f32.xlu0 %v1725
        %v1933 = vpop.xlane.xlu0 %1932
        %1934 = vadd.xlane.f32.xlu0 %v1727
        %v1935 = vpop.xlane.xlu0 %1934
        %1936 = vadd.xlane.f32.xlu0 %v1729
        %v1937 = vpop.xlane.xlu0 %1936
        %1938 = vadd.xlane.f32.xlu0 %v1731
        %v1939 = vpop.xlane.xlu0 %1938
        %1940 = vadd.xlane.f32.xlu0 %v1733
        %v1941 = vpop.xlane.xlu0 %1940
        %1942 = vadd.xlane.f32.xlu0 %v1735
        %v1943 = vpop.xlane.xlu0 %1942
        %1944 = vadd.xlane.f32.xlu0 %v1737
        %v1945 = vpop.xlane.xlu0 %1944
        %1946 = vadd.xlane.f32.xlu0 %v1739
        %v1947 = vpop.xlane.xlu0 %1946
        %1948 = vadd.xlane.f32.xlu0 %v1741
        %v1949 = vpop.xlane.xlu0 %1948
        %1950 = vadd.xlane.f32.xlu0 %v1743
        %v1951 = vpop.xlane.xlu0 %1950
        %1952 = vadd.xlane.f32.xlu0 %v1745
        %v1953 = vpop.xlane.xlu0 %1952
        %1954 = vadd.xlane.f32.xlu0 %v1747
        %v1955 = vpop.xlane.xlu0 %1954
        %1956 = vadd.xlane.f32.xlu0 %v1749
        %v1957 = vpop.xlane.xlu0 %1956
        %1958 = vadd.xlane.f32.xlu0 %v1751
        %v1959 = vpop.xlane.xlu0 %1958
        %1960 = vadd.xlane.f32.xlu0 %v1753
        %v1961 = vpop.xlane.xlu0 %1960
        %1962 = vadd.xlane.f32.xlu0 %v1755
        %v1963 = vpop.xlane.xlu0 %1962
        %1964 = vadd.xlane.f32.xlu0 %v1757
        %v1965 = vpop.xlane.xlu0 %1964
        %1966 = vadd.xlane.f32.xlu0 %v1759
        %v1967 = vpop.xlane.xlu0 %1966
        %1968 = vadd.xlane.f32.xlu0 %v1761
        %v1969 = vpop.xlane.xlu0 %1968
        %1970 = vadd.xlane.f32.xlu0 %v1763
        %v1971 = vpop.xlane.xlu0 %1970
        %1972 = vadd.xlane.f32.xlu0 %v1765
        %v1973 = vpop.xlane.xlu0 %1972
        %1974 = vadd.xlane.f32.xlu0 %v1767
        %v1975 = vpop.xlane.xlu0 %1974
        %1976 = vadd.xlane.f32.xlu0 %v1769
        %v1977 = vpop.xlane.xlu0 %1976
        %1978 = vadd.xlane.f32.xlu0 %v1771
        %v1979 = vpop.xlane.xlu0 %1978
        %1980 = vadd.xlane.f32.xlu0 %v1773
        %v1981 = vpop.xlane.xlu0 %1980
        %1982 = vadd.xlane.f32.xlu0 %v1775
        %v1983 = vpop.xlane.xlu0 %1982
        %1984 = vadd.xlane.f32.xlu0 %v1777
        %v1985 = vpop.xlane.xlu0 %1984
        %1986 = vadd.xlane.f32.xlu0 %v1779
        %v1987 = vpop.xlane.xlu0 %1986
        %1988 = vadd.xlane.f32.xlu0 %v1781
        %v1989 = vpop.xlane.xlu0 %1988
        %1990 = vadd.xlane.f32.xlu0 %v1783
        %v1991 = vpop.xlane.xlu0 %1990
        %1992 = vadd.xlane.f32.xlu0 %v1785
        %v1993 = vpop.xlane.xlu0 %1992
        %1994 = vadd.xlane.f32.xlu0 %v1787
        %v1995 = vpop.xlane.xlu0 %1994
        %1996 = vadd.xlane.f32.xlu0 %v1789
        %v1997 = vpop.xlane.xlu0 %1996
        %1998 = vadd.xlane.f32.xlu0 %v1791
        %v1999 = vpop.xlane.xlu0 %1998
        %v2000 = vadd.f32 %v1897, %v1899
        %v2001 = vrot.slane %v2000, 4
        %v2002 = vadd.f32 %v2000, %v2001
        %v2003 = vrot.slane %v2002, 2
        %v2004 = vadd.f32 %v2002, %v2003
        %v2005 = vrot.slane %v2004, 1
        %v2006 = vadd.f32 %v2004, %v2005
        %v2007 = vadd.f32 %v1901, %v1903
        %v2008 = vrot.slane %v2007, 4
        %v2009 = vadd.f32 %v2007, %v2008
        %v2010 = vrot.slane %v2009, 2
        %v2011 = vadd.f32 %v2009, %v2010
        %v2012 = vrot.slane %v2011, 1
        %v2013 = vadd.f32 %v2011, %v2012
        %v2014 = vadd.f32 %v1905, %v1907
        %v2015 = vrot.slane %v2014, 4
        %v2016 = vadd.f32 %v2014, %v2015
        %v2017 = vrot.slane %v2016, 2
        %v2018 = vadd.f32 %v2016, %v2017
        %v2019 = vrot.slane %v2018, 1
        %v2020 = vadd.f32 %v2018, %v2019
        %v2021 = vadd.f32 %v1909, %v1911
        %v2022 = vrot.slane %v2021, 4
        %v2023 = vadd.f32 %v2021, %v2022
        %v2024 = vrot.slane %v2023, 2
        %v2025 = vadd.f32 %v2023, %v2024
        %v2026 = vrot.slane %v2025, 1
        %v2027 = vadd.f32 %v2025, %v2026
        %v2028 = vadd.f32 %v1913, %v1915
        %v2029 = vrot.slane %v2028, 4
        %v2030 = vadd.f32 %v2028, %v2029
        %v2031 = vrot.slane %v2030, 2
        %v2032 = vadd.f32 %v2030, %v2031
        %v2033 = vrot.slane %v2032, 1
        %v2034 = vadd.f32 %v2032, %v2033
        %v2035 = vadd.f32 %v1917, %v1919
        %v2036 = vrot.slane %v2035, 4
        %v2037 = vadd.f32 %v2035, %v2036
        %v2038 = vrot.slane %v2037, 2
        %v2039 = vadd.f32 %v2037, %v2038
        %v2040 = vrot.slane %v2039, 1
        %v2041 = vadd.f32 %v2039, %v2040
        %v2042 = vadd.f32 %v1921, %v1923
        %v2043 = vrot.slane %v2042, 4
        %v2044 = vadd.f32 %v2042, %v2043
        %v2045 = vrot.slane %v2044, 2
        %v2046 = vadd.f32 %v2044, %v2045
        %v2047 = vrot.slane %v2046, 1
        %v2048 = vadd.f32 %v2046, %v2047
        %v2049 = vadd.f32 %v1925, %v1927
        %v2050 = vrot.slane %v2049, 4
        %v2051 = vadd.f32 %v2049, %v2050
        %v2052 = vrot.slane %v2051, 2
        %v2053 = vadd.f32 %v2051, %v2052
        %v2054 = vrot.slane %v2053, 1
        %v2055 = vadd.f32 %v2053, %v2054
        %v2056 = vadd.f32 %v1929, %v1931
        %v2057 = vrot.slane %v2056, 4
        %v2058 = vadd.f32 %v2056, %v2057
        %v2059 = vrot.slane %v2058, 2
        %v2060 = vadd.f32 %v2058, %v2059
        %v2061 = vrot.slane %v2060, 1
        %v2062 = vadd.f32 %v2060, %v2061
        %v2063 = vadd.f32 %v1933, %v1935
        %v2064 = vrot.slane %v2063, 4
        %v2065 = vadd.f32 %v2063, %v2064
        %v2066 = vrot.slane %v2065, 2
        %v2067 = vadd.f32 %v2065, %v2066
        %v2068 = vrot.slane %v2067, 1
        %v2069 = vadd.f32 %v2067, %v2068
        %v2070 = vadd.f32 %v1937, %v1939
        %v2071 = vrot.slane %v2070, 4
        %v2072 = vadd.f32 %v2070, %v2071
        %v2073 = vrot.slane %v2072, 2
        %v2074 = vadd.f32 %v2072, %v2073
        %v2075 = vrot.slane %v2074, 1
        %v2076 = vadd.f32 %v2074, %v2075
        %v2077 = vadd.f32 %v1941, %v1943
        %v2078 = vrot.slane %v2077, 4
        %v2079 = vadd.f32 %v2077, %v2078
        %v2080 = vrot.slane %v2079, 2
        %v2081 = vadd.f32 %v2079, %v2080
        %v2082 = vrot.slane %v2081, 1
        %v2083 = vadd.f32 %v2081, %v2082
        %v2084 = vadd.f32 %v1945, %v1947
        %v2085 = vrot.slane %v2084, 4
        %v2086 = vadd.f32 %v2084, %v2085
        %v2087 = vrot.slane %v2086, 2
        %v2088 = vadd.f32 %v2086, %v2087
        %v2089 = vrot.slane %v2088, 1
        %v2090 = vadd.f32 %v2088, %v2089
        %v2091 = vadd.f32 %v1949, %v1951
        %v2092 = vrot.slane %v2091, 4
        %v2093 = vadd.f32 %v2091, %v2092
        %v2094 = vrot.slane %v2093, 2
        %v2095 = vadd.f32 %v2093, %v2094
        %v2096 = vrot.slane %v2095, 1
        %v2097 = vadd.f32 %v2095, %v2096
        %v2098 = vadd.f32 %v1953, %v1955
        %v2099 = vrot.slane %v2098, 4
        %v2100 = vadd.f32 %v2098, %v2099
        %v2101 = vrot.slane %v2100, 2
        %v2102 = vadd.f32 %v2100, %v2101
        %v2103 = vrot.slane %v2102, 1
        %v2104 = vadd.f32 %v2102, %v2103
        %v2105 = vadd.f32 %v1957, %v1959
        %v2106 = vrot.slane %v2105, 4
        %v2107 = vadd.f32 %v2105, %v2106
        %v2108 = vrot.slane %v2107, 2
        %v2109 = vadd.f32 %v2107, %v2108
        %v2110 = vrot.slane %v2109, 1
        %v2111 = vadd.f32 %v2109, %v2110
        %v2112 = vadd.f32 %v1961, %v1963
        %v2113 = vrot.slane %v2112, 4
        %v2114 = vadd.f32 %v2112, %v2113
        %v2115 = vrot.slane %v2114, 2
        %v2116 = vadd.f32 %v2114, %v2115
        %v2117 = vrot.slane %v2116, 1
        %v2118 = vadd.f32 %v2116, %v2117
        %v2119 = vadd.f32 %v1965, %v1967
        %v2120 = vrot.slane %v2119, 4
        %v2121 = vadd.f32 %v2119, %v2120
        %v2122 = vrot.slane %v2121, 2
        %v2123 = vadd.f32 %v2121, %v2122
        %v2124 = vrot.slane %v2123, 1
        %v2125 = vadd.f32 %v2123, %v2124
        %v2126 = vadd.f32 %v1969, %v1971
        %v2127 = vrot.slane %v2126, 4
        %v2128 = vadd.f32 %v2126, %v2127
        %v2129 = vrot.slane %v2128, 2
        %v2130 = vadd.f32 %v2128, %v2129
        %v2131 = vrot.slane %v2130, 1
        %v2132 = vadd.f32 %v2130, %v2131
        %v2133 = vadd.f32 %v1973, %v1975
        %v2134 = vrot.slane %v2133, 4
        %v2135 = vadd.f32 %v2133, %v2134
        %v2136 = vrot.slane %v2135, 2
        %v2137 = vadd.f32 %v2135, %v2136
        %v2138 = vrot.slane %v2137, 1
        %v2139 = vadd.f32 %v2137, %v2138
        %v2140 = vadd.f32 %v1977, %v1979
        %v2141 = vrot.slane %v2140, 4
        %v2142 = vadd.f32 %v2140, %v2141
        %v2143 = vrot.slane %v2142, 2
        %v2144 = vadd.f32 %v2142, %v2143
        %v2145 = vrot.slane %v2144, 1
        %v2146 = vadd.f32 %v2144, %v2145
        %v2147 = vadd.f32 %v1981, %v1983
        %v2148 = vrot.slane %v2147, 4
        %v2149 = vadd.f32 %v2147, %v2148
        %v2150 = vrot.slane %v2149, 2
        %v2151 = vadd.f32 %v2149, %v2150
        %v2152 = vrot.slane %v2151, 1
        %v2153 = vadd.f32 %v2151, %v2152
        %v2154 = vadd.f32 %v1985, %v1987
        %v2155 = vrot.slane %v2154, 4
        %v2156 = vadd.f32 %v2154, %v2155
        %v2157 = vrot.slane %v2156, 2
        %v2158 = vadd.f32 %v2156, %v2157
        %v2159 = vrot.slane %v2158, 1
        %v2160 = vadd.f32 %v2158, %v2159
        %v2161 = vadd.f32 %v1989, %v1991
        %v2162 = vrot.slane %v2161, 4
        %v2163 = vadd.f32 %v2161, %v2162
        %v2164 = vrot.slane %v2163, 2
        %v2165 = vadd.f32 %v2163, %v2164
        %v2166 = vrot.slane %v2165, 1
        %v2167 = vadd.f32 %v2165, %v2166
        %v2168 = vadd.f32 %v1993, %v1995
        %v2169 = vrot.slane %v2168, 4
        %v2170 = vadd.f32 %v2168, %v2169
        %v2171 = vrot.slane %v2170, 2
        %v2172 = vadd.f32 %v2170, %v2171
        %v2173 = vrot.slane %v2172, 1
        %v2174 = vadd.f32 %v2172, %v2173
        %v2175 = vadd.f32 %v1997, %v1999
        %v2176 = vrot.slane %v2175, 4
        %v2177 = vadd.f32 %v2175, %v2176
        %v2178 = vrot.slane %v2177, 2
        %v2179 = vadd.f32 %v2177, %v2178
        %v2180 = vrot.slane %v2179, 1
        %v2181 = vadd.f32 %v2179, %v2180
        %2182 = vadd.xlane.f32.xlu0 %v1793
        %v2183 = vpop.xlane.xlu0 %2182
        %2184 = vadd.xlane.f32.xlu0 %v1795
        %v2185 = vpop.xlane.xlu0 %2184
        %2186 = vadd.xlane.f32.xlu0 %v1797
        %v2187 = vpop.xlane.xlu0 %2186
        %2188 = vadd.xlane.f32.xlu0 %v1799
        %v2189 = vpop.xlane.xlu0 %2188
        %2190 = vadd.xlane.f32.xlu0 %v1801
        %v2191 = vpop.xlane.xlu0 %2190
        %2192 = vadd.xlane.f32.xlu0 %v1803
        %v2193 = vpop.xlane.xlu0 %2192
        %2194 = vadd.xlane.f32.xlu0 %v1805
        %v2195 = vpop.xlane.xlu0 %2194
        %2196 = vadd.xlane.f32.xlu0 %v1807
        %v2197 = vpop.xlane.xlu0 %2196
        %2198 = vadd.xlane.f32.xlu0 %v1809
        %v2199 = vpop.xlane.xlu0 %2198
        %2200 = vadd.xlane.f32.xlu0 %v1811
        %v2201 = vpop.xlane.xlu0 %2200
        %2202 = vadd.xlane.f32.xlu0 %v1813
        %v2203 = vpop.xlane.xlu0 %2202
        %2204 = vadd.xlane.f32.xlu0 %v1815
        %v2205 = vpop.xlane.xlu0 %2204
        %2206 = vadd.xlane.f32.xlu0 %v1817
        %v2207 = vpop.xlane.xlu0 %2206
        %2208 = vadd.xlane.f32.xlu0 %v1819
        %v2209 = vpop.xlane.xlu0 %2208
        %2210 = vadd.xlane.f32.xlu0 %v1821
        %v2211 = vpop.xlane.xlu0 %2210
        %2212 = vadd.xlane.f32.xlu0 %v1823
        %v2213 = vpop.xlane.xlu0 %2212
        %2214 = vadd.xlane.f32.xlu0 %v1825
        %v2215 = vpop.xlane.xlu0 %2214
        %2216 = vadd.xlane.f32.xlu0 %v1827
        %v2217 = vpop.xlane.xlu0 %2216
        %2218 = vadd.xlane.f32.xlu0 %v1829
        %v2219 = vpop.xlane.xlu0 %2218
        %2220 = vadd.xlane.f32.xlu0 %v1831
        %v2221 = vpop.xlane.xlu0 %2220
        %2222 = vadd.xlane.f32.xlu0 %v1833
        %v2223 = vpop.xlane.xlu0 %2222
        %2224 = vadd.xlane.f32.xlu0 %v1835
        %v2225 = vpop.xlane.xlu0 %2224
        %2226 = vadd.xlane.f32.xlu0 %v1837
        %v2227 = vpop.xlane.xlu0 %2226
        %2228 = vadd.xlane.f32.xlu0 %v1839
        %v2229 = vpop.xlane.xlu0 %2228
        %2230 = vadd.xlane.f32.xlu0 %v1841
        %v2231 = vpop.xlane.xlu0 %2230
        %2232 = vadd.xlane.f32.xlu0 %v1843
        %v2233 = vpop.xlane.xlu0 %2232
        %2234 = vadd.xlane.f32.xlu0 %v1845
        %v2235 = vpop.xlane.xlu0 %2234
        %2236 = vadd.xlane.f32.xlu0 %v1847
        %v2237 = vpop.xlane.xlu0 %2236
        %2238 = vadd.xlane.f32.xlu0 %v1849
        %v2239 = vpop.xlane.xlu0 %2238
        %2240 = vadd.xlane.f32.xlu0 %v1851
        %v2241 = vpop.xlane.xlu0 %2240
        %2242 = vadd.xlane.f32.xlu0 %v1853
        %v2243 = vpop.xlane.xlu0 %2242
        %2244 = vadd.xlane.f32.xlu0 %v1855
        %v2245 = vpop.xlane.xlu0 %2244
        %2246 = vadd.xlane.f32.xlu0 %v1857
        %v2247 = vpop.xlane.xlu0 %2246
        %2248 = vadd.xlane.f32.xlu0 %v1859
        %v2249 = vpop.xlane.xlu0 %2248
        %2250 = vadd.xlane.f32.xlu0 %v1861
        %v2251 = vpop.xlane.xlu0 %2250
        %2252 = vadd.xlane.f32.xlu0 %v1863
        %v2253 = vpop.xlane.xlu0 %2252
        %2254 = vadd.xlane.f32.xlu0 %v1865
        %v2255 = vpop.xlane.xlu0 %2254
        %2256 = vadd.xlane.f32.xlu0 %v1867
        %v2257 = vpop.xlane.xlu0 %2256
        %2258 = vadd.xlane.f32.xlu0 %v1869
        %v2259 = vpop.xlane.xlu0 %2258
        %2260 = vadd.xlane.f32.xlu0 %v1871
        %v2261 = vpop.xlane.xlu0 %2260
        %2262 = vadd.xlane.f32.xlu0 %v1873
        %v2263 = vpop.xlane.xlu0 %2262
        %2264 = vadd.xlane.f32.xlu0 %v1875
        %v2265 = vpop.xlane.xlu0 %2264
        %2266 = vadd.xlane.f32.xlu0 %v1877
        %v2267 = vpop.xlane.xlu0 %2266
        %2268 = vadd.xlane.f32.xlu0 %v1879
        %v2269 = vpop.xlane.xlu0 %2268
        %2270 = vadd.xlane.f32.xlu0 %v1881
        %v2271 = vpop.xlane.xlu0 %2270
        %2272 = vadd.xlane.f32.xlu0 %v1883
        %v2273 = vpop.xlane.xlu0 %2272
        %2274 = vadd.xlane.f32.xlu0 %v1885
        %v2275 = vpop.xlane.xlu0 %2274
        %2276 = vadd.xlane.f32.xlu0 %v1887
        %v2277 = vpop.xlane.xlu0 %2276
        %2278 = vadd.xlane.f32.xlu0 %v1889
        %v2279 = vpop.xlane.xlu0 %2278
        %2280 = vadd.xlane.f32.xlu0 %v1891
        %v2281 = vpop.xlane.xlu0 %2280
        %2282 = vadd.xlane.f32.xlu0 %v1893
        %v2283 = vpop.xlane.xlu0 %2282
        %2284 = vadd.xlane.f32.xlu0 %v1895
        %v2285 = vpop.xlane.xlu0 %2284
        %v2286 = vadd.f32 %v2183, %v2185
        %v2287 = vrot.slane %v2286, 4
        %v2288 = vadd.f32 %v2286, %v2287
        %v2289 = vrot.slane %v2288, 2
        %v2290 = vadd.f32 %v2288, %v2289
        %v2291 = vrot.slane %v2290, 1
        %v2292 = vadd.f32 %v2290, %v2291
        %v2293 = vadd.f32 %v2187, %v2189
        %v2294 = vrot.slane %v2293, 4
        %v2295 = vadd.f32 %v2293, %v2294
        %v2296 = vrot.slane %v2295, 2
        %v2297 = vadd.f32 %v2295, %v2296
        %v2298 = vrot.slane %v2297, 1
        %v2299 = vadd.f32 %v2297, %v2298
        %v2300 = vadd.f32 %v2191, %v2193
        %v2301 = vrot.slane %v2300, 4
        %v2302 = vadd.f32 %v2300, %v2301
        %v2303 = vrot.slane %v2302, 2
        %v2304 = vadd.f32 %v2302, %v2303
        %v2305 = vrot.slane %v2304, 1
        %v2306 = vadd.f32 %v2304, %v2305
        %v2307 = vadd.f32 %v2195, %v2197
        %v2308 = vrot.slane %v2307, 4
        %v2309 = vadd.f32 %v2307, %v2308
        %v2310 = vrot.slane %v2309, 2
        %v2311 = vadd.f32 %v2309, %v2310
        %v2312 = vrot.slane %v2311, 1
        %v2313 = vadd.f32 %v2311, %v2312
        %v2314 = vadd.f32 %v2199, %v2201
        %v2315 = vrot.slane %v2314, 4
        %v2316 = vadd.f32 %v2314, %v2315
        %v2317 = vrot.slane %v2316, 2
        %v2318 = vadd.f32 %v2316, %v2317
        %v2319 = vrot.slane %v2318, 1
        %v2320 = vadd.f32 %v2318, %v2319
        %v2321 = vadd.f32 %v2203, %v2205
        %v2322 = vrot.slane %v2321, 4
        %v2323 = vadd.f32 %v2321, %v2322
        %v2324 = vrot.slane %v2323, 2
        %v2325 = vadd.f32 %v2323, %v2324
        %v2326 = vrot.slane %v2325, 1
        %v2327 = vadd.f32 %v2325, %v2326
        %v2328 = vadd.f32 %v2207, %v2209
        %v2329 = vrot.slane %v2328, 4
        %v2330 = vadd.f32 %v2328, %v2329
        %v2331 = vrot.slane %v2330, 2
        %v2332 = vadd.f32 %v2330, %v2331
        %v2333 = vrot.slane %v2332, 1
        %v2334 = vadd.f32 %v2332, %v2333
        %v2335 = vadd.f32 %v2211, %v2213
        %v2336 = vrot.slane %v2335, 4
        %v2337 = vadd.f32 %v2335, %v2336
        %v2338 = vrot.slane %v2337, 2
        %v2339 = vadd.f32 %v2337, %v2338
        %v2340 = vrot.slane %v2339, 1
        %v2341 = vadd.f32 %v2339, %v2340
        %v2342 = vadd.f32 %v2215, %v2217
        %v2343 = vrot.slane %v2342, 4
        %v2344 = vadd.f32 %v2342, %v2343
        %v2345 = vrot.slane %v2344, 2
        %v2346 = vadd.f32 %v2344, %v2345
        %v2347 = vrot.slane %v2346, 1
        %v2348 = vadd.f32 %v2346, %v2347
        %v2349 = vadd.f32 %v2219, %v2221
        %v2350 = vrot.slane %v2349, 4
        %v2351 = vadd.f32 %v2349, %v2350
        %v2352 = vrot.slane %v2351, 2
        %v2353 = vadd.f32 %v2351, %v2352
        %v2354 = vrot.slane %v2353, 1
        %v2355 = vadd.f32 %v2353, %v2354
        %v2356 = vadd.f32 %v2223, %v2225
        %v2357 = vrot.slane %v2356, 4
        %v2358 = vadd.f32 %v2356, %v2357
        %v2359 = vrot.slane %v2358, 2
        %v2360 = vadd.f32 %v2358, %v2359
        %v2361 = vrot.slane %v2360, 1
        %v2362 = vadd.f32 %v2360, %v2361
        %v2363 = vadd.f32 %v2227, %v2229
        %v2364 = vrot.slane %v2363, 4
        %v2365 = vadd.f32 %v2363, %v2364
        %v2366 = vrot.slane %v2365, 2
        %v2367 = vadd.f32 %v2365, %v2366
        %v2368 = vrot.slane %v2367, 1
        %v2369 = vadd.f32 %v2367, %v2368
        %v2370 = vadd.f32 %v2231, %v2233
        %v2371 = vrot.slane %v2370, 4
        %v2372 = vadd.f32 %v2370, %v2371
        %v2373 = vrot.slane %v2372, 2
        %v2374 = vadd.f32 %v2372, %v2373
        %v2375 = vrot.slane %v2374, 1
        %v2376 = vadd.f32 %v2374, %v2375
        %v2377 = vadd.f32 %v2235, %v2237
        %v2378 = vrot.slane %v2377, 4
        %v2379 = vadd.f32 %v2377, %v2378
        %v2380 = vrot.slane %v2379, 2
        %v2381 = vadd.f32 %v2379, %v2380
        %v2382 = vrot.slane %v2381, 1
        %v2383 = vadd.f32 %v2381, %v2382
        %v2384 = vadd.f32 %v2239, %v2241
        %v2385 = vrot.slane %v2384, 4
        %v2386 = vadd.f32 %v2384, %v2385
        %v2387 = vrot.slane %v2386, 2
        %v2388 = vadd.f32 %v2386, %v2387
        %v2389 = vrot.slane %v2388, 1
        %v2390 = vadd.f32 %v2388, %v2389
        %v2391 = vadd.f32 %v2243, %v2245
        %v2392 = vrot.slane %v2391, 4
        %v2393 = vadd.f32 %v2391, %v2392
        %v2394 = vrot.slane %v2393, 2
        %v2395 = vadd.f32 %v2393, %v2394
        %v2396 = vrot.slane %v2395, 1
        %v2397 = vadd.f32 %v2395, %v2396
        %v2398 = vadd.f32 %v2247, %v2249
        %v2399 = vrot.slane %v2398, 4
        %v2400 = vadd.f32 %v2398, %v2399
        %v2401 = vrot.slane %v2400, 2
        %v2402 = vadd.f32 %v2400, %v2401
        %v2403 = vrot.slane %v2402, 1
        %v2404 = vadd.f32 %v2402, %v2403
        %v2405 = vadd.f32 %v2251, %v2253
        %v2406 = vrot.slane %v2405, 4
        %v2407 = vadd.f32 %v2405, %v2406
        %v2408 = vrot.slane %v2407, 2
        %v2409 = vadd.f32 %v2407, %v2408
        %v2410 = vrot.slane %v2409, 1
        %v2411 = vadd.f32 %v2409, %v2410
        %v2412 = vadd.f32 %v2255, %v2257
        %v2413 = vrot.slane %v2412, 4
        %v2414 = vadd.f32 %v2412, %v2413
        %v2415 = vrot.slane %v2414, 2
        %v2416 = vadd.f32 %v2414, %v2415
        %v2417 = vrot.slane %v2416, 1
        %v2418 = vadd.f32 %v2416, %v2417
        %v2419 = vadd.f32 %v2259, %v2261
        %v2420 = vrot.slane %v2419, 4
        %v2421 = vadd.f32 %v2419, %v2420
        %v2422 = vrot.slane %v2421, 2
        %v2423 = vadd.f32 %v2421, %v2422
        %v2424 = vrot.slane %v2423, 1
        %v2425 = vadd.f32 %v2423, %v2424
        %v2426 = vadd.f32 %v2263, %v2265
        %v2427 = vrot.slane %v2426, 4
        %v2428 = vadd.f32 %v2426, %v2427
        %v2429 = vrot.slane %v2428, 2
        %v2430 = vadd.f32 %v2428, %v2429
        %v2431 = vrot.slane %v2430, 1
        %v2432 = vadd.f32 %v2430, %v2431
        %v2433 = vadd.f32 %v2267, %v2269
        %v2434 = vrot.slane %v2433, 4
        %v2435 = vadd.f32 %v2433, %v2434
        %v2436 = vrot.slane %v2435, 2
        %v2437 = vadd.f32 %v2435, %v2436
        %v2438 = vrot.slane %v2437, 1
        %v2439 = vadd.f32 %v2437, %v2438
        %v2440 = vadd.f32 %v2271, %v2273
        %v2441 = vrot.slane %v2440, 4
        %v2442 = vadd.f32 %v2440, %v2441
        %v2443 = vrot.slane %v2442, 2
        %v2444 = vadd.f32 %v2442, %v2443
        %v2445 = vrot.slane %v2444, 1
        %v2446 = vadd.f32 %v2444, %v2445
        %v2447 = vadd.f32 %v2275, %v2277
        %v2448 = vrot.slane %v2447, 4
        %v2449 = vadd.f32 %v2447, %v2448
        %v2450 = vrot.slane %v2449, 2
        %v2451 = vadd.f32 %v2449, %v2450
        %v2452 = vrot.slane %v2451, 1
        %v2453 = vadd.f32 %v2451, %v2452
        %v2454 = vadd.f32 %v2279, %v2281
        %v2455 = vrot.slane %v2454, 4
        %v2456 = vadd.f32 %v2454, %v2455
        %v2457 = vrot.slane %v2456, 2
        %v2458 = vadd.f32 %v2456, %v2457
        %v2459 = vrot.slane %v2458, 1
        %v2460 = vadd.f32 %v2458, %v2459
        %v2461 = vadd.f32 %v2283, %v2285
        %v2462 = vrot.slane %v2461, 4
        %v2463 = vadd.f32 %v2461, %v2462
        %v2464 = vrot.slane %v2463, 2
        %v2465 = vadd.f32 %v2463, %v2464
        %v2466 = vrot.slane %v2465, 1
        %v2467 = vadd.f32 %v2465, %v2466
        %v2468 = vsub.f32 %v1636, %v1298
        %v2469 = vsub.f32 %v1637, %v1299
        %v2470 = vsub.f32 %v1638, %v1300
        %v2471 = vsub.f32 %v1639, %v1301
        %v2472 = vsub.f32 %v1640, %v1302
        %v2473 = vsub.f32 %v1641, %v1303
        %v2474 = vsub.f32 %v1642, %v1304
        %v2475 = vsub.f32 %v1643, %v1305
        %v2476 = vsub.f32 %v1644, %v1306
        %v2477 = vsub.f32 %v1645, %v1307
        %v2478 = vsub.f32 %v1646, %v1308
        %v2479 = vsub.f32 %v1647, %v1309
        %v2480 = vsub.f32 %v1648, %v1310
        %v2481 = vsub.f32 %v1649, %v1311
        %v2482 = vsub.f32 %v1650, %v1312
        %v2483 = vsub.f32 %v1651, %v1313
        %v2484 = vsub.f32 %v1652, %v1314
        %v2485 = vsub.f32 %v1653, %v1315
        %v2486 = vsub.f32 %v1654, %v1316
        %v2487 = vsub.f32 %v1655, %v1317
        %v2488 = vsub.f32 %v1656, %v1318
        %v2489 = vsub.f32 %v1657, %v1319
        %v2490 = vsub.f32 %v1658, %v1320
        %v2491 = vsub.f32 %v1659, %v1321
        %v2492 = vsub.f32 %v1660, %v1322
        %v2493 = vsub.f32 %v1661, %v1323
        %v2494 = vsub.f32 %v1662, %v1324
        %v2495 = vsub.f32 %v1663, %v1325
        %v2496 = vsub.f32 %v1664, %v1326
        %v2497 = vsub.f32 %v1665, %v1327
        %v2498 = vsub.f32 %v1666, %v1328
        %v2499 = vsub.f32 %v1667, %v1329
        %v2500 = vsub.f32 %v1668, %v1330
        %v2501 = vsub.f32 %v1669, %v1331
        %v2502 = vsub.f32 %v1670, %v1332
        %v2503 = vsub.f32 %v1671, %v1333
        %v2504 = vsub.f32 %v1672, %v1334
        %v2505 = vsub.f32 %v1673, %v1335
        %v2506 = vsub.f32 %v1674, %v1336
        %v2507 = vsub.f32 %v1675, %v1337
        %v2508 = vsub.f32 %v1676, %v1338
        %v2509 = vsub.f32 %v1677, %v1339
        %v2510 = vsub.f32 %v1678, %v1340
        %v2511 = vsub.f32 %v1679, %v1341
        %v2512 = vsub.f32 %v1680, %v1342
        %v2513 = vsub.f32 %v1681, %v1343
        %v2514 = vsub.f32 %v1682, %v1344
        %v2515 = vsub.f32 %v1683, %v1345
        %v2516 = vsub.f32 %v1684, %v1346
        %v2517 = vsub.f32 %v1685, %v1347
        %v2518 = vsub.f32 %v1686, %v1348
        %v2519 = vsub.f32 %v1687, %v1349
        %v2520 = vmul.f32 %v1793, %v2468
        %v2521 = vmul.f32 %v1795, %v2469
        %v2522 = vmul.f32 %v1797, %v2470
        %v2523 = vmul.f32 %v1799, %v2471
        %v2524 = vmul.f32 %v1801, %v2472
        %v2525 = vmul.f32 %v1803, %v2473
        %v2526 = vmul.f32 %v1805, %v2474
        %v2527 = vmul.f32 %v1807, %v2475
        %v2528 = vmul.f32 %v1809, %v2476
        %v2529 = vmul.f32 %v1811, %v2477
        %v2530 = vmul.f32 %v1813, %v2478
        %v2531 = vmul.f32 %v1815, %v2479
        %v2532 = vmul.f32 %v1817, %v2480
        %v2533 = vmul.f32 %v1819, %v2481
        %v2534 = vmul.f32 %v1821, %v2482
        %v2535 = vmul.f32 %v1823, %v2483
        %v2536 = vmul.f32 %v1825, %v2484
        %v2537 = vmul.f32 %v1827, %v2485
        %v2538 = vmul.f32 %v1829, %v2486
        %v2539 = vmul.f32 %v1831, %v2487
        %v2540 = vmul.f32 %v1833, %v2488
        %v2541 = vmul.f32 %v1835, %v2489
        %v2542 = vmul.f32 %v1837, %v2490
        %v2543 = vmul.f32 %v1839, %v2491
        %v2544 = vmul.f32 %v1841, %v2492
        %v2545 = vmul.f32 %v1843, %v2493
        %v2546 = vmul.f32 %v1845, %v2494
        %v2547 = vmul.f32 %v1847, %v2495
        %v2548 = vmul.f32 %v1849, %v2496
        %v2549 = vmul.f32 %v1851, %v2497
        %v2550 = vmul.f32 %v1853, %v2498
        %v2551 = vmul.f32 %v1855, %v2499
        %v2552 = vmul.f32 %v1857, %v2500
        %v2553 = vmul.f32 %v1859, %v2501
        %v2554 = vmul.f32 %v1861, %v2502
        %v2555 = vmul.f32 %v1863, %v2503
        %v2556 = vmul.f32 %v1865, %v2504
        %v2557 = vmul.f32 %v1867, %v2505
        %v2558 = vmul.f32 %v1869, %v2506
        %v2559 = vmul.f32 %v1871, %v2507
        %v2560 = vmul.f32 %v1873, %v2508
        %v2561 = vmul.f32 %v1875, %v2509
        %v2562 = vmul.f32 %v1877, %v2510
        %v2563 = vmul.f32 %v1879, %v2511
        %v2564 = vmul.f32 %v1881, %v2512
        %v2565 = vmul.f32 %v1883, %v2513
        %v2566 = vmul.f32 %v1885, %v2514
        %v2567 = vmul.f32 %v1887, %v2515
        %v2568 = vmul.f32 %v1889, %v2516
        %v2569 = vmul.f32 %v1891, %v2517
        %v2570 = vmul.f32 %v1893, %v2518
        %v2571 = vmul.f32 %v1895, %v2519
        %2572 = vadd.xlane.f32.xlu0 %v2520
        %v2573 = vpop.xlane.xlu0 %2572
        %2574 = vadd.xlane.f32.xlu0 %v2521
        %v2575 = vpop.xlane.xlu0 %2574
        %2576 = vadd.xlane.f32.xlu0 %v2522
        %v2577 = vpop.xlane.xlu0 %2576
        %2578 = vadd.xlane.f32.xlu0 %v2523
        %v2579 = vpop.xlane.xlu0 %2578
        %2580 = vadd.xlane.f32.xlu0 %v2524
        %v2581 = vpop.xlane.xlu0 %2580
        %2582 = vadd.xlane.f32.xlu0 %v2525
        %v2583 = vpop.xlane.xlu0 %2582
        %2584 = vadd.xlane.f32.xlu0 %v2526
        %v2585 = vpop.xlane.xlu0 %2584
        %2586 = vadd.xlane.f32.xlu0 %v2527
        %v2587 = vpop.xlane.xlu0 %2586
        %2588 = vadd.xlane.f32.xlu0 %v2528
        %v2589 = vpop.xlane.xlu0 %2588
        %2590 = vadd.xlane.f32.xlu0 %v2529
        %v2591 = vpop.xlane.xlu0 %2590
        %2592 = vadd.xlane.f32.xlu0 %v2530
        %v2593 = vpop.xlane.xlu0 %2592
        %2594 = vadd.xlane.f32.xlu0 %v2531
        %v2595 = vpop.xlane.xlu0 %2594
        %2596 = vadd.xlane.f32.xlu0 %v2532
        %v2597 = vpop.xlane.xlu0 %2596
        %2598 = vadd.xlane.f32.xlu0 %v2533
        %v2599 = vpop.xlane.xlu0 %2598
        %2600 = vadd.xlane.f32.xlu0 %v2534
        %v2601 = vpop.xlane.xlu0 %2600
        %2602 = vadd.xlane.f32.xlu0 %v2535
        %v2603 = vpop.xlane.xlu0 %2602
        %2604 = vadd.xlane.f32.xlu0 %v2536
        %v2605 = vpop.xlane.xlu0 %2604
        %2606 = vadd.xlane.f32.xlu0 %v2537
        %v2607 = vpop.xlane.xlu0 %2606
        %2608 = vadd.xlane.f32.xlu0 %v2538
        %v2609 = vpop.xlane.xlu0 %2608
        %2610 = vadd.xlane.f32.xlu0 %v2539
        %v2611 = vpop.xlane.xlu0 %2610
        %2612 = vadd.xlane.f32.xlu0 %v2540
        %v2613 = vpop.xlane.xlu0 %2612
        %2614 = vadd.xlane.f32.xlu0 %v2541
        %v2615 = vpop.xlane.xlu0 %2614
        %2616 = vadd.xlane.f32.xlu0 %v2542
        %v2617 = vpop.xlane.xlu0 %2616
        %2618 = vadd.xlane.f32.xlu0 %v2543
        %v2619 = vpop.xlane.xlu0 %2618
        %2620 = vadd.xlane.f32.xlu0 %v2544
        %v2621 = vpop.xlane.xlu0 %2620
        %2622 = vadd.xlane.f32.xlu0 %v2545
        %v2623 = vpop.xlane.xlu0 %2622
        %2624 = vadd.xlane.f32.xlu0 %v2546
        %v2625 = vpop.xlane.xlu0 %2624
        %2626 = vadd.xlane.f32.xlu0 %v2547
        %v2627 = vpop.xlane.xlu0 %2626
        %2628 = vadd.xlane.f32.xlu0 %v2548
        %v2629 = vpop.xlane.xlu0 %2628
        %2630 = vadd.xlane.f32.xlu0 %v2549
        %v2631 = vpop.xlane.xlu0 %2630
        %2632 = vadd.xlane.f32.xlu0 %v2550
        %v2633 = vpop.xlane.xlu0 %2632
        %2634 = vadd.xlane.f32.xlu0 %v2551
        %v2635 = vpop.xlane.xlu0 %2634
        %2636 = vadd.xlane.f32.xlu0 %v2552
        %v2637 = vpop.xlane.xlu0 %2636
        %2638 = vadd.xlane.f32.xlu0 %v2553
        %v2639 = vpop.xlane.xlu0 %2638
        %2640 = vadd.xlane.f32.xlu0 %v2554
        %v2641 = vpop.xlane.xlu0 %2640
        %2642 = vadd.xlane.f32.xlu0 %v2555
        %v2643 = vpop.xlane.xlu0 %2642
        %2644 = vadd.xlane.f32.xlu0 %v2556
        %v2645 = vpop.xlane.xlu0 %2644
        %2646 = vadd.xlane.f32.xlu0 %v2557
        %v2647 = vpop.xlane.xlu0 %2646
        %2648 = vadd.xlane.f32.xlu0 %v2558
        %v2649 = vpop.xlane.xlu0 %2648
        %2650 = vadd.xlane.f32.xlu0 %v2559
        %v2651 = vpop.xlane.xlu0 %2650
        %2652 = vadd.xlane.f32.xlu0 %v2560
        %v2653 = vpop.xlane.xlu0 %2652
        %2654 = vadd.xlane.f32.xlu0 %v2561
        %v2655 = vpop.xlane.xlu0 %2654
        %2656 = vadd.xlane.f32.xlu0 %v2562
        %v2657 = vpop.xlane.xlu0 %2656
        %2658 = vadd.xlane.f32.xlu0 %v2563
        %v2659 = vpop.xlane.xlu0 %2658
        %2660 = vadd.xlane.f32.xlu0 %v2564
        %v2661 = vpop.xlane.xlu0 %2660
        %2662 = vadd.xlane.f32.xlu0 %v2565
        %v2663 = vpop.xlane.xlu0 %2662
        %2664 = vadd.xlane.f32.xlu0 %v2566
        %v2665 = vpop.xlane.xlu0 %2664
        %2666 = vadd.xlane.f32.xlu0 %v2567
        %v2667 = vpop.xlane.xlu0 %2666
        %2668 = vadd.xlane.f32.xlu0 %v2568
        %v2669 = vpop.xlane.xlu0 %2668
        %2670 = vadd.xlane.f32.xlu0 %v2569
        %v2671 = vpop.xlane.xlu0 %2670
        %2672 = vadd.xlane.f32.xlu0 %v2570
        %v2673 = vpop.xlane.xlu0 %2672
        %2674 = vadd.xlane.f32.xlu0 %v2571
        %v2675 = vpop.xlane.xlu0 %2674
        %v2676 = vadd.f32 %v2573, %v2575
        %v2677 = vrot.slane %v2676, 4
        %v2678 = vadd.f32 %v2676, %v2677
        %v2679 = vrot.slane %v2678, 2
        %v2680 = vadd.f32 %v2678, %v2679
        %v2681 = vrot.slane %v2680, 1
        %v2682 = vadd.f32 %v2680, %v2681
        %v2683 = vadd.f32 %v2577, %v2579
        %v2684 = vrot.slane %v2683, 4
        %v2685 = vadd.f32 %v2683, %v2684
        %v2686 = vrot.slane %v2685, 2
        %v2687 = vadd.f32 %v2685, %v2686
        %v2688 = vrot.slane %v2687, 1
        %v2689 = vadd.f32 %v2687, %v2688
        %v2690 = vadd.f32 %v2581, %v2583
        %v2691 = vrot.slane %v2690, 4
        %v2692 = vadd.f32 %v2690, %v2691
        %v2693 = vrot.slane %v2692, 2
        %v2694 = vadd.f32 %v2692, %v2693
        %v2695 = vrot.slane %v2694, 1
        %v2696 = vadd.f32 %v2694, %v2695
        %v2697 = vadd.f32 %v2585, %v2587
        %v2698 = vrot.slane %v2697, 4
        %v2699 = vadd.f32 %v2697, %v2698
        %v2700 = vrot.slane %v2699, 2
        %v2701 = vadd.f32 %v2699, %v2700
        %v2702 = vrot.slane %v2701, 1
        %v2703 = vadd.f32 %v2701, %v2702
        %v2704 = vadd.f32 %v2589, %v2591
        %v2705 = vrot.slane %v2704, 4
        %v2706 = vadd.f32 %v2704, %v2705
        %v2707 = vrot.slane %v2706, 2
        %v2708 = vadd.f32 %v2706, %v2707
        %v2709 = vrot.slane %v2708, 1
        %v2710 = vadd.f32 %v2708, %v2709
        %v2711 = vadd.f32 %v2593, %v2595
        %v2712 = vrot.slane %v2711, 4
        %v2713 = vadd.f32 %v2711, %v2712
        %v2714 = vrot.slane %v2713, 2
        %v2715 = vadd.f32 %v2713, %v2714
        %v2716 = vrot.slane %v2715, 1
        %v2717 = vadd.f32 %v2715, %v2716
        %v2718 = vadd.f32 %v2597, %v2599
        %v2719 = vrot.slane %v2718, 4
        %v2720 = vadd.f32 %v2718, %v2719
        %v2721 = vrot.slane %v2720, 2
        %v2722 = vadd.f32 %v2720, %v2721
        %v2723 = vrot.slane %v2722, 1
        %v2724 = vadd.f32 %v2722, %v2723
        %v2725 = vadd.f32 %v2601, %v2603
        %v2726 = vrot.slane %v2725, 4
        %v2727 = vadd.f32 %v2725, %v2726
        %v2728 = vrot.slane %v2727, 2
        %v2729 = vadd.f32 %v2727, %v2728
        %v2730 = vrot.slane %v2729, 1
        %v2731 = vadd.f32 %v2729, %v2730
        %v2732 = vadd.f32 %v2605, %v2607
        %v2733 = vrot.slane %v2732, 4
        %v2734 = vadd.f32 %v2732, %v2733
        %v2735 = vrot.slane %v2734, 2
        %v2736 = vadd.f32 %v2734, %v2735
        %v2737 = vrot.slane %v2736, 1
        %v2738 = vadd.f32 %v2736, %v2737
        %v2739 = vadd.f32 %v2609, %v2611
        %v2740 = vrot.slane %v2739, 4
        %v2741 = vadd.f32 %v2739, %v2740
        %v2742 = vrot.slane %v2741, 2
        %v2743 = vadd.f32 %v2741, %v2742
        %v2744 = vrot.slane %v2743, 1
        %v2745 = vadd.f32 %v2743, %v2744
        %v2746 = vadd.f32 %v2613, %v2615
        %v2747 = vrot.slane %v2746, 4
        %v2748 = vadd.f32 %v2746, %v2747
        %v2749 = vrot.slane %v2748, 2
        %v2750 = vadd.f32 %v2748, %v2749
        %v2751 = vrot.slane %v2750, 1
        %v2752 = vadd.f32 %v2750, %v2751
        %v2753 = vadd.f32 %v2617, %v2619
        %v2754 = vrot.slane %v2753, 4
        %v2755 = vadd.f32 %v2753, %v2754
        %v2756 = vrot.slane %v2755, 2
        %v2757 = vadd.f32 %v2755, %v2756
        %v2758 = vrot.slane %v2757, 1
        %v2759 = vadd.f32 %v2757, %v2758
        %v2760 = vadd.f32 %v2621, %v2623
        %v2761 = vrot.slane %v2760, 4
        %v2762 = vadd.f32 %v2760, %v2761
        %v2763 = vrot.slane %v2762, 2
        %v2764 = vadd.f32 %v2762, %v2763
        %v2765 = vrot.slane %v2764, 1
        %v2766 = vadd.f32 %v2764, %v2765
        %v2767 = vadd.f32 %v2625, %v2627
        %v2768 = vrot.slane %v2767, 4
        %v2769 = vadd.f32 %v2767, %v2768
        %v2770 = vrot.slane %v2769, 2
        %v2771 = vadd.f32 %v2769, %v2770
        %v2772 = vrot.slane %v2771, 1
        %v2773 = vadd.f32 %v2771, %v2772
        %v2774 = vadd.f32 %v2629, %v2631
        %v2775 = vrot.slane %v2774, 4
        %v2776 = vadd.f32 %v2774, %v2775
        %v2777 = vrot.slane %v2776, 2
        %v2778 = vadd.f32 %v2776, %v2777
        %v2779 = vrot.slane %v2778, 1
        %v2780 = vadd.f32 %v2778, %v2779
        %v2781 = vadd.f32 %v2633, %v2635
        %v2782 = vrot.slane %v2781, 4
        %v2783 = vadd.f32 %v2781, %v2782
        %v2784 = vrot.slane %v2783, 2
        %v2785 = vadd.f32 %v2783, %v2784
        %v2786 = vrot.slane %v2785, 1
        %v2787 = vadd.f32 %v2785, %v2786
        %v2788 = vadd.f32 %v2637, %v2639
        %v2789 = vrot.slane %v2788, 4
        %v2790 = vadd.f32 %v2788, %v2789
        %v2791 = vrot.slane %v2790, 2
        %v2792 = vadd.f32 %v2790, %v2791
        %v2793 = vrot.slane %v2792, 1
        %v2794 = vadd.f32 %v2792, %v2793
        %v2795 = vadd.f32 %v2641, %v2643
        %v2796 = vrot.slane %v2795, 4
        %v2797 = vadd.f32 %v2795, %v2796
        %v2798 = vrot.slane %v2797, 2
        %v2799 = vadd.f32 %v2797, %v2798
        %v2800 = vrot.slane %v2799, 1
        %v2801 = vadd.f32 %v2799, %v2800
        %v2802 = vadd.f32 %v2645, %v2647
        %v2803 = vrot.slane %v2802, 4
        %v2804 = vadd.f32 %v2802, %v2803
        %v2805 = vrot.slane %v2804, 2
        %v2806 = vadd.f32 %v2804, %v2805
        %v2807 = vrot.slane %v2806, 1
        %v2808 = vadd.f32 %v2806, %v2807
        %v2809 = vadd.f32 %v2649, %v2651
        %v2810 = vrot.slane %v2809, 4
        %v2811 = vadd.f32 %v2809, %v2810
        %v2812 = vrot.slane %v2811, 2
        %v2813 = vadd.f32 %v2811, %v2812
        %v2814 = vrot.slane %v2813, 1
        %v2815 = vadd.f32 %v2813, %v2814
        %v2816 = vadd.f32 %v2653, %v2655
        %v2817 = vrot.slane %v2816, 4
        %v2818 = vadd.f32 %v2816, %v2817
        %v2819 = vrot.slane %v2818, 2
        %v2820 = vadd.f32 %v2818, %v2819
        %v2821 = vrot.slane %v2820, 1
        %v2822 = vadd.f32 %v2820, %v2821
        %v2823 = vadd.f32 %v2657, %v2659
        %v2824 = vrot.slane %v2823, 4
        %v2825 = vadd.f32 %v2823, %v2824
        %v2826 = vrot.slane %v2825, 2
        %v2827 = vadd.f32 %v2825, %v2826
        %v2828 = vrot.slane %v2827, 1
        %v2829 = vadd.f32 %v2827, %v2828
        %v2830 = vadd.f32 %v2661, %v2663
        %v2831 = vrot.slane %v2830, 4
        %v2832 = vadd.f32 %v2830, %v2831
        %v2833 = vrot.slane %v2832, 2
        %v2834 = vadd.f32 %v2832, %v2833
        %v2835 = vrot.slane %v2834, 1
        %v2836 = vadd.f32 %v2834, %v2835
        %v2837 = vadd.f32 %v2665, %v2667
        %v2838 = vrot.slane %v2837, 4
        %v2839 = vadd.f32 %v2837, %v2838
        %v2840 = vrot.slane %v2839, 2
        %v2841 = vadd.f32 %v2839, %v2840
        %v2842 = vrot.slane %v2841, 1
        %v2843 = vadd.f32 %v2841, %v2842
        %v2844 = vadd.f32 %v2669, %v2671
        %v2845 = vrot.slane %v2844, 4
        %v2846 = vadd.f32 %v2844, %v2845
        %v2847 = vrot.slane %v2846, 2
        %v2848 = vadd.f32 %v2846, %v2847
        %v2849 = vrot.slane %v2848, 1
        %v2850 = vadd.f32 %v2848, %v2849
        %v2851 = vadd.f32 %v2673, %v2675
        %v2852 = vrot.slane %v2851, 4
        %v2853 = vadd.f32 %v2851, %v2852
        %v2854 = vrot.slane %v2853, 2
        %v2855 = vadd.f32 %v2853, %v2854
        %v2856 = vrot.slane %v2855, 1
        %v2857 = vadd.f32 %v2855, %v2856
        %v2858 = vrcp.pop %v2292
        %v2859 = vmul.f32 %v2292, %v2858
        %v2860 = vsub.f32 1.0, %v2859
        %v2861 = vmul.f32 %v2858, %v2860
        %v2862 = vadd.f32 %v2858, %v2861
        %vm2863 = vweird.f32 %v2292
        %vm2864 = vweird.f32 %v2858
        %vm2865 = vmor %vm2863, %vm2864
        %v2866 = vsel %vm2865, %v2858, %v2862
        %v2867 = vand.u32 2147483647, %v2292
        %vm2868 = vcmp.eq.f32.partialorder %v2867, 8.507059e+37
        %v2869 = vand.u32 %v2292, 2147483648
        %v2870 = vor.u32 1.1754944e-38, %v2869
        %v2871 = vsel %vm2868, %v2870, %v2866
        %v2872 = vmul.f32 %v2682, %v2871
        %v2873 = vrcp.pop %v2299
        %v2874 = vmul.f32 %v2299, %v2873
        %v2875 = vsub.f32 1.0, %v2874
        %v2876 = vmul.f32 %v2873, %v2875
        %v2877 = vadd.f32 %v2873, %v2876
        %vm2878 = vweird.f32 %v2299
        %vm2879 = vweird.f32 %v2873
        %vm2880 = vmor %vm2878, %vm2879
        %v2881 = vsel %vm2880, %v2873, %v2877
        %v2882 = vand.u32 2147483647, %v2299
        %vm2883 = vcmp.eq.f32.partialorder %v2882, 8.507059e+37
        %v2884 = vand.u32 %v2299, 2147483648
        %v2885 = vor.u32 1.1754944e-38, %v2884
        %v2886 = vsel %vm2883, %v2885, %v2881
        %v2887 = vmul.f32 %v2689, %v2886
        %v2888 = vrcp.pop %v2306
        %v2889 = vmul.f32 %v2306, %v2888
        %v2890 = vsub.f32 1.0, %v2889
        %v2891 = vmul.f32 %v2888, %v2890
        %v2892 = vadd.f32 %v2888, %v2891
        %vm2893 = vweird.f32 %v2306
        %vm2894 = vweird.f32 %v2888
        %vm2895 = vmor %vm2893, %vm2894
        %v2896 = vsel %vm2895, %v2888, %v2892
        %v2897 = vand.u32 2147483647, %v2306
        %vm2898 = vcmp.eq.f32.partialorder %v2897, 8.507059e+37
        %v2899 = vand.u32 %v2306, 2147483648
        %v2900 = vor.u32 1.1754944e-38, %v2899
        %v2901 = vsel %vm2898, %v2900, %v2896
        %v2902 = vmul.f32 %v2696, %v2901
        %v2903 = vrcp.pop %v2313
        %v2904 = vmul.f32 %v2313, %v2903
        %v2905 = vsub.f32 1.0, %v2904
        %v2906 = vmul.f32 %v2903, %v2905
        %v2907 = vadd.f32 %v2903, %v2906
        %vm2908 = vweird.f32 %v2313
        %vm2909 = vweird.f32 %v2903
        %vm2910 = vmor %vm2908, %vm2909
        %v2911 = vsel %vm2910, %v2903, %v2907
        %v2912 = vand.u32 2147483647, %v2313
        %vm2913 = vcmp.eq.f32.partialorder %v2912, 8.507059e+37
        %v2914 = vand.u32 %v2313, 2147483648
        %v2915 = vor.u32 1.1754944e-38, %v2914
        %v2916 = vsel %vm2913, %v2915, %v2911
        %v2917 = vmul.f32 %v2703, %v2916
        %v2918 = vrcp.pop %v2320
        %v2919 = vmul.f32 %v2320, %v2918
        %v2920 = vsub.f32 1.0, %v2919
        %v2921 = vmul.f32 %v2918, %v2920
        %v2922 = vadd.f32 %v2918, %v2921
        %vm2923 = vweird.f32 %v2320
        %vm2924 = vweird.f32 %v2918
        %vm2925 = vmor %vm2923, %vm2924
        %v2926 = vsel %vm2925, %v2918, %v2922
        %v2927 = vand.u32 2147483647, %v2320
        %vm2928 = vcmp.eq.f32.partialorder %v2927, 8.507059e+37
        %v2929 = vand.u32 %v2320, 2147483648
        %v2930 = vor.u32 1.1754944e-38, %v2929
        %v2931 = vsel %vm2928, %v2930, %v2926
        %v2932 = vmul.f32 %v2710, %v2931
        %v2933 = vrcp.pop %v2327
        %v2934 = vmul.f32 %v2327, %v2933
        %v2935 = vsub.f32 1.0, %v2934
        %v2936 = vmul.f32 %v2933, %v2935
        %v2937 = vadd.f32 %v2933, %v2936
        %vm2938 = vweird.f32 %v2327
        %vm2939 = vweird.f32 %v2933
        %vm2940 = vmor %vm2938, %vm2939
        %v2941 = vsel %vm2940, %v2933, %v2937
        %v2942 = vand.u32 2147483647, %v2327
        %vm2943 = vcmp.eq.f32.partialorder %v2942, 8.507059e+37
        %v2944 = vand.u32 %v2327, 2147483648
        %v2945 = vor.u32 1.1754944e-38, %v2944
        %v2946 = vsel %vm2943, %v2945, %v2941
        %v2947 = vmul.f32 %v2717, %v2946
        %v2948 = vrcp.pop %v2334
        %v2949 = vmul.f32 %v2334, %v2948
        %v2950 = vsub.f32 1.0, %v2949
        %v2951 = vmul.f32 %v2948, %v2950
        %v2952 = vadd.f32 %v2948, %v2951
        %vm2953 = vweird.f32 %v2334
        %vm2954 = vweird.f32 %v2948
        %vm2955 = vmor %vm2953, %vm2954
        %v2956 = vsel %vm2955, %v2948, %v2952
        %v2957 = vand.u32 2147483647, %v2334
        %vm2958 = vcmp.eq.f32.partialorder %v2957, 8.507059e+37
        %v2959 = vand.u32 %v2334, 2147483648
        %v2960 = vor.u32 1.1754944e-38, %v2959
        %v2961 = vsel %vm2958, %v2960, %v2956
        %v2962 = vmul.f32 %v2724, %v2961
        %v2963 = vrcp.pop %v2341
        %v2964 = vmul.f32 %v2341, %v2963
        %v2965 = vsub.f32 1.0, %v2964
        %v2966 = vmul.f32 %v2963, %v2965
        %v2967 = vadd.f32 %v2963, %v2966
        %vm2968 = vweird.f32 %v2341
        %vm2969 = vweird.f32 %v2963
        %vm2970 = vmor %vm2968, %vm2969
        %v2971 = vsel %vm2970, %v2963, %v2967
        %v2972 = vand.u32 2147483647, %v2341
        %vm2973 = vcmp.eq.f32.partialorder %v2972, 8.507059e+37
        %v2974 = vand.u32 %v2341, 2147483648
        %v2975 = vor.u32 1.1754944e-38, %v2974
        %v2976 = vsel %vm2973, %v2975, %v2971
        %v2977 = vmul.f32 %v2731, %v2976
        %v2978 = vrcp.pop %v2348
        %v2979 = vmul.f32 %v2348, %v2978
        %v2980 = vsub.f32 1.0, %v2979
        %v2981 = vmul.f32 %v2978, %v2980
        %v2982 = vadd.f32 %v2978, %v2981
        %vm2983 = vweird.f32 %v2348
        %vm2984 = vweird.f32 %v2978
        %vm2985 = vmor %vm2983, %vm2984
        %v2986 = vsel %vm2985, %v2978, %v2982
        %v2987 = vand.u32 2147483647, %v2348
        %vm2988 = vcmp.eq.f32.partialorder %v2987, 8.507059e+37
        %v2989 = vand.u32 %v2348, 2147483648
        %v2990 = vor.u32 1.1754944e-38, %v2989
        %v2991 = vsel %vm2988, %v2990, %v2986
        %v2992 = vmul.f32 %v2738, %v2991
        %v2993 = vrcp.pop %v2355
        %v2994 = vmul.f32 %v2355, %v2993
        %v2995 = vsub.f32 1.0, %v2994
        %v2996 = vmul.f32 %v2993, %v2995
        %v2997 = vadd.f32 %v2993, %v2996
        %vm2998 = vweird.f32 %v2355
        %vm2999 = vweird.f32 %v2993
        %vm3000 = vmor %vm2998, %vm2999
        %v3001 = vsel %vm3000, %v2993, %v2997
        %v3002 = vand.u32 2147483647, %v2355
        %vm3003 = vcmp.eq.f32.partialorder %v3002, 8.507059e+37
        %v3004 = vand.u32 %v2355, 2147483648
        %v3005 = vor.u32 1.1754944e-38, %v3004
        %v3006 = vsel %vm3003, %v3005, %v3001
        %v3007 = vmul.f32 %v2745, %v3006
        %v3008 = vrcp.pop %v2362
        %v3009 = vmul.f32 %v2362, %v3008
        %v3010 = vsub.f32 1.0, %v3009
        %v3011 = vmul.f32 %v3008, %v3010
        %v3012 = vadd.f32 %v3008, %v3011
        %vm3013 = vweird.f32 %v2362
        %vm3014 = vweird.f32 %v3008
        %vm3015 = vmor %vm3013, %vm3014
        %v3016 = vsel %vm3015, %v3008, %v3012
        %v3017 = vand.u32 2147483647, %v2362
        %vm3018 = vcmp.eq.f32.partialorder %v3017, 8.507059e+37
        %v3019 = vand.u32 %v2362, 2147483648
        %v3020 = vor.u32 1.1754944e-38, %v3019
        %v3021 = vsel %vm3018, %v3020, %v3016
        %v3022 = vmul.f32 %v2752, %v3021
        %v3023 = vrcp.pop %v2369
        %v3024 = vmul.f32 %v2369, %v3023
        %v3025 = vsub.f32 1.0, %v3024
        %v3026 = vmul.f32 %v3023, %v3025
        %v3027 = vadd.f32 %v3023, %v3026
        %vm3028 = vweird.f32 %v2369
        %vm3029 = vweird.f32 %v3023
        %vm3030 = vmor %vm3028, %vm3029
        %v3031 = vsel %vm3030, %v3023, %v3027
        %v3032 = vand.u32 2147483647, %v2369
        %vm3033 = vcmp.eq.f32.partialorder %v3032, 8.507059e+37
        %v3034 = vand.u32 %v2369, 2147483648
        %v3035 = vor.u32 1.1754944e-38, %v3034
        %v3036 = vsel %vm3033, %v3035, %v3031
        %v3037 = vmul.f32 %v2759, %v3036
        %v3038 = vrcp.pop %v2376
        %v3039 = vmul.f32 %v2376, %v3038
        %v3040 = vsub.f32 1.0, %v3039
        %v3041 = vmul.f32 %v3038, %v3040
        %v3042 = vadd.f32 %v3038, %v3041
        %vm3043 = vweird.f32 %v2376
        %vm3044 = vweird.f32 %v3038
        %vm3045 = vmor %vm3043, %vm3044
        %v3046 = vsel %vm3045, %v3038, %v3042
        %v3047 = vand.u32 2147483647, %v2376
        %vm3048 = vcmp.eq.f32.partialorder %v3047, 8.507059e+37
        %v3049 = vand.u32 %v2376, 2147483648
        %v3050 = vor.u32 1.1754944e-38, %v3049
        %v3051 = vsel %vm3048, %v3050, %v3046
        %v3052 = vmul.f32 %v2766, %v3051
        %v3053 = vrcp.pop %v2383
        %v3054 = vmul.f32 %v2383, %v3053
        %v3055 = vsub.f32 1.0, %v3054
        %v3056 = vmul.f32 %v3053, %v3055
        %v3057 = vadd.f32 %v3053, %v3056
        %vm3058 = vweird.f32 %v2383
        %vm3059 = vweird.f32 %v3053
        %vm3060 = vmor %vm3058, %vm3059
        %v3061 = vsel %vm3060, %v3053, %v3057
        %v3062 = vand.u32 2147483647, %v2383
        %vm3063 = vcmp.eq.f32.partialorder %v3062, 8.507059e+37
        %v3064 = vand.u32 %v2383, 2147483648
        %v3065 = vor.u32 1.1754944e-38, %v3064
        %v3066 = vsel %vm3063, %v3065, %v3061
        %v3067 = vmul.f32 %v2773, %v3066
        %v3068 = vrcp.pop %v2390
        %v3069 = vmul.f32 %v2390, %v3068
        %v3070 = vsub.f32 1.0, %v3069
        %v3071 = vmul.f32 %v3068, %v3070
        %v3072 = vadd.f32 %v3068, %v3071
        %vm3073 = vweird.f32 %v2390
        %vm3074 = vweird.f32 %v3068
        %vm3075 = vmor %vm3073, %vm3074
        %v3076 = vsel %vm3075, %v3068, %v3072
        %v3077 = vand.u32 2147483647, %v2390
        %vm3078 = vcmp.eq.f32.partialorder %v3077, 8.507059e+37
        %v3079 = vand.u32 %v2390, 2147483648
        %v3080 = vor.u32 1.1754944e-38, %v3079
        %v3081 = vsel %vm3078, %v3080, %v3076
        %v3082 = vmul.f32 %v2780, %v3081
        %v3083 = vrcp.pop %v2397
        %v3084 = vmul.f32 %v2397, %v3083
        %v3085 = vsub.f32 1.0, %v3084
        %v3086 = vmul.f32 %v3083, %v3085
        %v3087 = vadd.f32 %v3083, %v3086
        %vm3088 = vweird.f32 %v2397
        %vm3089 = vweird.f32 %v3083
        %vm3090 = vmor %vm3088, %vm3089
        %v3091 = vsel %vm3090, %v3083, %v3087
        %v3092 = vand.u32 2147483647, %v2397
        %vm3093 = vcmp.eq.f32.partialorder %v3092, 8.507059e+37
        %v3094 = vand.u32 %v2397, 2147483648
        %v3095 = vor.u32 1.1754944e-38, %v3094
        %v3096 = vsel %vm3093, %v3095, %v3091
        %v3097 = vmul.f32 %v2787, %v3096
        %v3098 = vrcp.pop %v2404
        %v3099 = vmul.f32 %v2404, %v3098
        %v3100 = vsub.f32 1.0, %v3099
        %v3101 = vmul.f32 %v3098, %v3100
        %v3102 = vadd.f32 %v3098, %v3101
        %vm3103 = vweird.f32 %v2404
        %vm3104 = vweird.f32 %v3098
        %vm3105 = vmor %vm3103, %vm3104
        %v3106 = vsel %vm3105, %v3098, %v3102
        %v3107 = vand.u32 2147483647, %v2404
        %vm3108 = vcmp.eq.f32.partialorder %v3107, 8.507059e+37
        %v3109 = vand.u32 %v2404, 2147483648
        %v3110 = vor.u32 1.1754944e-38, %v3109
        %v3111 = vsel %vm3108, %v3110, %v3106
        %v3112 = vmul.f32 %v2794, %v3111
        %v3113 = vrcp.pop %v2411
        %v3114 = vmul.f32 %v2411, %v3113
        %v3115 = vsub.f32 1.0, %v3114
        %v3116 = vmul.f32 %v3113, %v3115
        %v3117 = vadd.f32 %v3113, %v3116
        %vm3118 = vweird.f32 %v2411
        %vm3119 = vweird.f32 %v3113
        %vm3120 = vmor %vm3118, %vm3119
        %v3121 = vsel %vm3120, %v3113, %v3117
        %v3122 = vand.u32 2147483647, %v2411
        %vm3123 = vcmp.eq.f32.partialorder %v3122, 8.507059e+37
        %v3124 = vand.u32 %v2411, 2147483648
        %v3125 = vor.u32 1.1754944e-38, %v3124
        %v3126 = vsel %vm3123, %v3125, %v3121
        %v3127 = vmul.f32 %v2801, %v3126
        %v3128 = vrcp.pop %v2418
        %v3129 = vmul.f32 %v2418, %v3128
        %v3130 = vsub.f32 1.0, %v3129
        %v3131 = vmul.f32 %v3128, %v3130
        %v3132 = vadd.f32 %v3128, %v3131
        %vm3133 = vweird.f32 %v2418
        %vm3134 = vweird.f32 %v3128
        %vm3135 = vmor %vm3133, %vm3134
        %v3136 = vsel %vm3135, %v3128, %v3132
        %v3137 = vand.u32 2147483647, %v2418
        %vm3138 = vcmp.eq.f32.partialorder %v3137, 8.507059e+37
        %v3139 = vand.u32 %v2418, 2147483648
        %v3140 = vor.u32 1.1754944e-38, %v3139
        %v3141 = vsel %vm3138, %v3140, %v3136
        %v3142 = vmul.f32 %v2808, %v3141
        %v3143 = vrcp.pop %v2425
        %v3144 = vmul.f32 %v2425, %v3143
        %v3145 = vsub.f32 1.0, %v3144
        %v3146 = vmul.f32 %v3143, %v3145
        %v3147 = vadd.f32 %v3143, %v3146
        %vm3148 = vweird.f32 %v2425
        %vm3149 = vweird.f32 %v3143
        %vm3150 = vmor %vm3148, %vm3149
        %v3151 = vsel %vm3150, %v3143, %v3147
        %v3152 = vand.u32 2147483647, %v2425
        %vm3153 = vcmp.eq.f32.partialorder %v3152, 8.507059e+37
        %v3154 = vand.u32 %v2425, 2147483648
        %v3155 = vor.u32 1.1754944e-38, %v3154
        %v3156 = vsel %vm3153, %v3155, %v3151
        %v3157 = vmul.f32 %v2815, %v3156
        %v3158 = vrcp.pop %v2432
        %v3159 = vmul.f32 %v2432, %v3158
        %v3160 = vsub.f32 1.0, %v3159
        %v3161 = vmul.f32 %v3158, %v3160
        %v3162 = vadd.f32 %v3158, %v3161
        %vm3163 = vweird.f32 %v2432
        %vm3164 = vweird.f32 %v3158
        %vm3165 = vmor %vm3163, %vm3164
        %v3166 = vsel %vm3165, %v3158, %v3162
        %v3167 = vand.u32 2147483647, %v2432
        %vm3168 = vcmp.eq.f32.partialorder %v3167, 8.507059e+37
        %v3169 = vand.u32 %v2432, 2147483648
        %v3170 = vor.u32 1.1754944e-38, %v3169
        %v3171 = vsel %vm3168, %v3170, %v3166
        %v3172 = vmul.f32 %v2822, %v3171
        %v3173 = vrcp.pop %v2439
        %v3174 = vmul.f32 %v2439, %v3173
        %v3175 = vsub.f32 1.0, %v3174
        %v3176 = vmul.f32 %v3173, %v3175
        %v3177 = vadd.f32 %v3173, %v3176
        %vm3178 = vweird.f32 %v2439
        %vm3179 = vweird.f32 %v3173
        %vm3180 = vmor %vm3178, %vm3179
        %v3181 = vsel %vm3180, %v3173, %v3177
        %v3182 = vand.u32 2147483647, %v2439
        %vm3183 = vcmp.eq.f32.partialorder %v3182, 8.507059e+37
        %v3184 = vand.u32 %v2439, 2147483648
        %v3185 = vor.u32 1.1754944e-38, %v3184
        %v3186 = vsel %vm3183, %v3185, %v3181
        %v3187 = vmul.f32 %v2829, %v3186
        %v3188 = vrcp.pop %v2446
        %v3189 = vmul.f32 %v2446, %v3188
        %v3190 = vsub.f32 1.0, %v3189
        %v3191 = vmul.f32 %v3188, %v3190
        %v3192 = vadd.f32 %v3188, %v3191
        %vm3193 = vweird.f32 %v2446
        %vm3194 = vweird.f32 %v3188
        %vm3195 = vmor %vm3193, %vm3194
        %v3196 = vsel %vm3195, %v3188, %v3192
        %v3197 = vand.u32 2147483647, %v2446
        %vm3198 = vcmp.eq.f32.partialorder %v3197, 8.507059e+37
        %v3199 = vand.u32 %v2446, 2147483648
        %v3200 = vor.u32 1.1754944e-38, %v3199
        %v3201 = vsel %vm3198, %v3200, %v3196
        %v3202 = vmul.f32 %v2836, %v3201
        %v3203 = vrcp.pop %v2453
        %v3204 = vmul.f32 %v2453, %v3203
        %v3205 = vsub.f32 1.0, %v3204
        %v3206 = vmul.f32 %v3203, %v3205
        %v3207 = vadd.f32 %v3203, %v3206
        %vm3208 = vweird.f32 %v2453
        %vm3209 = vweird.f32 %v3203
        %vm3210 = vmor %vm3208, %vm3209
        %v3211 = vsel %vm3210, %v3203, %v3207
        %v3212 = vand.u32 2147483647, %v2453
        %vm3213 = vcmp.eq.f32.partialorder %v3212, 8.507059e+37
        %v3214 = vand.u32 %v2453, 2147483648
        %v3215 = vor.u32 1.1754944e-38, %v3214
        %v3216 = vsel %vm3213, %v3215, %v3211
        %v3217 = vmul.f32 %v2843, %v3216
        %v3218 = vrcp.pop %v2460
        %v3219 = vmul.f32 %v2460, %v3218
        %v3220 = vsub.f32 1.0, %v3219
        %v3221 = vmul.f32 %v3218, %v3220
        %v3222 = vadd.f32 %v3218, %v3221
        %vm3223 = vweird.f32 %v2460
        %vm3224 = vweird.f32 %v3218
        %vm3225 = vmor %vm3223, %vm3224
        %v3226 = vsel %vm3225, %v3218, %v3222
        %v3227 = vand.u32 2147483647, %v2460
        %vm3228 = vcmp.eq.f32.partialorder %v3227, 8.507059e+37
        %v3229 = vand.u32 %v2460, 2147483648
        %v3230 = vor.u32 1.1754944e-38, %v3229
        %v3231 = vsel %vm3228, %v3230, %v3226
        %v3232 = vmul.f32 %v2850, %v3231
        %v3233 = vrcp.pop %v2467
        %v3234 = vmul.f32 %v2467, %v3233
        %v3235 = vsub.f32 1.0, %v3234
        %v3236 = vmul.f32 %v3233, %v3235
        %v3237 = vadd.f32 %v3233, %v3236
        %vm3238 = vweird.f32 %v2467
        %vm3239 = vweird.f32 %v3233
        %vm3240 = vmor %vm3238, %vm3239
        %v3241 = vsel %vm3240, %v3233, %v3237
        %v3242 = vand.u32 2147483647, %v2467
        %vm3243 = vcmp.eq.f32.partialorder %v3242, 8.507059e+37
        %v3244 = vand.u32 %v2467, 2147483648
        %v3245 = vor.u32 1.1754944e-38, %v3244
        %v3246 = vsel %vm3243, %v3245, %v3241
        %v3247 = vmul.f32 %v2857, %v3246
        %v3248 = vlog2.pop %v2006
        %v3249 = vmul.f32 %v3248, 0.6931472
        %v3250 = vlog2.pop %v2013
        %v3251 = vmul.f32 %v3250, 0.6931472
        %v3252 = vlog2.pop %v2020
        %v3253 = vmul.f32 %v3252, 0.6931472
        %v3254 = vlog2.pop %v2027
        %v3255 = vmul.f32 %v3254, 0.6931472
        %v3256 = vlog2.pop %v2034
        %v3257 = vmul.f32 %v3256, 0.6931472
        %v3258 = vlog2.pop %v2041
        %v3259 = vmul.f32 %v3258, 0.6931472
        %v3260 = vlog2.pop %v2048
        %v3261 = vmul.f32 %v3260, 0.6931472
        %v3262 = vlog2.pop %v2055
        %v3263 = vmul.f32 %v3262, 0.6931472
        %v3264 = vlog2.pop %v2062
        %v3265 = vmul.f32 %v3264, 0.6931472
        %v3266 = vlog2.pop %v2069
        %v3267 = vmul.f32 %v3266, 0.6931472
        %v3268 = vlog2.pop %v2076
        %v3269 = vmul.f32 %v3268, 0.6931472
        %v3270 = vlog2.pop %v2083
        %v3271 = vmul.f32 %v3270, 0.6931472
        %v3272 = vlog2.pop %v2090
        %v3273 = vmul.f32 %v3272, 0.6931472
        %v3274 = vlog2.pop %v2097
        %v3275 = vmul.f32 %v3274, 0.6931472
        %v3276 = vlog2.pop %v2104
        %v3277 = vmul.f32 %v3276, 0.6931472
        %v3278 = vlog2.pop %v2111
        %v3279 = vmul.f32 %v3278, 0.6931472
        %v3280 = vlog2.pop %v2118
        %v3281 = vmul.f32 %v3280, 0.6931472
        %v3282 = vlog2.pop %v2125
        %v3283 = vmul.f32 %v3282, 0.6931472
        %v3284 = vlog2.pop %v2132
        %v3285 = vmul.f32 %v3284, 0.6931472
        %v3286 = vlog2.pop %v2139
        %v3287 = vmul.f32 %v3286, 0.6931472
        %v3288 = vlog2.pop %v2146
        %v3289 = vmul.f32 %v3288, 0.6931472
        %v3290 = vlog2.pop %v2153
        %v3291 = vmul.f32 %v3290, 0.6931472
        %v3292 = vlog2.pop %v2160
        %v3293 = vmul.f32 %v3292, 0.6931472
        %v3294 = vlog2.pop %v2167
        %v3295 = vmul.f32 %v3294, 0.6931472
        %v3296 = vlog2.pop %v2174
        %v3297 = vmul.f32 %v3296, 0.6931472
        %v3298 = vlog2.pop %v2181
        %v3299 = vmul.f32 %v3298, 0.6931472
        %v3300 = vlog2.pop %v2292
        %v3301 = vmul.f32 %v3300, 0.6931472
        %v3302 = vlog2.pop %v2299
        %v3303 = vmul.f32 %v3302, 0.6931472
        %v3304 = vlog2.pop %v2306
        %v3305 = vmul.f32 %v3304, 0.6931472
        %v3306 = vlog2.pop %v2313
        %v3307 = vmul.f32 %v3306, 0.6931472
        %v3308 = vlog2.pop %v2320
        %v3309 = vmul.f32 %v3308, 0.6931472
        %v3310 = vlog2.pop %v2327
        %v3311 = vmul.f32 %v3310, 0.6931472
        %v3312 = vlog2.pop %v2334
        %v3313 = vmul.f32 %v3312, 0.6931472
        %v3314 = vlog2.pop %v2341
        %v3315 = vmul.f32 %v3314, 0.6931472
        %v3316 = vlog2.pop %v2348
        %v3317 = vmul.f32 %v3316, 0.6931472
        %v3318 = vlog2.pop %v2355
        %v3319 = vmul.f32 %v3318, 0.6931472
        %v3320 = vlog2.pop %v2362
        %v3321 = vmul.f32 %v3320, 0.6931472
        %v3322 = vlog2.pop %v2369
        %v3323 = vmul.f32 %v3322, 0.6931472
        %v3324 = vlog2.pop %v2376
        %v3325 = vmul.f32 %v3324, 0.6931472
        %v3326 = vlog2.pop %v2383
        %v3327 = vmul.f32 %v3326, 0.6931472
        %v3328 = vlog2.pop %v2390
        %v3329 = vmul.f32 %v3328, 0.6931472
        %v3330 = vlog2.pop %v2397
        %v3331 = vmul.f32 %v3330, 0.6931472
        %v3332 = vlog2.pop %v2404
        %v3333 = vmul.f32 %v3332, 0.6931472
        %v3334 = vlog2.pop %v2411
        %v3335 = vmul.f32 %v3334, 0.6931472
        %v3336 = vlog2.pop %v2418
        %v3337 = vmul.f32 %v3336, 0.6931472
        %v3338 = vlog2.pop %v2425
        %v3339 = vmul.f32 %v3338, 0.6931472
        %v3340 = vlog2.pop %v2432
        %v3341 = vmul.f32 %v3340, 0.6931472
        %v3342 = vlog2.pop %v2439
        %v3343 = vmul.f32 %v3342, 0.6931472
        %v3344 = vlog2.pop %v2446
        %v3345 = vmul.f32 %v3344, 0.6931472
        %v3346 = vlog2.pop %v2453
        %v3347 = vmul.f32 %v3346, 0.6931472
        %v3348 = vlog2.pop %v2460
        %v3349 = vmul.f32 %v3348, 0.6931472
        %v3350 = vlog2.pop %v2467
        %v3351 = vmul.f32 %v3350, 0.6931472
        %v3352 = vsub.f32 %v3249, %v3301
        %v3353 = vsub.f32 %v3251, %v3303
        %v3354 = vsub.f32 %v3253, %v3305
        %v3355 = vsub.f32 %v3255, %v3307
        %v3356 = vsub.f32 %v3257, %v3309
        %v3357 = vsub.f32 %v3259, %v3311
        %v3358 = vsub.f32 %v3261, %v3313
        %v3359 = vsub.f32 %v3263, %v3315
        %v3360 = vsub.f32 %v3265, %v3317
        %v3361 = vsub.f32 %v3267, %v3319
        %v3362 = vsub.f32 %v3269, %v3321
        %v3363 = vsub.f32 %v3271, %v3323
        %v3364 = vsub.f32 %v3273, %v3325
        %v3365 = vsub.f32 %v3275, %v3327
        %v3366 = vsub.f32 %v3277, %v3329
        %v3367 = vsub.f32 %v3279, %v3331
        %v3368 = vsub.f32 %v3281, %v3333
        %v3369 = vsub.f32 %v3283, %v3335
        %v3370 = vsub.f32 %v3285, %v3337
        %v3371 = vsub.f32 %v3287, %v3339
        %v3372 = vsub.f32 %v3289, %v3341
        %v3373 = vsub.f32 %v3291, %v3343
        %v3374 = vsub.f32 %v3293, %v3345
        %v3375 = vsub.f32 %v3295, %v3347
        %v3376 = vsub.f32 %v3297, %v3349
        %v3377 = vsub.f32 %v3299, %v3351
        %v3378 = vadd.f32 %v2872, %v3352
        %v3379 = vadd.f32 %v2887, %v3353
        %v3380 = vadd.f32 %v2902, %v3354
        %v3381 = vadd.f32 %v2917, %v3355
        %v3382 = vadd.f32 %v2932, %v3356
        %v3383 = vadd.f32 %v2947, %v3357
        %v3384 = vadd.f32 %v2962, %v3358
        %v3385 = vadd.f32 %v2977, %v3359
        %v3386 = vadd.f32 %v2992, %v3360
        %v3387 = vadd.f32 %v3007, %v3361
        %v3388 = vadd.f32 %v3022, %v3362
        %v3389 = vadd.f32 %v3037, %v3363
        %v3390 = vadd.f32 %v3052, %v3364
        %v3391 = vadd.f32 %v3067, %v3365
        %v3392 = vadd.f32 %v3082, %v3366
        %v3393 = vadd.f32 %v3097, %v3367
        %v3394 = vadd.f32 %v3112, %v3368
        %v3395 = vadd.f32 %v3127, %v3369
        %v3396 = vadd.f32 %v3142, %v3370
        %v3397 = vadd.f32 %v3157, %v3371
        %v3398 = vadd.f32 %v3172, %v3372
        %v3399 = vadd.f32 %v3187, %v3373
        %v3400 = vadd.f32 %v3202, %v3374
        %v3401 = vadd.f32 %v3217, %v3375
        %v3402 = vadd.f32 %v3232, %v3376
        %v3403 = vadd.f32 %v3247, %v3377
        %3404 = vadd.xlane.f32.xlu0 %v398
        %v3405 = vpop.xlane.xlu0 %3404
        %3406 = vadd.xlane.f32.xlu0 %v399
        %v3407 = vpop.xlane.xlu0 %3406
        %3408 = vadd.xlane.f32.xlu0 %v440
        %v3409 = vpop.xlane.xlu0 %3408
        %3410 = vadd.xlane.f32.xlu0 %v441
        %v3411 = vpop.xlane.xlu0 %3410
        %3412 = vadd.xlane.f32.xlu0 %v482
        %v3413 = vpop.xlane.xlu0 %3412
        %3414 = vadd.xlane.f32.xlu0 %v483
        %v3415 = vpop.xlane.xlu0 %3414
        %3416 = vadd.xlane.f32.xlu0 %v524
        %v3417 = vpop.xlane.xlu0 %3416
        %3418 = vadd.xlane.f32.xlu0 %v525
        %v3419 = vpop.xlane.xlu0 %3418
        %3420 = vadd.xlane.f32.xlu0 %v566
        %v3421 = vpop.xlane.xlu0 %3420
        %3422 = vadd.xlane.f32.xlu0 %v567
        %v3423 = vpop.xlane.xlu0 %3422
        %3424 = vadd.xlane.f32.xlu0 %v608
        %v3425 = vpop.xlane.xlu0 %3424
        %3426 = vadd.xlane.f32.xlu0 %v609
        %v3427 = vpop.xlane.xlu0 %3426
        %3428 = vadd.xlane.f32.xlu0 %v650
        %v3429 = vpop.xlane.xlu0 %3428
        %3430 = vadd.xlane.f32.xlu0 %v651
        %v3431 = vpop.xlane.xlu0 %3430
        %3432 = vadd.xlane.f32.xlu0 %v692
        %v3433 = vpop.xlane.xlu0 %3432
        %3434 = vadd.xlane.f32.xlu0 %v693
        %v3435 = vpop.xlane.xlu0 %3434
        %3436 = vadd.xlane.f32.xlu0 %v734
        %v3437 = vpop.xlane.xlu0 %3436
        %3438 = vadd.xlane.f32.xlu0 %v735
        %v3439 = vpop.xlane.xlu0 %3438
        %3440 = vadd.xlane.f32.xlu0 %v776
        %v3441 = vpop.xlane.xlu0 %3440
        %3442 = vadd.xlane.f32.xlu0 %v777
        %v3443 = vpop.xlane.xlu0 %3442
        %3444 = vadd.xlane.f32.xlu0 %v818
        %v3445 = vpop.xlane.xlu0 %3444
        %3446 = vadd.xlane.f32.xlu0 %v819
        %v3447 = vpop.xlane.xlu0 %3446
        %3448 = vadd.xlane.f32.xlu0 %v860
        %v3449 = vpop.xlane.xlu0 %3448
        %3450 = vadd.xlane.f32.xlu0 %v861
        %v3451 = vpop.xlane.xlu0 %3450
        %3452 = vadd.xlane.f32.xlu0 %v902
        %v3453 = vpop.xlane.xlu0 %3452
        %3454 = vadd.xlane.f32.xlu0 %v903
        %v3455 = vpop.xlane.xlu0 %3454
        %3456 = vadd.xlane.f32.xlu0 %v402
        %v3457 = vpop.xlane.xlu0 %3456
        %3458 = vadd.xlane.f32.xlu0 %v403
        %v3459 = vpop.xlane.xlu0 %3458
        %3460 = vadd.xlane.f32.xlu0 %v444
        %v3461 = vpop.xlane.xlu0 %3460
        %3462 = vadd.xlane.f32.xlu0 %v445
        %v3463 = vpop.xlane.xlu0 %3462
        %3464 = vadd.xlane.f32.xlu0 %v486
        %v3465 = vpop.xlane.xlu0 %3464
        %3466 = vadd.xlane.f32.xlu0 %v487
        %v3467 = vpop.xlane.xlu0 %3466
        %3468 = vadd.xlane.f32.xlu0 %v528
        %v3469 = vpop.xlane.xlu0 %3468
        %3470 = vadd.xlane.f32.xlu0 %v529
        %v3471 = vpop.xlane.xlu0 %3470
        %3472 = vadd.xlane.f32.xlu0 %v570
        %v3473 = vpop.xlane.xlu0 %3472
        %3474 = vadd.xlane.f32.xlu0 %v571
        %v3475 = vpop.xlane.xlu0 %3474
        %3476 = vadd.xlane.f32.xlu0 %v612
        %v3477 = vpop.xlane.xlu0 %3476
        %3478 = vadd.xlane.f32.xlu0 %v613
        %v3479 = vpop.xlane.xlu0 %3478
        %3480 = vadd.xlane.f32.xlu0 %v654
        %v3481 = vpop.xlane.xlu0 %3480
        %3482 = vadd.xlane.f32.xlu0 %v655
        %v3483 = vpop.xlane.xlu0 %3482
        %3484 = vadd.xlane.f32.xlu0 %v696
        %v3485 = vpop.xlane.xlu0 %3484
        %3486 = vadd.xlane.f32.xlu0 %v697
        %v3487 = vpop.xlane.xlu0 %3486
        %3488 = vadd.xlane.f32.xlu0 %v738
        %v3489 = vpop.xlane.xlu0 %3488
        %3490 = vadd.xlane.f32.xlu0 %v739
        %v3491 = vpop.xlane.xlu0 %3490
        %3492 = vadd.xlane.f32.xlu0 %v780
        %v3493 = vpop.xlane.xlu0 %3492
        %3494 = vadd.xlane.f32.xlu0 %v781
        %v3495 = vpop.xlane.xlu0 %3494
        %3496 = vadd.xlane.f32.xlu0 %v822
        %v3497 = vpop.xlane.xlu0 %3496
        %3498 = vadd.xlane.f32.xlu0 %v823
        %v3499 = vpop.xlane.xlu0 %3498
        %3500 = vadd.xlane.f32.xlu0 %v864
        %v3501 = vpop.xlane.xlu0 %3500
        %3502 = vadd.xlane.f32.xlu0 %v865
        %v3503 = vpop.xlane.xlu0 %3502
        %3504 = vadd.xlane.f32.xlu0 %v906
        %v3505 = vpop.xlane.xlu0 %3504
        %3506 = vadd.xlane.f32.xlu0 %v907
        %v3507 = vpop.xlane.xlu0 %3506
        %v3508 = vadd.f32 %v3405, %v3407
        %v3509 = vrot.slane %v3508, 4
        %v3510 = vadd.f32 %v3508, %v3509
        %v3511 = vrot.slane %v3510, 2
        %v3512 = vadd.f32 %v3510, %v3511
        %v3513 = vrot.slane %v3512, 1
        %v3514 = vadd.f32 %v3512, %v3513
        %v3515 = vadd.f32 %v3409, %v3411
        %v3516 = vrot.slane %v3515, 4
        %v3517 = vadd.f32 %v3515, %v3516
        %v3518 = vrot.slane %v3517, 2
        %v3519 = vadd.f32 %v3517, %v3518
        %v3520 = vrot.slane %v3519, 1
        %v3521 = vadd.f32 %v3519, %v3520
        %v3522 = vadd.f32 %v3413, %v3415
        %v3523 = vrot.slane %v3522, 4
        %v3524 = vadd.f32 %v3522, %v3523
        %v3525 = vrot.slane %v3524, 2
        %v3526 = vadd.f32 %v3524, %v3525
        %v3527 = vrot.slane %v3526, 1
        %v3528 = vadd.f32 %v3526, %v3527
        %v3529 = vadd.f32 %v3417, %v3419
        %v3530 = vrot.slane %v3529, 4
        %v3531 = vadd.f32 %v3529, %v3530
        %v3532 = vrot.slane %v3531, 2
        %v3533 = vadd.f32 %v3531, %v3532
        %v3534 = vrot.slane %v3533, 1
        %v3535 = vadd.f32 %v3533, %v3534
        %v3536 = vadd.f32 %v3421, %v3423
        %v3537 = vrot.slane %v3536, 4
        %v3538 = vadd.f32 %v3536, %v3537
        %v3539 = vrot.slane %v3538, 2
        %v3540 = vadd.f32 %v3538, %v3539
        %v3541 = vrot.slane %v3540, 1
        %v3542 = vadd.f32 %v3540, %v3541
        %v3543 = vadd.f32 %v3425, %v3427
        %v3544 = vrot.slane %v3543, 4
        %v3545 = vadd.f32 %v3543, %v3544
        %v3546 = vrot.slane %v3545, 2
        %v3547 = vadd.f32 %v3545, %v3546
        %v3548 = vrot.slane %v3547, 1
        %v3549 = vadd.f32 %v3547, %v3548
        %v3550 = vadd.f32 %v3429, %v3431
        %v3551 = vrot.slane %v3550, 4
        %v3552 = vadd.f32 %v3550, %v3551
        %v3553 = vrot.slane %v3552, 2
        %v3554 = vadd.f32 %v3552, %v3553
        %v3555 = vrot.slane %v3554, 1
        %v3556 = vadd.f32 %v3554, %v3555
        %v3557 = vadd.f32 %v3433, %v3435
        %v3558 = vrot.slane %v3557, 4
        %v3559 = vadd.f32 %v3557, %v3558
        %v3560 = vrot.slane %v3559, 2
        %v3561 = vadd.f32 %v3559, %v3560
        %v3562 = vrot.slane %v3561, 1
        %v3563 = vadd.f32 %v3561, %v3562
        %v3564 = vadd.f32 %v3437, %v3439
        %v3565 = vrot.slane %v3564, 4
        %v3566 = vadd.f32 %v3564, %v3565
        %v3567 = vrot.slane %v3566, 2
        %v3568 = vadd.f32 %v3566, %v3567
        %v3569 = vrot.slane %v3568, 1
        %v3570 = vadd.f32 %v3568, %v3569
        %v3571 = vadd.f32 %v3441, %v3443
        %v3572 = vrot.slane %v3571, 4
        %v3573 = vadd.f32 %v3571, %v3572
        %v3574 = vrot.slane %v3573, 2
        %v3575 = vadd.f32 %v3573, %v3574
        %v3576 = vrot.slane %v3575, 1
        %v3577 = vadd.f32 %v3575, %v3576
        %v3578 = vadd.f32 %v3445, %v3447
        %v3579 = vrot.slane %v3578, 4
        %v3580 = vadd.f32 %v3578, %v3579
        %v3581 = vrot.slane %v3580, 2
        %v3582 = vadd.f32 %v3580, %v3581
        %v3583 = vrot.slane %v3582, 1
        %v3584 = vadd.f32 %v3582, %v3583
        %v3585 = vadd.f32 %v3449, %v3451
        %v3586 = vrot.slane %v3585, 4
        %v3587 = vadd.f32 %v3585, %v3586
        %v3588 = vrot.slane %v3587, 2
        %v3589 = vadd.f32 %v3587, %v3588
        %v3590 = vrot.slane %v3589, 1
        %v3591 = vadd.f32 %v3589, %v3590
        %v3592 = vadd.f32 %v3453, %v3455
        %v3593 = vrot.slane %v3592, 4
        %v3594 = vadd.f32 %v3592, %v3593
        %v3595 = vrot.slane %v3594, 2
        %v3596 = vadd.f32 %v3594, %v3595
        %v3597 = vrot.slane %v3596, 1
        %v3598 = vadd.f32 %v3596, %v3597
        %v3599 = vadd.f32 %v3457, %v3459
        %v3600 = vrot.slane %v3599, 4
        %v3601 = vadd.f32 %v3599, %v3600
        %v3602 = vrot.slane %v3601, 2
        %v3603 = vadd.f32 %v3601, %v3602
        %v3604 = vrot.slane %v3603, 1
        %v3605 = vadd.f32 %v3603, %v3604
        %v3606 = vadd.f32 %v3461, %v3463
        %v3607 = vrot.slane %v3606, 4
        %v3608 = vadd.f32 %v3606, %v3607
        %v3609 = vrot.slane %v3608, 2
        %v3610 = vadd.f32 %v3608, %v3609
        %v3611 = vrot.slane %v3610, 1
        %v3612 = vadd.f32 %v3610, %v3611
        %v3613 = vadd.f32 %v3465, %v3467
        %v3614 = vrot.slane %v3613, 4
        %v3615 = vadd.f32 %v3613, %v3614
        %v3616 = vrot.slane %v3615, 2
        %v3617 = vadd.f32 %v3615, %v3616
        %v3618 = vrot.slane %v3617, 1
        %v3619 = vadd.f32 %v3617, %v3618
        %v3620 = vadd.f32 %v3469, %v3471
        %v3621 = vrot.slane %v3620, 4
        %v3622 = vadd.f32 %v3620, %v3621
        %v3623 = vrot.slane %v3622, 2
        %v3624 = vadd.f32 %v3622, %v3623
        %v3625 = vrot.slane %v3624, 1
        %v3626 = vadd.f32 %v3624, %v3625
        %v3627 = vadd.f32 %v3473, %v3475
        %v3628 = vrot.slane %v3627, 4
        %v3629 = vadd.f32 %v3627, %v3628
        %v3630 = vrot.slane %v3629, 2
        %v3631 = vadd.f32 %v3629, %v3630
        %v3632 = vrot.slane %v3631, 1
        %v3633 = vadd.f32 %v3631, %v3632
        %v3634 = vadd.f32 %v3477, %v3479
        %v3635 = vrot.slane %v3634, 4
        %v3636 = vadd.f32 %v3634, %v3635
        %v3637 = vrot.slane %v3636, 2
        %v3638 = vadd.f32 %v3636, %v3637
        %v3639 = vrot.slane %v3638, 1
        %v3640 = vadd.f32 %v3638, %v3639
        %v3641 = vadd.f32 %v3481, %v3483
        %v3642 = vrot.slane %v3641, 4
        %v3643 = vadd.f32 %v3641, %v3642
        %v3644 = vrot.slane %v3643, 2
        %v3645 = vadd.f32 %v3643, %v3644
        %v3646 = vrot.slane %v3645, 1
        %v3647 = vadd.f32 %v3645, %v3646
        %v3648 = vadd.f32 %v3485, %v3487
        %v3649 = vrot.slane %v3648, 4
        %v3650 = vadd.f32 %v3648, %v3649
        %v3651 = vrot.slane %v3650, 2
        %v3652 = vadd.f32 %v3650, %v3651
        %v3653 = vrot.slane %v3652, 1
        %v3654 = vadd.f32 %v3652, %v3653
        %v3655 = vadd.f32 %v3489, %v3491
        %v3656 = vrot.slane %v3655, 4
        %v3657 = vadd.f32 %v3655, %v3656
        %v3658 = vrot.slane %v3657, 2
        %v3659 = vadd.f32 %v3657, %v3658
        %v3660 = vrot.slane %v3659, 1
        %v3661 = vadd.f32 %v3659, %v3660
        %v3662 = vadd.f32 %v3493, %v3495
        %v3663 = vrot.slane %v3662, 4
        %v3664 = vadd.f32 %v3662, %v3663
        %v3665 = vrot.slane %v3664, 2
        %v3666 = vadd.f32 %v3664, %v3665
        %v3667 = vrot.slane %v3666, 1
        %v3668 = vadd.f32 %v3666, %v3667
        %v3669 = vadd.f32 %v3497, %v3499
        %v3670 = vrot.slane %v3669, 4
        %v3671 = vadd.f32 %v3669, %v3670
        %v3672 = vrot.slane %v3671, 2
        %v3673 = vadd.f32 %v3671, %v3672
        %v3674 = vrot.slane %v3673, 1
        %v3675 = vadd.f32 %v3673, %v3674
        %v3676 = vadd.f32 %v3501, %v3503
        %v3677 = vrot.slane %v3676, 4
        %v3678 = vadd.f32 %v3676, %v3677
        %v3679 = vrot.slane %v3678, 2
        %v3680 = vadd.f32 %v3678, %v3679
        %v3681 = vrot.slane %v3680, 1
        %v3682 = vadd.f32 %v3680, %v3681
        %v3683 = vadd.f32 %v3505, %v3507
        %v3684 = vrot.slane %v3683, 4
        %v3685 = vadd.f32 %v3683, %v3684
        %v3686 = vrot.slane %v3685, 2
        %v3687 = vadd.f32 %v3685, %v3686
        %v3688 = vrot.slane %v3687, 1
        %v3689 = vadd.f32 %v3687, %v3688
        %3691 = vset.pattern.permute.xlu0 0
        %3692 = vperm.xlu0 %3691, %v3378
        %v3693 = vpop.permute.xlu0 %3692
        %3696 = vset.pattern.permute.xlu0 0
        %3697 = vperm.xlu0 %3696, %v3379
        %v3698 = vpop.permute.xlu0 %3697
        %3701 = vset.pattern.permute.xlu0 0
        %3702 = vperm.xlu0 %3701, %v3380
        %v3703 = vpop.permute.xlu0 %3702
        %3706 = vset.pattern.permute.xlu0 0
        %3707 = vperm.xlu0 %3706, %v3381
        %v3708 = vpop.permute.xlu0 %3707
        %3711 = vset.pattern.permute.xlu0 0
        %3712 = vperm.xlu0 %3711, %v3382
        %v3713 = vpop.permute.xlu0 %3712
        %3716 = vset.pattern.permute.xlu0 0
        %3717 = vperm.xlu0 %3716, %v3383
        %v3718 = vpop.permute.xlu0 %3717
        %3721 = vset.pattern.permute.xlu0 0
        %3722 = vperm.xlu0 %3721, %v3384
        %v3723 = vpop.permute.xlu0 %3722
        %3726 = vset.pattern.permute.xlu0 0
        %3727 = vperm.xlu0 %3726, %v3385
        %v3728 = vpop.permute.xlu0 %3727
        %3731 = vset.pattern.permute.xlu0 0
        %3732 = vperm.xlu0 %3731, %v3386
        %v3733 = vpop.permute.xlu0 %3732
        %3736 = vset.pattern.permute.xlu0 0
        %3737 = vperm.xlu0 %3736, %v3387
        %v3738 = vpop.permute.xlu0 %3737
        %3741 = vset.pattern.permute.xlu0 0
        %3742 = vperm.xlu0 %3741, %v3388
        %v3743 = vpop.permute.xlu0 %3742
        %3746 = vset.pattern.permute.xlu0 0
        %3747 = vperm.xlu0 %3746, %v3389
        %v3748 = vpop.permute.xlu0 %3747
        %3751 = vset.pattern.permute.xlu0 0
        %3752 = vperm.xlu0 %3751, %v3390
        %v3753 = vpop.permute.xlu0 %3752
        %3756 = vset.pattern.permute.xlu0 0
        %3757 = vperm.xlu0 %3756, %v3391
        %v3758 = vpop.permute.xlu0 %3757
        %3761 = vset.pattern.permute.xlu0 0
        %3762 = vperm.xlu0 %3761, %v3392
        %v3763 = vpop.permute.xlu0 %3762
        %3766 = vset.pattern.permute.xlu0 0
        %3767 = vperm.xlu0 %3766, %v3393
        %v3768 = vpop.permute.xlu0 %3767
        %3771 = vset.pattern.permute.xlu0 0
        %3772 = vperm.xlu0 %3771, %v3394
        %v3773 = vpop.permute.xlu0 %3772
        %3776 = vset.pattern.permute.xlu0 0
        %3777 = vperm.xlu0 %3776, %v3395
        %v3778 = vpop.permute.xlu0 %3777
        %3781 = vset.pattern.permute.xlu0 0
        %3782 = vperm.xlu0 %3781, %v3396
        %v3783 = vpop.permute.xlu0 %3782
        %3786 = vset.pattern.permute.xlu0 0
        %3787 = vperm.xlu0 %3786, %v3397
        %v3788 = vpop.permute.xlu0 %3787
        %3791 = vset.pattern.permute.xlu0 0
        %3792 = vperm.xlu0 %3791, %v3398
        %v3793 = vpop.permute.xlu0 %3792
        %3796 = vset.pattern.permute.xlu0 0
        %3797 = vperm.xlu0 %3796, %v3399
        %v3798 = vpop.permute.xlu0 %3797
        %3801 = vset.pattern.permute.xlu0 0
        %3802 = vperm.xlu0 %3801, %v3400
        %v3803 = vpop.permute.xlu0 %3802
        %3806 = vset.pattern.permute.xlu0 0
        %3807 = vperm.xlu0 %3806, %v3401
        %v3808 = vpop.permute.xlu0 %3807
        %3811 = vset.pattern.permute.xlu0 0
        %3812 = vperm.xlu0 %3811, %v3402
        %v3813 = vpop.permute.xlu0 %3812
        %3816 = vset.pattern.permute.xlu0 0
        %3817 = vperm.xlu0 %3816, %v3403
        %v3818 = vpop.permute.xlu0 %3817
        %3821 = vset.pattern.permute.xlu0 0
        %3822 = vperm.xlu0 %3821, %v3514
        %v3823 = vpop.permute.xlu0 %3822
        %3826 = vset.pattern.permute.xlu0 0
        %3827 = vperm.xlu0 %3826, %v3521
        %v3828 = vpop.permute.xlu0 %3827
        %3831 = vset.pattern.permute.xlu0 0
        %3832 = vperm.xlu0 %3831, %v3528
        %v3833 = vpop.permute.xlu0 %3832
        %3836 = vset.pattern.permute.xlu0 0
        %3837 = vperm.xlu0 %3836, %v3535
        %v3838 = vpop.permute.xlu0 %3837
        %3841 = vset.pattern.permute.xlu0 0
        %3842 = vperm.xlu0 %3841, %v3542
        %v3843 = vpop.permute.xlu0 %3842
        %3846 = vset.pattern.permute.xlu0 0
        %3847 = vperm.xlu0 %3846, %v3549
        %v3848 = vpop.permute.xlu0 %3847
        %3851 = vset.pattern.permute.xlu0 0
        %3852 = vperm.xlu0 %3851, %v3556
        %v3853 = vpop.permute.xlu0 %3852
        %3856 = vset.pattern.permute.xlu0 0
        %3857 = vperm.xlu0 %3856, %v3563
        %v3858 = vpop.permute.xlu0 %3857
        %3861 = vset.pattern.permute.xlu0 0
        %3862 = vperm.xlu0 %3861, %v3570
        %v3863 = vpop.permute.xlu0 %3862
        %3866 = vset.pattern.permute.xlu0 0
        %3867 = vperm.xlu0 %3866, %v3577
        %v3868 = vpop.permute.xlu0 %3867
        %3871 = vset.pattern.permute.xlu0 0
        %3872 = vperm.xlu0 %3871, %v3584
        %v3873 = vpop.permute.xlu0 %3872
        %3876 = vset.pattern.permute.xlu0 0
        %3877 = vperm.xlu0 %3876, %v3591
        %v3878 = vpop.permute.xlu0 %3877
        %3881 = vset.pattern.permute.xlu0 0
        %3882 = vperm.xlu0 %3881, %v3598
        %v3883 = vpop.permute.xlu0 %3882
        %3886 = vset.pattern.permute.xlu0 0
        %3887 = vperm.xlu0 %3886, %v3605
        %v3888 = vpop.permute.xlu0 %3887
        %3891 = vset.pattern.permute.xlu0 0
        %3892 = vperm.xlu0 %3891, %v3612
        %v3893 = vpop.permute.xlu0 %3892
        %3896 = vset.pattern.permute.xlu0 0
        %3897 = vperm.xlu0 %3896, %v3619
        %v3898 = vpop.permute.xlu0 %3897
        %3901 = vset.pattern.permute.xlu0 0
        %3902 = vperm.xlu0 %3901, %v3626
        %v3903 = vpop.permute.xlu0 %3902
        %3906 = vset.pattern.permute.xlu0 0
        %3907 = vperm.xlu0 %3906, %v3633
        %v3908 = vpop.permute.xlu0 %3907
        %3911 = vset.pattern.permute.xlu0 0
        %3912 = vperm.xlu0 %3911, %v3640
        %v3913 = vpop.permute.xlu0 %3912
        %3916 = vset.pattern.permute.xlu0 0
        %3917 = vperm.xlu0 %3916, %v3647
        %v3918 = vpop.permute.xlu0 %3917
        %3921 = vset.pattern.permute.xlu0 0
        %3922 = vperm.xlu0 %3921, %v3654
        %v3923 = vpop.permute.xlu0 %3922
        %3926 = vset.pattern.permute.xlu0 0
        %3927 = vperm.xlu0 %3926, %v3661
        %v3928 = vpop.permute.xlu0 %3927
        %3931 = vset.pattern.permute.xlu0 0
        %3932 = vperm.xlu0 %3931, %v3668
        %v3933 = vpop.permute.xlu0 %3932
        %3936 = vset.pattern.permute.xlu0 0
        %3937 = vperm.xlu0 %3936, %v3675
        %v3938 = vpop.permute.xlu0 %3937
        %3941 = vset.pattern.permute.xlu0 0
        %3942 = vperm.xlu0 %3941, %v3682
        %v3943 = vpop.permute.xlu0 %3942
        %3946 = vset.pattern.permute.xlu0 0
        %3947 = vperm.xlu0 %3946, %v3689
        %v3948 = vpop.permute.xlu0 %3947
        %3950 = vst [vmem:[%s271] sm:$0x1] %v3693
        %3951 = vst [vmem:[%s271 + $0x1] sm:$0x1] %v3698
        %3952 = vst [vmem:[%s271 + $0x2] sm:$0x1] %v3703
        %3953 = vst [vmem:[%s271 + $0x3] sm:$0x1] %v3708
        %3954 = vst [vmem:[%s271 + $0x4] sm:$0x1] %v3713
        %3955 = vst [vmem:[%s271 + $0x5] sm:$0x1] %v3718
        %3956 = vst [vmem:[%s271 + $0x6] sm:$0x1] %v3723
        %3957 = vst [vmem:[%s271 + $0x7] sm:$0x1] %v3728
        %3958 = vst [vmem:[%s271 + $0x8] sm:$0x1] %v3733
        %3959 = vst [vmem:[%s271 + $0x9] sm:$0x1] %v3738
        %3960 = vst [vmem:[%s271 + $0xa] sm:$0x1] %v3743
        %3961 = vst [vmem:[%s271 + $0xb] sm:$0x1] %v3748
        %3962 = vst [vmem:[%s271 + $0xc] sm:$0x1] %v3753
        %3963 = vst [vmem:[%s271 + $0xd] sm:$0x1] %v3758
        %3964 = vst [vmem:[%s271 + $0xe] sm:$0x1] %v3763
        %3965 = vst [vmem:[%s271 + $0xf] sm:$0x1] %v3768
        %3966 = vst [vmem:[%s271 + $0x10] sm:$0x1] %v3773
        %3967 = vst [vmem:[%s271 + $0x11] sm:$0x1] %v3778
        %3968 = vst [vmem:[%s271 + $0x12] sm:$0x1] %v3783
        %3969 = vst [vmem:[%s271 + $0x13] sm:$0x1] %v3788
        %3970 = vst [vmem:[%s271 + $0x14] sm:$0x1] %v3793
        %3971 = vst [vmem:[%s271 + $0x15] sm:$0x1] %v3798
        %3972 = vst [vmem:[%s271 + $0x16] sm:$0x1] %v3803
        %3973 = vst [vmem:[%s271 + $0x17] sm:$0x1] %v3808
        %3974 = vst [vmem:[%s271 + $0x18] sm:$0x1] %v3813
        %3975 = vst [vmem:[%s271 + $0x19] sm:$0x1] %v3818
        %3976 = vst [vmem:[%s271 + $0x1a] sm:$0x1] %v3823
        %3977 = vst [vmem:[%s271 + $0x1b] sm:$0x1] %v3828
        %3978 = vst [vmem:[%s271 + $0x1c] sm:$0x1] %v3833
        %3979 = vst [vmem:[%s271 + $0x1d] sm:$0x1] %v3838
        %3980 = vst [vmem:[%s271 + $0x1e] sm:$0x1] %v3843
        %3981 = vst [vmem:[%s271 + $0x1f] sm:$0x1] %v3848
        %3982 = vst [vmem:[%s271 + $0x20] sm:$0x1] %v3853
        %3983 = vst [vmem:[%s271 + $0x21] sm:$0x1] %v3858
        %3984 = vst [vmem:[%s271 + $0x22] sm:$0x1] %v3863
        %3985 = vst [vmem:[%s271 + $0x23] sm:$0x1] %v3868
        %3986 = vst [vmem:[%s271 + $0x24] sm:$0x1] %v3873
        %3987 = vst [vmem:[%s271 + $0x25] sm:$0x1] %v3878
        %3988 = vst [vmem:[%s271 + $0x26] sm:$0x1] %v3883
        %3989 = vst [vmem:[%s271 + $0x27] sm:$0x1] %v3888
        %3990 = vst [vmem:[%s271 + $0x28] sm:$0x1] %v3893
        %3991 = vst [vmem:[%s271 + $0x29] sm:$0x1] %v3898
        %3992 = vst [vmem:[%s271 + $0x2a] sm:$0x1] %v3903
        %3993 = vst [vmem:[%s271 + $0x2b] sm:$0x1] %v3908
        %3994 = vst [vmem:[%s271 + $0x2c] sm:$0x1] %v3913
        %3995 = vst [vmem:[%s271 + $0x2d] sm:$0x1] %v3918
        %3996 = vst [vmem:[%s271 + $0x2e] sm:$0x1] %v3923
        %3997 = vst [vmem:[%s271 + $0x2f] sm:$0x1] %v3928
        %3998 = vst [vmem:[%s271 + $0x30] sm:$0x1] %v3933
        %3999 = vst [vmem:[%s271 + $0x31] sm:$0x1] %v3938
        %4000 = vst [vmem:[%s271 + $0x32] sm:$0x1] %v3943
        %4001 = vst [vmem:[%s271 + $0x33] sm:$0x1] %v3948
        %s4002 = sand.u32 %s109, 1
        %s4003 = scalar_lea.sflag [#allocation4], %s4002
        %s4004 = sand.u32 %s109, 1
        %s4005 = smul.addr %s4004, 52
        %s4006 = scalar_lea.vmem [#allocation8], %s4005
        // Predicated region
        $region45: #{tpu_custom_call.1} parent=31 // pred_check
          %p4007 = pneg %p119
        $region46: #{tpu_custom_call.1} parent=31 // pred_check_branch
          %4009 = sbr.rel (%p4007) target = $region48
        $region47: #{tpu_custom_call.1} parent=31 // pred_region
          %4011 = vsyncadd %s4003, 0
          %s4012 = smul.addr %s23, 52
          %s4013 = scalar_lea.hbm %s3, %s4012
          %s4014 = sshll.u32 %s4006, 4
          %s4015 = int_to_ptr.vmem [resolvable:$true] %s4014
          %s4016 = sshll.u32 %s4013, 4
          %s4017 = int_to_ptr.hbm [resolvable:$true] %s4016
          %4022 = dma.vmem_to_hbm [thread:$0]  %s4015, 832, %s4017, %s4003, 16, 16, 1
        $region48: #{tpu_custom_call.1} parent=31 // pred_fallthru
          _
      $region32: #{tpu_custom_call.1} parent=5 // pred_fallthru
        _
      %p4023 = scmp.le.s32.totalorder 2, %s18
      // Predicated region
      $region49: #{tpu_custom_call.1} parent=5 // pred_check
        %p4024 = pneg %p4023
      $region50: #{tpu_custom_call.1} parent=5 // pred_check_branch
        %4026 = sbr.rel (%p4024) target = $region52
      $region51: #{tpu_custom_call.1} parent=5 // pred_region
        %s4027 = ssub.s32 %s18, 2
        // Predicated region
        $region53: #{tpu_custom_call.1} parent=51 // pred_check
          %p4028 = pneg %p125
        $region54: #{tpu_custom_call.1} parent=51 // pred_check_branch
          %4030 = sbr.rel (%p4028) target = $region56
        $region55: #{tpu_custom_call.1} parent=51 // pred_region
          %s4031 = sand.u32 %s110, 1
          %s4032 = scalar_lea.sflag [#allocation4], %s4031
          %s4033 = sand.u32 %s110, 1
          %s4034 = smul.addr %s4033, 52
          %s4035 = scalar_lea.vmem [#allocation8], %s4034
          %4037 = dma.done %s4032, 832
        $region56: #{tpu_custom_call.1} parent=51 // pred_fallthru
          _
      $region52: #{tpu_custom_call.1} parent=5 // pred_fallthru
        _
    $region6: #{tpu_custom_call.1} parent=1 // loop_footer
      %s22 = sadd.s32 1, %s18
    $region7: #{tpu_custom_call.1} parent=1 // loop_footer_branch
      %17 = sbr.rel target = $region3
    $region8: #{tpu_custom_call.1} parent=1 // loop_exit
      _
    %4038 = vsyncpa [#allocation3], 1
    %s4039 = scalar_lea.sflag [#allocation3], 1
    %4040 = vsyncpa %s4039, 1
    %4041 = vsyncpa [#allocation6], 1
    %s4042 = scalar_lea.sflag [#allocation6], 1
    %4043 = vsyncpa %s4042, 1
    %4044 = vsyncpa [#allocation4], 1
    %s4045 = scalar_lea.sflag [#allocation4], 1
    %4046 = vsyncpa %s4045, 1

</llo_original>
